<compile_context>
chip_gen: v7x
topology: tpu7x:2x2x1
jax: 0.10.0
libtpu: 0.0.40
codegen_flags: <defaults>
</compile_context>

<pallas_src>
import re

import jax
import jax.numpy as jnp
from jax.experimental import pallas as pl
from jax.experimental.pallas import tpu as pltpu

_ONE_SIXTH = 1.0 / 6.0


def _tpu_generation(default: int = 6) -> int:
    """Best-effort TPU generation from device_kind ('TPU v5 lite'->5, 'TPU7x'->7)."""
    try:
        kind = jax.devices()[0].device_kind
    except Exception:  # pragma: no cover - defensive
        return default
    m = re.search(r"(\d+)", kind)
    return int(m.group(1)) if m else default


def make_rk4_kernel(dt: float, mxu_dtype, eup_dtype):
    """Fused RK4 kernel. `mxu_dtype` = matmul-operand dtype, `eup_dtype` = tanh dtype."""

    def rk4_kernel(t_ref, x_ref, w1_ref, b1_ref, wt_ref, w2_ref, b2_ref, out_ref):
        t = t_ref[0]                      # scalar time (SMEM), f32

        w1 = w1_ref[...]                  # (D, H)  mxu_dtype (pre-cast, resident)
        w2 = w2_ref[...]                  # (H, D)  mxu_dtype (pre-cast, resident)
        b1 = b1_ref[...]                  # (1, H)  f32
        wt = wt_ref[...]                  # (1, H)  f32
        b2 = b2_ref[...]                  # (1, D)  f32

        # Hoist the three time-shifted hidden biases: computed once, reused.
        bias_t0   = b1 + t * wt
        bias_half = b1 + (t + 0.5 * dt) * wt
        bias_full = b1 + (t + dt) * wt

        def f(bias, xx):
            # First matmul: f32 accumulation, bias added in f32.
            pre = jnp.dot(xx.astype(mxu_dtype), w1,
                          preferred_element_type=jnp.float32) + bias
            # tanh in eup_dtype (bf16 on v6e/v7x, f32 on v5e); on the bf16 path
            # h is already MXU-ready, so the .astype below is a no-op.
            h = jnp.tanh(pre.astype(eup_dtype))
            return jnp.dot(h.astype(mxu_dtype), w2,
                           preferred_element_type=jnp.float32) + b2

        # Re-read x from VMEM per stage and accumulate the RK4 sum in out_ref
        # (VMEM) so only {k, current stage input} live in vregs at once.
        k = f(bias_t0, x_ref[...])                          # k1
        out_ref[...] = k
        k = f(bias_half, x_ref[...] + (0.5 * dt) * k)       # k2
        out_ref[...] += 2.0 * k
        k = f(bias_half, x_ref[...] + (0.5 * dt) * k)       # k3
        out_ref[...] += 2.0 * k
        k = f(bias_full, x_ref[...] + dt * k)               # k4
        out_ref[...] = (x_ref[...]
                        + (dt * _ONE_SIXTH) * (out_ref[...] + k)
                        ).astype(out_ref.dtype)

    return rk4_kernel


def prepare_rk4_params(w1, b1, wt, w2, b2, mxu_dtype=jnp.bfloat16):
    """Cast weights to the MXU operand dtype ONCE (hoisted out of the step loop)."""
    return (w1.astype(mxu_dtype), b1.astype(jnp.float32), wt.astype(jnp.float32),
            w2.astype(mxu_dtype), b2.astype(jnp.float32))


def rk4_step(t, state, w1, b1, wt, w2, b2, *, dt, tile_b=None):
    """One fused RK4 step.  Weights must already be in their MXU dtype
    (use prepare_rk4_params); the kernel infers mxu_dtype from w1.dtype."""
    B, D = state.shape
    D2, H = w1.shape
    assert D2 == D and w2.shape == (H, D)

    mxu_dtype = w1.dtype
    gen = _tpu_generation()
    # bf16 tanh only where the VPU/EUP are bf16-capable (v6e / v7x).
    eup_dtype = jnp.bfloat16 if (mxu_dtype == jnp.bfloat16 and gen >= 6) else jnp.float32

    # Grid shaping: one maximal tile per TensorCore (1 TC on v5e/v6e, 2 on v7x);
    # split further only when tiles get big enough for DMA overlap to matter.
    n_tc = 2 if gen >= 7 else 1
    if tile_b is None:
        tile_b = B // n_tc if (B % n_tc == 0 and (B // n_tc) % 8 == 0) else B
        while tile_b > 512 and tile_b % 2 == 0 and (tile_b // 2) % 8 == 0:
            tile_b //= 2
    tile_b = min(tile_b, B)
    assert B % tile_b == 0, "batch must divide by the batch tile"
    grid = (B // tile_b,)

    t_arr = jnp.asarray(t, dtype=jnp.float32).reshape((1,))

    # Advisory cost estimate from in-kernel operand sizes (post weight cast).
    flops = 4 * 2 * (2 * B * D * H)                       # 8 matmuls
    transcendentals = 4 * B * H                           # 4 tanh evaluations
    bytes_accessed = (2 * state.nbytes + w1.nbytes + w2.nbytes
                      + b1.nbytes + wt.nbytes + b2.nbytes + t_arr.nbytes)

    kernel = make_rk4_kernel(float(dt), mxu_dtype, eup_dtype)

    return pl.pallas_call(
        kernel,
        out_shape=jax.ShapeDtypeStruct((B, D), jnp.float32),
        grid=grid,
        in_specs=[
            pl.BlockSpec(memory_space=pltpu.MemorySpace.SMEM),   # t (scalar)
            pl.BlockSpec((tile_b, D), lambda i: (i, 0)),         # state tile
            pl.BlockSpec((D, H), lambda i: (0, 0)),              # W1 (resident)
            pl.BlockSpec((1, H), lambda i: (0, 0)),              # b1
            pl.BlockSpec((1, H), lambda i: (0, 0)),              # wt
            pl.BlockSpec((H, D), lambda i: (0, 0)),              # W2 (resident)
            pl.BlockSpec((1, D), lambda i: (0, 0)),              # b2
        ],
        out_specs=pl.BlockSpec((tile_b, D), lambda i: (i, 0)),
        # State updated in place across integrator steps (state -> output 0).
        input_output_aliases={1: 0},
        compiler_params=pltpu.CompilerParams(
            dimension_semantics=("parallel",),
        ),
        cost_estimate=pl.CostEstimate(
            flops=flops,
            transcendentals=transcendentals,
            bytes_accessed=bytes_accessed,
        ),
    )(t_arr, state, w1, b1, wt, w2, b2)


def rk4_step_ref(t, state, w1, b1, wt, w2, b2, *, dt):
    """Pure-JAX reference mirroring the PyTorch RK4Method.forward semantics."""
    hi = jax.lax.Precision.HIGHEST

    def f(tt, xx):
        h = jnp.tanh(jnp.dot(xx, w1, precision=hi) + b1 + tt * wt)
        return jnp.dot(h, w2, precision=hi) + b2

    k1 = f(t, state)
    k2 = f(t + 0.5 * dt, state + 0.5 * dt * k1)
    k3 = f(t + 0.5 * dt, state + 0.5 * dt * k2)
    k4 = f(t + dt,       state + 1.0 * dt * k3)
    k = _ONE_SIXTH * (k1 + 2 * k2 + 2 * k3 + k4)
    return state + dt * k


if __name__ == "__main__":
    # Lane-dense shapes: D multiple of 128, H multiple of 256 (fills the
    # 256-wide v6e/v7x MXU), batch splittable into one maximal tile per TC.
    B, D, H = 256, 128, 256
    dt = 0.1
    t0 = 0.25

    key = jax.random.PRNGKey(0)
    k_state, k_w1, k_b1, k_wt, k_w2, k_b2 = jax.random.split(key, 6)

    state = jax.random.normal(k_state, (B, D), dtype=jnp.float32)
    w1 = 0.1 * jax.random.normal(k_w1, (D, H), dtype=jnp.float32)
    b1 = 0.1 * jax.random.normal(k_b1, (1, H), dtype=jnp.float32)
    wt = 0.1 * jax.random.normal(k_wt, (1, H), dtype=jnp.float32)
    w2 = 0.1 * jax.random.normal(k_w2, (H, D), dtype=jnp.float32)
    b2 = 0.1 * jax.random.normal(k_b2, (1, D), dtype=jnp.float32)

    ref = rk4_step_ref(t0, state, w1, b1, wt, w2, b2, dt=dt)

    # Default path: bf16 MXU operands (f32 accumulation), weights cast once.
    p_bf16 = prepare_rk4_params(w1, b1, wt, w2, b2, mxu_dtype=jnp.bfloat16)
    out_bf16 = jax.block_until_ready(rk4_step(t0, state, *p_bf16, dt=dt))
    assert out_bf16.shape == (B, D)
    assert bool(jnp.all(jnp.isfinite(out_bf16)))
    rel_err = float(jnp.max(jnp.abs(out_bf16 - ref)) / jnp.max(jnp.abs(ref)))
    assert rel_err < 5e-3, f"bf16 path diverged: rel_err={rel_err}"

    # Opt-in f32 MXU path: must match the high-precision reference tightly.
    p_f32 = prepare_rk4_params(w1, b1, wt, w2, b2, mxu_dtype=jnp.float32)
    out_f32 = jax.block_until_ready(rk4_step(t0, state, *p_f32, dt=dt))
    assert jnp.allclose(out_f32, ref, atol=2e-4, rtol=2e-4), "f32 mismatch vs reference"

    print("KERNEL_OK")
</pallas_src>

<mosaic_0001>
module attributes {stable_mosaic.version = 11 : i64} {
  func.func @rk4_kernel(%arg0: i32, %arg1: memref<1xf32, #tpu.memory_space<smem>>, %arg2: memref<256x128xf32, #tpu.memory_space<vmem>>, %arg3: memref<128x256xbf16, #tpu.memory_space<vmem>>, %arg4: memref<1x256xf32, #tpu.memory_space<vmem>>, %arg5: memref<1x256xf32, #tpu.memory_space<vmem>>, %arg6: memref<256x128xbf16, #tpu.memory_space<vmem>>, %arg7: memref<1x128xf32, #tpu.memory_space<vmem>>, %arg8: memref<256x128xf32, #tpu.memory_space<vmem>>) attributes {dimension_semantics = [#tpu.dimension_semantics<parallel>], iteration_bounds = array<i64: 1>, scalar_prefetch = 0 : i64, scratch_operands = 0 : i64, tpu.core_type = #tpu.core_type<tc>, window_params = [{transform_indices = @transform_0, window_bounds = array<i64: 1>}, {transform_indices = @transform_1, window_bounds = array<i64: 256, 128>}, {pipeline_mode = #tpu.pipeline_mode<synchronous>, transform_indices = @transform_2, window_bounds = array<i64: 128, 256>}, {pipeline_mode = #tpu.pipeline_mode<synchronous>, transform_indices = @transform_3, window_bounds = array<i64: 1, 256>}, {pipeline_mode = #tpu.pipeline_mode<synchronous>, transform_indices = @transform_4, window_bounds = array<i64: 1, 256>}, {pipeline_mode = #tpu.pipeline_mode<synchronous>, transform_indices = @transform_5, window_bounds = array<i64: 256, 128>}, {pipeline_mode = #tpu.pipeline_mode<synchronous>, transform_indices = @transform_6, window_bounds = array<i64: 1, 128>}, {transform_indices = @transform_7, window_bounds = array<i64: 256, 128>}]} {
    %c0 = arith.constant 0 : index
    %0 = memref.load %arg1[%c0] : memref<1xf32, #tpu.memory_space<smem>>
    %c0_0 = arith.constant 0 : index
    %c0_1 = arith.constant 0 : index
    %1 = vector.load %arg3[%c0_0, %c0_1] : memref<128x256xbf16, #tpu.memory_space<vmem>>, vector<128x256xbf16>
    %c0_2 = arith.constant 0 : index
    %c0_3 = arith.constant 0 : index
    %2 = vector.load %arg6[%c0_2, %c0_3] : memref<256x128xbf16, #tpu.memory_space<vmem>>, vector<256x128xbf16>
    %c0_4 = arith.constant 0 : index
    %c0_5 = arith.constant 0 : index
    %3 = vector.load %arg4[%c0_4, %c0_5] : memref<1x256xf32, #tpu.memory_space<vmem>>, vector<1x256xf32>
    %c0_6 = arith.constant 0 : index
    %c0_7 = arith.constant 0 : index
    %4 = vector.load %arg5[%c0_6, %c0_7] : memref<1x256xf32, #tpu.memory_space<vmem>>, vector<1x256xf32>
    %c0_8 = arith.constant 0 : index
    %c0_9 = arith.constant 0 : index
    %5 = vector.load %arg7[%c0_8, %c0_9] : memref<1x128xf32, #tpu.memory_space<vmem>>, vector<1x128xf32>
    %6 = vector.broadcast %0 : f32 to vector<1x256xf32>
    %7 = arith.mulf %6, %4 : vector<1x256xf32>
    %8 = arith.addf %3, %7 : vector<1x256xf32>
    %cst = arith.constant 5.000000e-02 : f32
    %9 = arith.addf %0, %cst : f32
    %10 = vector.broadcast %9 : f32 to vector<1x256xf32>
    %11 = arith.mulf %10, %4 : vector<1x256xf32>
    %12 = arith.addf %3, %11 : vector<1x256xf32>
    %cst_10 = arith.constant 1.000000e-01 : f32
    %13 = arith.addf %0, %cst_10 : f32
    %14 = vector.broadcast %13 : f32 to vector<1x256xf32>
    %15 = arith.mulf %14, %4 : vector<1x256xf32>
    %16 = arith.addf %3, %15 : vector<1x256xf32>
    %c0_11 = arith.constant 0 : index
    %c0_12 = arith.constant 0 : index
    %17 = vector.load %arg2[%c0_11, %c0_12] : memref<256x128xf32, #tpu.memory_space<vmem>>, vector<256x128xf32>
    %18 = arith.truncf %17 : vector<256x128xf32> to vector<256x128xbf16>
    %cst_13 = arith.constant dense<0.000000e+00> : vector<256x256xf32>
    %19 = tpu.matmul %18, %1, %cst_13 {dimension_numbers = #tpu.dot_dimension_numbers<[1], [0], [0], [1], [0, 0, 1, 1], [], []>} : vector<256x128xbf16>, vector<128x256xbf16>, vector<256x256xf32> -> vector<256x256xf32>
    %20 = vector.broadcast %8 : vector<1x256xf32> to vector<256x256xf32>
    %21 = arith.addf %19, %20 : vector<256x256xf32>
    %22 = arith.truncf %21 : vector<256x256xf32> to vector<256x256xbf16>
    %23 = math.tanh %22 : vector<256x256xbf16>
    %cst_14 = arith.constant dense<0.000000e+00> : vector<256x128xf32>
    %24 = tpu.matmul %23, %2, %cst_14 {dimension_numbers = #tpu.dot_dimension_numbers<[1], [0], [0], [1], [0, 0, 1, 1], [], []>} : vector<256x256xbf16>, vector<256x128xbf16>, vector<256x128xf32> -> vector<256x128xf32>
    %25 = vector.broadcast %5 : vector<1x128xf32> to vector<256x128xf32>
    %26 = arith.addf %24, %25 : vector<256x128xf32>
    %c0_15 = arith.constant 0 : index
    %c0_16 = arith.constant 0 : index
    %27 = vector.load %arg8[%c0_15, %c0_16] : memref<256x128xf32, #tpu.memory_space<vmem>>, vector<256x128xf32>
    tpu.vector_store %arg8[%c0_15, %c0_16], %26 {strides = array<i32>} : memref<256x128xf32, #tpu.memory_space<vmem>>, vector<256x128xf32>,
    %c0_17 = arith.constant 0 : index
    %c0_18 = arith.constant 0 : index
    %28 = vector.load %arg2[%c0_17, %c0_18] : memref<256x128xf32, #tpu.memory_space<vmem>>, vector<256x128xf32>
    %cst_19 = arith.constant 5.000000e-02 : f32
    %29 = vector.broadcast %cst_19 : f32 to vector<256x128xf32>
    %30 = arith.mulf %29, %26 : vector<256x128xf32>
    %31 = arith.addf %28, %30 : vector<256x128xf32>
    %32 = arith.truncf %31 : vector<256x128xf32> to vector<256x128xbf16>
    %cst_20 = arith.constant dense<0.000000e+00> : vector<256x256xf32>
    %33 = tpu.matmul %32, %1, %cst_20 {dimension_numbers = #tpu.dot_dimension_numbers<[1], [0], [0], [1], [0, 0, 1, 1], [], []>} : vector<256x128xbf16>, vector<128x256xbf16>, vector<256x256xf32> -> vector<256x256xf32>
    %34 = vector.broadcast %12 : vector<1x256xf32> to vector<256x256xf32>
    %35 = arith.addf %33, %34 : vector<256x256xf32>
    %36 = arith.truncf %35 : vector<256x256xf32> to vector<256x256xbf16>
    %37 = math.tanh %36 : vector<256x256xbf16>
    %cst_21 = arith.constant dense<0.000000e+00> : vector<256x128xf32>
    %38 = tpu.matmul %37, %2, %cst_21 {dimension_numbers = #tpu.dot_dimension_numbers<[1], [0], [0], [1], [0, 0, 1, 1], [], []>} : vector<256x256xbf16>, vector<256x128xbf16>, vector<256x128xf32> -> vector<256x128xf32>
    %39 = vector.broadcast %5 : vector<1x128xf32> to vector<256x128xf32>
    %40 = arith.addf %38, %39 : vector<256x128xf32>
    %c0_22 = arith.constant 0 : index
    %c0_23 = arith.constant 0 : index
    %41 = vector.load %arg8[%c0_22, %c0_23] : memref<256x128xf32, #tpu.memory_space<vmem>>, vector<256x128xf32>
    %cst_24 = arith.constant 2.000000e+00 : f32
    %42 = vector.broadcast %cst_24 : f32 to vector<256x128xf32>
    %43 = arith.mulf %42, %40 : vector<256x128xf32>
    %44 = arith.addf %41, %43 : vector<256x128xf32>
    %c0_25 = arith.constant 0 : index
    %c0_26 = arith.constant 0 : index
    %45 = vector.load %arg8[%c0_25, %c0_26] : memref<256x128xf32, #tpu.memory_space<vmem>>, vector<256x128xf32>
    tpu.vector_store %arg8[%c0_25, %c0_26], %44 {strides = array<i32>} : memref<256x128xf32, #tpu.memory_space<vmem>>, vector<256x128xf32>,
    %c0_27 = arith.constant 0 : index
    %c0_28 = arith.constant 0 : index
    %46 = vector.load %arg2[%c0_27, %c0_28] : memref<256x128xf32, #tpu.memory_space<vmem>>, vector<256x128xf32>
    %cst_29 = arith.constant 5.000000e-02 : f32
    %47 = vector.broadcast %cst_29 : f32 to vector<256x128xf32>
    %48 = arith.mulf %47, %40 : vector<256x128xf32>
    %49 = arith.addf %46, %48 : vector<256x128xf32>
    %50 = arith.truncf %49 : vector<256x128xf32> to vector<256x128xbf16>
    %cst_30 = arith.constant dense<0.000000e+00> : vector<256x256xf32>
    %51 = tpu.matmul %50, %1, %cst_30 {dimension_numbers = #tpu.dot_dimension_numbers<[1], [0], [0], [1], [0, 0, 1, 1], [], []>} : vector<256x128xbf16>, vector<128x256xbf16>, vector<256x256xf32> -> vector<256x256xf32>
    %52 = vector.broadcast %12 : vector<1x256xf32> to vector<256x256xf32>
    %53 = arith.addf %51, %52 : vector<256x256xf32>
    %54 = arith.truncf %53 : vector<256x256xf32> to vector<256x256xbf16>
    %55 = math.tanh %54 : vector<256x256xbf16>
    %cst_31 = arith.constant dense<0.000000e+00> : vector<256x128xf32>
    %56 = tpu.matmul %55, %2, %cst_31 {dimension_numbers = #tpu.dot_dimension_numbers<[1], [0], [0], [1], [0, 0, 1, 1], [], []>} : vector<256x256xbf16>, vector<256x128xbf16>, vector<256x128xf32> -> vector<256x128xf32>
    %57 = vector.broadcast %5 : vector<1x128xf32> to vector<256x128xf32>
    %58 = arith.addf %56, %57 : vector<256x128xf32>
    %c0_32 = arith.constant 0 : index
    %c0_33 = arith.constant 0 : index
    %59 = vector.load %arg8[%c0_32, %c0_33] : memref<256x128xf32, #tpu.memory_space<vmem>>, vector<256x128xf32>
    %cst_34 = arith.constant 2.000000e+00 : f32
    %60 = vector.broadcast %cst_34 : f32 to vector<256x128xf32>
    %61 = arith.mulf %60, %58 : vector<256x128xf32>
    %62 = arith.addf %59, %61 : vector<256x128xf32>
    %c0_35 = arith.constant 0 : index
    %c0_36 = arith.constant 0 : index
    %63 = vector.load %arg8[%c0_35, %c0_36] : memref<256x128xf32, #tpu.memory_space<vmem>>, vector<256x128xf32>
    tpu.vector_store %arg8[%c0_35, %c0_36], %62 {strides = array<i32>} : memref<256x128xf32, #tpu.memory_space<vmem>>, vector<256x128xf32>,
    %c0_37 = arith.constant 0 : index
    %c0_38 = arith.constant 0 : index
    %64 = vector.load %arg2[%c0_37, %c0_38] : memref<256x128xf32, #tpu.memory_space<vmem>>, vector<256x128xf32>
    %cst_39 = arith.constant 1.000000e-01 : f32
    %65 = vector.broadcast %cst_39 : f32 to vector<256x128xf32>
    %66 = arith.mulf %65, %58 : vector<256x128xf32>
    %67 = arith.addf %64, %66 : vector<256x128xf32>
    %68 = arith.truncf %67 : vector<256x128xf32> to vector<256x128xbf16>
    %cst_40 = arith.constant dense<0.000000e+00> : vector<256x256xf32>
    %69 = tpu.matmul %68, %1, %cst_40 {dimension_numbers = #tpu.dot_dimension_numbers<[1], [0], [0], [1], [0, 0, 1, 1], [], []>} : vector<256x128xbf16>, vector<128x256xbf16>, vector<256x256xf32> -> vector<256x256xf32>
    %70 = vector.broadcast %16 : vector<1x256xf32> to vector<256x256xf32>
    %71 = arith.addf %69, %70 : vector<256x256xf32>
    %72 = arith.truncf %71 : vector<256x256xf32> to vector<256x256xbf16>
    %73 = math.tanh %72 : vector<256x256xbf16>
    %cst_41 = arith.constant dense<0.000000e+00> : vector<256x128xf32>
    %74 = tpu.matmul %73, %2, %cst_41 {dimension_numbers = #tpu.dot_dimension_numbers<[1], [0], [0], [1], [0, 0, 1, 1], [], []>} : vector<256x256xbf16>, vector<256x128xbf16>, vector<256x128xf32> -> vector<256x128xf32>
    %75 = vector.broadcast %5 : vector<1x128xf32> to vector<256x128xf32>
    %76 = arith.addf %74, %75 : vector<256x128xf32>
    %c0_42 = arith.constant 0 : index
    %c0_43 = arith.constant 0 : index
    %77 = vector.load %arg2[%c0_42, %c0_43] : memref<256x128xf32, #tpu.memory_space<vmem>>, vector<256x128xf32>
    %c0_44 = arith.constant 0 : index
    %c0_45 = arith.constant 0 : index
    %78 = vector.load %arg8[%c0_44, %c0_45] : memref<256x128xf32, #tpu.memory_space<vmem>>, vector<256x128xf32>
    %79 = arith.addf %78, %76 : vector<256x128xf32>
    %cst_46 = arith.constant 0.0166666675 : f32
    %80 = vector.broadcast %cst_46 : f32 to vector<256x128xf32>
    %81 = arith.mulf %80, %79 : vector<256x128xf32>
    %82 = arith.addf %77, %81 : vector<256x128xf32>
    %c0_47 = arith.constant 0 : index
    %c0_48 = arith.constant 0 : index
    %83 = vector.load %arg8[%c0_47, %c0_48] : memref<256x128xf32, #tpu.memory_space<vmem>>, vector<256x128xf32>
    tpu.vector_store %arg8[%c0_47, %c0_48], %82 {strides = array<i32>} : memref<256x128xf32, #tpu.memory_space<vmem>>, vector<256x128xf32>,
    return
  }
  func.func @transform_0(%arg0: i32) -> i32 {
    %c0_i32 = arith.constant 0 : i32
    %c0_i32_0 = arith.constant 0 : i32
    return %c0_i32 : i32
  }
  func.func @transform_1(%arg0: i32) -> (i32, i32) {
    %c0_i32 = arith.constant 0 : i32
    %c0_i32_0 = arith.constant 0 : i32
    return %arg0, %c0_i32 : i32, i32
  }
  func.func @transform_2(%arg0: i32) -> (i32, i32) {
    %c0_i32 = arith.constant 0 : i32
    %c0_i32_0 = arith.constant 0 : i32
    %c0_i32_1 = arith.constant 0 : i32
    return %c0_i32, %c0_i32_0 : i32, i32
  }
  func.func @transform_3(%arg0: i32) -> (i32, i32) {
    %c0_i32 = arith.constant 0 : i32
    %c0_i32_0 = arith.constant 0 : i32
    %c0_i32_1 = arith.constant 0 : i32
    return %c0_i32, %c0_i32_0 : i32, i32
  }
  func.func @transform_4(%arg0: i32) -> (i32, i32) {
    %c0_i32 = arith.constant 0 : i32
    %c0_i32_0 = arith.constant 0 : i32
    %c0_i32_1 = arith.constant 0 : i32
    return %c0_i32, %c0_i32_0 : i32, i32
  }
  func.func @transform_5(%arg0: i32) -> (i32, i32) {
    %c0_i32 = arith.constant 0 : i32
    %c0_i32_0 = arith.constant 0 : i32
    %c0_i32_1 = arith.constant 0 : i32
    return %c0_i32, %c0_i32_0 : i32, i32
  }
  func.func @transform_6(%arg0: i32) -> (i32, i32) {
    %c0_i32 = arith.constant 0 : i32
    %c0_i32_0 = arith.constant 0 : i32
    %c0_i32_1 = arith.constant 0 : i32
    return %c0_i32, %c0_i32_0 : i32, i32
  }
  func.func @transform_7(%arg0: i32) -> (i32, i32) {
    %c0_i32 = arith.constant 0 : i32
    %c0_i32_0 = arith.constant 0 : i32
    return %arg0, %c0_i32 : i32, i32
  }
}

</mosaic_0001>

<llo_original>
// kernel: tpu_custom_call.1
$region0: #{tpu_custom_call.1}
  #allocation0 [shape = 'u32[]', space=smem, size = 0x4, offset = 0x4, fixed_abs, tag = 'smem constant byte address 0x4 - core index']
  #allocation1 [shape = 'u32[144,128]{1,0:T(1,128)}', space=vmem, size = 0x12000, scoped, tag = 'internal scratch']
  #allocation2 [shape = 'f32[1]{0:T(128)S(6)}', space=smem, size = 0x200, scoped, tag = 'scoped memory for tpu_custom_call.1']
  %s0 = inlined_call_operand.<no memory space> [shape: f32[1], index: 0, kind: input, shape index: {}]
  %s1 = inlined_call_operand.hbm [shape: f32[256,128], index: 1, kind: input, shape index: {}, may-alias: {1,7}]
  %s2 = inlined_call_operand.vmem [shape: bf16[128,256], index: 2, kind: input, shape index: {}]
  %s3 = inlined_call_operand.vmem [shape: f32[1,256], index: 3, kind: input, shape index: {}]
  %s4 = inlined_call_operand.vmem [shape: f32[1,256], index: 4, kind: input, shape index: {}]
  %s5 = inlined_call_operand.vmem [shape: bf16[256,128], index: 5, kind: input, shape index: {}]
  %s6 = inlined_call_operand.vmem [shape: f32[1,128], index: 6, kind: input, shape index: {}]
  %s7 = inlined_call_operand.hbm [shape: f32[256,128], index: 7, kind: output, shape index: {}, may-alias: {1,7}]
  %s8 = sld [smem:[#allocation0]]
  $region42: #{tpu_custom_call.1} parent=0
    _
  %s10 = ssub.s32 1, %s8
  %s11 = scalar_select 0, %s10, %s8
  %12 = sst [smem:[#allocation2]] %s0
  $region1: #{tpu_custom_call.1} parent=0
    #allocation3 [shape = 'u8[131072]{0}', space=vmem, size = 0x20000, scoped, tag = 'input window, operand 1, single buffered']
    #allocation4 [shape = 's32[1]{0}', space=sflag, size = 0x4, scoped, tag = 'scoped memory for tpu_custom_call.1']
    #allocation5 [shape = 's32[1]{0}', space=sflag, size = 0x4, scoped, tag = 'scoped memory for tpu_custom_call.1']
    #allocation6 [shape = 'u8[131072]{0}', space=vmem, size = 0x20000, scoped, tag = 'output window, operand 0, single buffered']
    %13 = vsyncpa [#allocation4], 0
    %14 = vsyncpa [#allocation5], 0
    // Predicated region
    $region2: #{tpu_custom_call.1} parent=1 // pred_check
      _
    $region3: #{tpu_custom_call.1} parent=1 // pred_check_branch
      %16 = sbr.rel (0) target = $region5
    $region4: #{tpu_custom_call.1} parent=1 // pred_region
      _
    $region5: #{tpu_custom_call.1} parent=1 // pred_fallthru
      _
    // Predicated region
    $region6: #{tpu_custom_call.1} parent=1 // pred_check
      _
    $region7: #{tpu_custom_call.1} parent=1 // pred_check_branch
      %18 = sbr.rel (0) target = $region9
    $region8: #{tpu_custom_call.1} parent=1 // pred_region
      %s20 = ssub.s32 4096, 4096
      %21 = vsyncadd [#allocation4], %s20
      %s22 = sshll.u32 [#allocation3], 4
      %s23 = int_to_ptr.vmem [resolvable:$true] %s22
      %28 = dma.hbm_to_vmem [thread:$0]  %s1, 4096, %s23, [#allocation4], 128, 128, 8
    $region9: #{tpu_custom_call.1} parent=1 // pred_fallthru
      _
    // Predicated region
    $region10: #{tpu_custom_call.1} parent=1 // pred_check
      _
    $region11: #{tpu_custom_call.1} parent=1 // pred_check_branch
      %30 = sbr.rel (0) target = $region13
    $region12: #{tpu_custom_call.1} parent=1 // pred_region
      _
    $region13: #{tpu_custom_call.1} parent=1 // pred_fallthru
      _
    // Predicated region
    $region14: #{tpu_custom_call.1} parent=1 // pred_check
      _
    $region15: #{tpu_custom_call.1} parent=1 // pred_check_branch
      %32 = sbr.rel (0) target = $region17
    $region16: #{tpu_custom_call.1} parent=1 // pred_region
      _
    $region17: #{tpu_custom_call.1} parent=1 // pred_fallthru
      _
    // Predicated region
    $region18: #{tpu_custom_call.1} parent=1 // pred_check
      _
    $region19: #{tpu_custom_call.1} parent=1 // pred_check_branch
      %34 = sbr.rel (0) target = $region21
    $region20: #{tpu_custom_call.1} parent=1 // pred_region
      _
    $region21: #{tpu_custom_call.1} parent=1 // pred_fallthru
      _
    // Predicated region
    $region22: #{tpu_custom_call.1} parent=1 // pred_check
      _
    $region23: #{tpu_custom_call.1} parent=1 // pred_check_branch
      %36 = sbr.rel (0) target = $region25
    $region24: #{tpu_custom_call.1} parent=1 // pred_region
      _
    $region25: #{tpu_custom_call.1} parent=1 // pred_fallthru
      _
    // Predicated region
    $region26: #{tpu_custom_call.1} parent=1 // pred_check
      _
    $region27: #{tpu_custom_call.1} parent=1 // pred_check_branch
      %38 = sbr.rel (0) target = $region29
    $region28: #{tpu_custom_call.1} parent=1 // pred_region
      _
    $region29: #{tpu_custom_call.1} parent=1 // pred_fallthru
      _
    // Predicated region
    $region30: #{tpu_custom_call.1} parent=1 // pred_check
      _
    $region31: #{tpu_custom_call.1} parent=1 // pred_check_branch
      %40 = sbr.rel (0) target = $region33
    $region32: #{tpu_custom_call.1} parent=1 // pred_region
      %41 = dma.done [#allocation4], 4096
    $region33: #{tpu_custom_call.1} parent=1 // pred_fallthru
      _
    %s43 = sld [smem:[#allocation2]]
    %v44 = vld [vmem:[%s2] sm:$0xff]
    %v45 = vld [vmem:[%s2 + $0x8] sm:$0xff]
    %v46 = vld [vmem:[%s2 + $0x10] sm:$0xff]
    %v47 = vld [vmem:[%s2 + $0x18] sm:$0xff]
    %v48 = vld [vmem:[%s2 + $0x20] sm:$0xff]
    %v49 = vld [vmem:[%s2 + $0x28] sm:$0xff]
    %v50 = vld [vmem:[%s2 + $0x30] sm:$0xff]
    %v51 = vld [vmem:[%s2 + $0x38] sm:$0xff]
    %v52 = vld [vmem:[%s2 + $0x40] sm:$0xff]
    %v53 = vld [vmem:[%s2 + $0x48] sm:$0xff]
    %v54 = vld [vmem:[%s2 + $0x50] sm:$0xff]
    %v55 = vld [vmem:[%s2 + $0x58] sm:$0xff]
    %v56 = vld [vmem:[%s2 + $0x60] sm:$0xff]
    %v57 = vld [vmem:[%s2 + $0x68] sm:$0xff]
    %v58 = vld [vmem:[%s2 + $0x70] sm:$0xff]
    %v59 = vld [vmem:[%s2 + $0x78] sm:$0xff]
    %v60 = vld [vmem:[%s5] sm:$0xf]
    %v61 = vld [vmem:[%s5 + $0x4] sm:$0xf]
    %v62 = vld [vmem:[%s5 + $0x8] sm:$0xf]
    %v63 = vld [vmem:[%s5 + $0xc] sm:$0xf]
    %v64 = vld [vmem:[%s5 + $0x10] sm:$0xf]
    %v65 = vld [vmem:[%s5 + $0x14] sm:$0xf]
    %v66 = vld [vmem:[%s5 + $0x18] sm:$0xf]
    %v67 = vld [vmem:[%s5 + $0x1c] sm:$0xf]
    %v68 = vld [vmem:[%s5 + $0x20] sm:$0xf]
    %v69 = vld [vmem:[%s5 + $0x24] sm:$0xf]
    %v70 = vld [vmem:[%s5 + $0x28] sm:$0xf]
    %v71 = vld [vmem:[%s5 + $0x2c] sm:$0xf]
    %v72 = vld [vmem:[%s5 + $0x30] sm:$0xf]
    %v73 = vld [vmem:[%s5 + $0x34] sm:$0xf]
    %v74 = vld [vmem:[%s5 + $0x38] sm:$0xf]
    %v75 = vld [vmem:[%s5 + $0x3c] sm:$0xf]
    %v76 = vld [vmem:[%s5 + $0x40] sm:$0xf]
    %v77 = vld [vmem:[%s5 + $0x44] sm:$0xf]
    %v78 = vld [vmem:[%s5 + $0x48] sm:$0xf]
    %v79 = vld [vmem:[%s5 + $0x4c] sm:$0xf]
    %v80 = vld [vmem:[%s5 + $0x50] sm:$0xf]
    %v81 = vld [vmem:[%s5 + $0x54] sm:$0xf]
    %v82 = vld [vmem:[%s5 + $0x58] sm:$0xf]
    %v83 = vld [vmem:[%s5 + $0x5c] sm:$0xf]
    %v84 = vld [vmem:[%s5 + $0x60] sm:$0xf]
    %v85 = vld [vmem:[%s5 + $0x64] sm:$0xf]
    %v86 = vld [vmem:[%s5 + $0x68] sm:$0xf]
    %v87 = vld [vmem:[%s5 + $0x6c] sm:$0xf]
    %v88 = vld [vmem:[%s5 + $0x70] sm:$0xf]
    %v89 = vld [vmem:[%s5 + $0x74] sm:$0xf]
    %v90 = vld [vmem:[%s5 + $0x78] sm:$0xf]
    %v91 = vld [vmem:[%s5 + $0x7c] sm:$0xf]
    %v92 = vld [vmem:[%s3] sm:$0x3]
    %v93 = vld [vmem:[%s4] sm:$0x3]
    %v94 = vld [vmem:[%s6] sm:$0x1]
    %v95 = vstv %s43
    %v96 = vmul.f32 %v95, %v93
    %v97 = vadd.f32 %v92, %v96
    %s98 = sadd.f32 %s43, 0.05
    %v99 = vstv %s98
    %v100 = vmul.f32 %v99, %v93
    %v101 = vadd.f32 %v92, %v100
    %s102 = sadd.f32 %s43, 0.1
    %v103 = vstv %s102
    %v104 = vmul.f32 %v103, %v93
    %v105 = vadd.f32 %v92, %v104
    %v106 = vld [vmem:[#allocation3] sm:$0xff]
    %v107 = vld [vmem:[#allocation3 + $0x8] sm:$0xff]
    %v108 = vld [vmem:[#allocation3 + $0x10] sm:$0xff]
    %v109 = vld [vmem:[#allocation3 + $0x18] sm:$0xff]
    %v110 = vld [vmem:[#allocation3 + $0x20] sm:$0xff]
    %v111 = vld [vmem:[#allocation3 + $0x28] sm:$0xff]
    %v112 = vld [vmem:[#allocation3 + $0x30] sm:$0xff]
    %v113 = vld [vmem:[#allocation3 + $0x38] sm:$0xff]
    %v114 = vld [vmem:[#allocation3 + $0x40] sm:$0xff]
    %v115 = vld [vmem:[#allocation3 + $0x48] sm:$0xff]
    %v116 = vld [vmem:[#allocation3 + $0x50] sm:$0xff]
    %v117 = vld [vmem:[#allocation3 + $0x58] sm:$0xff]
    %v118 = vld [vmem:[#allocation3 + $0x60] sm:$0xff]
    %v119 = vld [vmem:[#allocation3 + $0x68] sm:$0xff]
    %v120 = vld [vmem:[#allocation3 + $0x70] sm:$0xff]
    %v121 = vld [vmem:[#allocation3 + $0x78] sm:$0xff]
    %v122 = vld [vmem:[#allocation3 + $0x80] sm:$0xff]
    %v123 = vld [vmem:[#allocation3 + $0x88] sm:$0xff]
    %v124 = vld [vmem:[#allocation3 + $0x90] sm:$0xff]
    %v125 = vld [vmem:[#allocation3 + $0x98] sm:$0xff]
    %v126 = vld [vmem:[#allocation3 + $0xa0] sm:$0xff]
    %v127 = vld [vmem:[#allocation3 + $0xa8] sm:$0xff]
    %v128 = vld [vmem:[#allocation3 + $0xb0] sm:$0xff]
    %v129 = vld [vmem:[#allocation3 + $0xb8] sm:$0xff]
    %v130 = vld [vmem:[#allocation3 + $0xc0] sm:$0xff]
    %v131 = vld [vmem:[#allocation3 + $0xc8] sm:$0xff]
    %v132 = vld [vmem:[#allocation3 + $0xd0] sm:$0xff]
    %v133 = vld [vmem:[#allocation3 + $0xd8] sm:$0xff]
    %v134 = vld [vmem:[#allocation3 + $0xe0] sm:$0xff]
    %v135 = vld [vmem:[#allocation3 + $0xe8] sm:$0xff]
    %v136 = vld [vmem:[#allocation3 + $0xf0] sm:$0xff]
    %v137 = vld [vmem:[#allocation3 + $0xf8] sm:$0xff]
    %v138 = vpack.c.bf16 %v107, %v106
    %v139 = vpack.c.bf16 %v109, %v108
    %v140 = vpack.c.bf16 %v111, %v110
    %v141 = vpack.c.bf16 %v113, %v112
    %v142 = vpack.c.bf16 %v115, %v114
    %v143 = vpack.c.bf16 %v117, %v116
    %v144 = vpack.c.bf16 %v119, %v118
    %v145 = vpack.c.bf16 %v121, %v120
    %v146 = vpack.c.bf16 %v123, %v122
    %v147 = vpack.c.bf16 %v125, %v124
    %v148 = vpack.c.bf16 %v127, %v126
    %v149 = vpack.c.bf16 %v129, %v128
    %v150 = vpack.c.bf16 %v131, %v130
    %v151 = vpack.c.bf16 %v133, %v132
    %v152 = vpack.c.bf16 %v135, %v134
    %v153 = vpack.c.bf16 %v137, %v136
    %v155 = vlaneseq
    %v156 = vshrl.u32 %v155, 7
    %v157 = vsub.s32 0, %v156
    %v158 = vrot.slane %v97, %v157
    %v159 = vlaneseq
    %v160 = vshrl.u32 %v159, 7
    %v161 = vsub.s32 1, %v160
    %v162 = vrot.slane %v97, %v161
    %v181 = vunpack.c.l.b16 %v44
    %v182 = vunpack.c.h.b16 %v44
    %v183 = vunpack.c.l.b16 %v45
    %v184 = vunpack.c.h.b16 %v45
    %v185 = vunpack.c.l.b16 %v46
    %v186 = vunpack.c.h.b16 %v46
    %v187 = vunpack.c.l.b16 %v47
    %v188 = vunpack.c.h.b16 %v47
    %v189 = vunpack.c.l.b16 %v48
    %v190 = vunpack.c.h.b16 %v48
    %v191 = vunpack.c.l.b16 %v49
    %v192 = vunpack.c.h.b16 %v49
    %v193 = vunpack.c.l.b16 %v50
    %v194 = vunpack.c.h.b16 %v50
    %v195 = vunpack.c.l.b16 %v51
    %v196 = vunpack.c.h.b16 %v51
    %v197 = vunpack.c.l.b16 %v52
    %v198 = vunpack.c.h.b16 %v52
    %v199 = vunpack.c.l.b16 %v53
    %v200 = vunpack.c.h.b16 %v53
    %v201 = vunpack.c.l.b16 %v54
    %v202 = vunpack.c.h.b16 %v54
    %v203 = vunpack.c.l.b16 %v55
    %v204 = vunpack.c.h.b16 %v55
    %v205 = vunpack.c.l.b16 %v56
    %v206 = vunpack.c.h.b16 %v56
    %v207 = vunpack.c.l.b16 %v57
    %v208 = vunpack.c.h.b16 %v57
    %v209 = vunpack.c.l.b16 %v58
    %v210 = vunpack.c.h.b16 %v58
    %v211 = vunpack.c.l.b16 %v59
    %v212 = vunpack.c.h.b16 %v59
    %v213 = vpack.c.b16 %v183, %v181
    %v214 = vpack.c.b16 %v184, %v182
    %v215 = vpack.c.b16 %v187, %v185
    %v216 = vpack.c.b16 %v188, %v186
    %v217 = vpack.c.b16 %v191, %v189
    %v218 = vpack.c.b16 %v192, %v190
    %v219 = vpack.c.b16 %v195, %v193
    %v220 = vpack.c.b16 %v196, %v194
    %v221 = vpack.c.b16 %v199, %v197
    %v222 = vpack.c.b16 %v200, %v198
    %v223 = vpack.c.b16 %v203, %v201
    %v224 = vpack.c.b16 %v204, %v202
    %v225 = vpack.c.b16 %v207, %v205
    %v226 = vpack.c.b16 %v208, %v206
    %v227 = vpack.c.b16 %v211, %v209
    %v228 = vpack.c.b16 %v212, %v210
    %245 = vmatprep.subr.bf16.mxu0 %v214
    %246 = vmatpush1.bf16.msra.mxu0 %v213
    %247 = vmatprep.subr.bf16.mxu0 %v216
    %248 = vmatpush1.bf16.msra.mxu0 %v215
    %249 = vmatprep.subr.bf16.mxu0 %v218
    %250 = vmatpush1.bf16.msra.mxu0 %v217
    %251 = vmatprep.subr.bf16.mxu0 %v220
    %252 = vmatpush1.bf16.msra.mxu0 %v219
    %253 = vmatprep.subr.bf16.mxu0 %v222
    %254 = vmatpush1.bf16.msra.mxu0 %v221
    %255 = vmatprep.subr.bf16.mxu0 %v224
    %256 = vmatpush1.bf16.msra.mxu0 %v223
    %257 = vmatprep.subr.bf16.mxu0 %v226
    %258 = vmatpush1.bf16.msra.mxu0 %v225
    %259 = vmatprep.subr.bf16.mxu0 %v228
    %260 = vmatpush1.bf16.msra.mxu0 %v227
    %261 = vmatprep.subr.bf16.mxu0 0
    %262 = vmatpush1.bf16.msra.mxu0 0
    %263 = vmatprep.subr.bf16.mxu0 0
    %264 = vmatpush1.bf16.msra.mxu0 0
    %265 = vmatprep.subr.bf16.mxu0 0
    %266 = vmatpush1.bf16.msra.mxu0 0
    %267 = vmatprep.subr.bf16.mxu0 0
    %268 = vmatpush1.bf16.msra.mxu0 0
    %269 = vmatprep.subr.bf16.mxu0 0
    %270 = vmatpush1.bf16.msra.mxu0 0
    %271 = vmatprep.subr.bf16.mxu0 0
    %272 = vmatpush1.bf16.msra.mxu0 0
    %273 = vmatprep.subr.bf16.mxu0 0
    %274 = vmatpush1.bf16.msra.mxu0 0
    %275 = vmatprep.subr.bf16.mxu0 0
    %276 = vmatpush1.bf16.msra.mxu0 0
    %277 = vmatprep.mubr.bf16.mxu0 0
    %278 = vmatmul.mubr.bf16.gmra.mrb[0].mxu0 %v138
    %v279 = vpop.f32.mrb[0].mxu0
    %v280 = vadd.f32 %v158, %v279
    %v281 = vpop.f32.mrb[0].mxu0
    %v282 = vadd.f32 %v162, %v281
    %v283 = vpop.f32.mrb[0].mxu0
    %v284 = vadd.f32 %v158, %v283
    %v285 = vpop.f32.mrb[0].mxu0
    %v286 = vadd.f32 %v162, %v285
    %287 = vmatprep.mubr.bf16.mxu0 0
    %288 = vmatmul.mubr.bf16.gmra.mrb[0].mxu0 %v139
    %v289 = vpop.f32.mrb[0].mxu0
    %v290 = vadd.f32 %v158, %v289
    %v291 = vpop.f32.mrb[0].mxu0
    %v292 = vadd.f32 %v162, %v291
    %v293 = vpop.f32.mrb[0].mxu0
    %v294 = vadd.f32 %v158, %v293
    %v295 = vpop.f32.mrb[0].mxu0
    %v296 = vadd.f32 %v162, %v295
    %297 = vmatprep.mubr.bf16.mxu0 0
    %298 = vmatmul.mubr.bf16.gmra.mrb[0].mxu0 %v140
    %v299 = vpop.f32.mrb[0].mxu0
    %v300 = vadd.f32 %v158, %v299
    %v301 = vpop.f32.mrb[0].mxu0
    %v302 = vadd.f32 %v162, %v301
    %v303 = vpop.f32.mrb[0].mxu0
    %v304 = vadd.f32 %v158, %v303
    %v305 = vpop.f32.mrb[0].mxu0
    %v306 = vadd.f32 %v162, %v305
    %307 = vmatprep.mubr.bf16.mxu0 0
    %308 = vmatmul.mubr.bf16.gmra.mrb[0].mxu0 %v141
    %v309 = vpop.f32.mrb[0].mxu0
    %v310 = vadd.f32 %v158, %v309
    %v311 = vpop.f32.mrb[0].mxu0
    %v312 = vadd.f32 %v162, %v311
    %v313 = vpop.f32.mrb[0].mxu0
    %v314 = vadd.f32 %v158, %v313
    %v315 = vpop.f32.mrb[0].mxu0
    %v316 = vadd.f32 %v162, %v315
    %317 = vmatprep.mubr.bf16.mxu0 0
    %318 = vmatmul.mubr.bf16.gmra.mrb[0].mxu0 %v142
    %v319 = vpop.f32.mrb[0].mxu0
    %v320 = vadd.f32 %v158, %v319
    %v321 = vpop.f32.mrb[0].mxu0
    %v322 = vadd.f32 %v162, %v321
    %v323 = vpop.f32.mrb[0].mxu0
    %v324 = vadd.f32 %v158, %v323
    %v325 = vpop.f32.mrb[0].mxu0
    %v326 = vadd.f32 %v162, %v325
    %327 = vmatprep.mubr.bf16.mxu0 0
    %328 = vmatmul.mubr.bf16.gmra.mrb[0].mxu0 %v143
    %v329 = vpop.f32.mrb[0].mxu0
    %v330 = vadd.f32 %v158, %v329
    %v331 = vpop.f32.mrb[0].mxu0
    %v332 = vadd.f32 %v162, %v331
    %v333 = vpop.f32.mrb[0].mxu0
    %v334 = vadd.f32 %v158, %v333
    %v335 = vpop.f32.mrb[0].mxu0
    %v336 = vadd.f32 %v162, %v335
    %337 = vmatprep.mubr.bf16.mxu0 0
    %338 = vmatmul.mubr.bf16.gmra.mrb[0].mxu0 %v144
    %v339 = vpop.f32.mrb[0].mxu0
    %v340 = vadd.f32 %v158, %v339
    %v341 = vpop.f32.mrb[0].mxu0
    %v342 = vadd.f32 %v162, %v341
    %v343 = vpop.f32.mrb[0].mxu0
    %v344 = vadd.f32 %v158, %v343
    %v345 = vpop.f32.mrb[0].mxu0
    %v346 = vadd.f32 %v162, %v345
    %347 = vmatprep.mubr.bf16.mxu0 0
    %348 = vmatmul.mubr.bf16.gmra.mrb[0].mxu0 %v145
    %v349 = vpop.f32.mrb[0].mxu0
    %v350 = vadd.f32 %v158, %v349
    %v351 = vpop.f32.mrb[0].mxu0
    %v352 = vadd.f32 %v162, %v351
    %v353 = vpop.f32.mrb[0].mxu0
    %v354 = vadd.f32 %v158, %v353
    %v355 = vpop.f32.mrb[0].mxu0
    %v356 = vadd.f32 %v162, %v355
    %357 = vmatprep.mubr.bf16.mxu0 0
    %358 = vmatmul.mubr.bf16.gmra.mrb[0].mxu0 %v146
    %v359 = vpop.f32.mrb[0].mxu0
    %v360 = vadd.f32 %v158, %v359
    %v361 = vpop.f32.mrb[0].mxu0
    %v362 = vadd.f32 %v162, %v361
    %v363 = vpop.f32.mrb[0].mxu0
    %v364 = vadd.f32 %v158, %v363
    %v365 = vpop.f32.mrb[0].mxu0
    %v366 = vadd.f32 %v162, %v365
    %367 = vmatprep.mubr.bf16.mxu0 0
    %368 = vmatmul.mubr.bf16.gmra.mrb[0].mxu0 %v147
    %v369 = vpop.f32.mrb[0].mxu0
    %v370 = vadd.f32 %v158, %v369
    %v371 = vpop.f32.mrb[0].mxu0
    %v372 = vadd.f32 %v162, %v371
    %v373 = vpop.f32.mrb[0].mxu0
    %v374 = vadd.f32 %v158, %v373
    %v375 = vpop.f32.mrb[0].mxu0
    %v376 = vadd.f32 %v162, %v375
    %377 = vmatprep.mubr.bf16.mxu0 0
    %378 = vmatmul.mubr.bf16.gmra.mrb[0].mxu0 %v148
    %v379 = vpop.f32.mrb[0].mxu0
    %v380 = vadd.f32 %v158, %v379
    %v381 = vpop.f32.mrb[0].mxu0
    %v382 = vadd.f32 %v162, %v381
    %v383 = vpop.f32.mrb[0].mxu0
    %v384 = vadd.f32 %v158, %v383
    %v385 = vpop.f32.mrb[0].mxu0
    %v386 = vadd.f32 %v162, %v385
    %387 = vmatprep.mubr.bf16.mxu0 0
    %388 = vmatmul.mubr.bf16.gmra.mrb[0].mxu0 %v149
    %v389 = vpop.f32.mrb[0].mxu0
    %v390 = vadd.f32 %v158, %v389
    %v391 = vpop.f32.mrb[0].mxu0
    %v392 = vadd.f32 %v162, %v391
    %v393 = vpop.f32.mrb[0].mxu0
    %v394 = vadd.f32 %v158, %v393
    %v395 = vpop.f32.mrb[0].mxu0
    %v396 = vadd.f32 %v162, %v395
    %397 = vmatprep.mubr.bf16.mxu0 0
    %398 = vmatmul.mubr.bf16.gmra.mrb[0].mxu0 %v150
    %v399 = vpop.f32.mrb[0].mxu0
    %v400 = vadd.f32 %v158, %v399
    %v401 = vpop.f32.mrb[0].mxu0
    %v402 = vadd.f32 %v162, %v401
    %v403 = vpop.f32.mrb[0].mxu0
    %v404 = vadd.f32 %v158, %v403
    %v405 = vpop.f32.mrb[0].mxu0
    %v406 = vadd.f32 %v162, %v405
    %407 = vmatprep.mubr.bf16.mxu0 0
    %408 = vmatmul.mubr.bf16.gmra.mrb[0].mxu0 %v151
    %v409 = vpop.f32.mrb[0].mxu0
    %v410 = vadd.f32 %v158, %v409
    %v411 = vpop.f32.mrb[0].mxu0
    %v412 = vadd.f32 %v162, %v411
    %v413 = vpop.f32.mrb[0].mxu0
    %v414 = vadd.f32 %v158, %v413
    %v415 = vpop.f32.mrb[0].mxu0
    %v416 = vadd.f32 %v162, %v415
    %417 = vmatprep.mubr.bf16.mxu0 0
    %418 = vmatmul.mubr.bf16.gmra.mrb[0].mxu0 %v152
    %v419 = vpop.f32.mrb[0].mxu0
    %v420 = vadd.f32 %v158, %v419
    %v421 = vpop.f32.mrb[0].mxu0
    %v422 = vadd.f32 %v162, %v421
    %v423 = vpop.f32.mrb[0].mxu0
    %v424 = vadd.f32 %v158, %v423
    %v425 = vpop.f32.mrb[0].mxu0
    %v426 = vadd.f32 %v162, %v425
    %427 = vmatprep.mubr.bf16.mxu0 0
    %428 = vmatmul.mubr.bf16.gmra.mrb[0].mxu0 %v153
    %v429 = vpop.f32.mrb[0].mxu0
    %v430 = vadd.f32 %v158, %v429
    %v431 = vpop.f32.mrb[0].mxu0
    %v432 = vadd.f32 %v162, %v431
    %v433 = vpop.f32.mrb[0].mxu0
    %v434 = vadd.f32 %v158, %v433
    %v435 = vpop.f32.mrb[0].mxu0
    %v436 = vadd.f32 %v162, %v435
    %437 = vdwg.mxu0
    %v438 = vpack.c.bf16 %v284, %v280
    %v439 = vpack.c.bf16 %v286, %v282
    %v440 = vpack.c.bf16 %v294, %v290
    %v441 = vpack.c.bf16 %v296, %v292
    %v442 = vpack.c.bf16 %v304, %v300
    %v443 = vpack.c.bf16 %v306, %v302
    %v444 = vpack.c.bf16 %v314, %v310
    %v445 = vpack.c.bf16 %v316, %v312
    %v446 = vpack.c.bf16 %v324, %v320
    %v447 = vpack.c.bf16 %v326, %v322
    %v448 = vpack.c.bf16 %v334, %v330
    %v449 = vpack.c.bf16 %v336, %v332
    %v450 = vpack.c.bf16 %v344, %v340
    %v451 = vpack.c.bf16 %v346, %v342
    %v452 = vpack.c.bf16 %v354, %v350
    %v453 = vpack.c.bf16 %v356, %v352
    %v454 = vpack.c.bf16 %v364, %v360
    %v455 = vpack.c.bf16 %v366, %v362
    %v456 = vpack.c.bf16 %v374, %v370
    %v457 = vpack.c.bf16 %v376, %v372
    %v458 = vpack.c.bf16 %v384, %v380
    %v459 = vpack.c.bf16 %v386, %v382
    %v460 = vpack.c.bf16 %v394, %v390
    %v461 = vpack.c.bf16 %v396, %v392
    %v462 = vpack.c.bf16 %v404, %v400
    %v463 = vpack.c.bf16 %v406, %v402
    %v464 = vpack.c.bf16 %v414, %v410
    %v465 = vpack.c.bf16 %v416, %v412
    %v466 = vpack.c.bf16 %v424, %v420
    %v467 = vpack.c.bf16 %v426, %v422
    %v468 = vpack.c.bf16 %v434, %v430
    %v469 = vpack.c.bf16 %v436, %v432
    %v470 = vtanh.bf16.pop %v438
    %v471 = vtanh.bf16.pop %v439
    %v472 = vtanh.bf16.pop %v440
    %v473 = vtanh.bf16.pop %v441
    %v474 = vtanh.bf16.pop %v442
    %v475 = vtanh.bf16.pop %v443
    %v476 = vtanh.bf16.pop %v444
    %v477 = vtanh.bf16.pop %v445
    %v478 = vtanh.bf16.pop %v446
    %v479 = vtanh.bf16.pop %v447
    %v480 = vtanh.bf16.pop %v448
    %v481 = vtanh.bf16.pop %v449
    %v482 = vtanh.bf16.pop %v450
    %v483 = vtanh.bf16.pop %v451
    %v484 = vtanh.bf16.pop %v452
    %v485 = vtanh.bf16.pop %v453
    %v486 = vtanh.bf16.pop %v454
    %v487 = vtanh.bf16.pop %v455
    %v488 = vtanh.bf16.pop %v456
    %v489 = vtanh.bf16.pop %v457
    %v490 = vtanh.bf16.pop %v458
    %v491 = vtanh.bf16.pop %v459
    %v492 = vtanh.bf16.pop %v460
    %v493 = vtanh.bf16.pop %v461
    %v494 = vtanh.bf16.pop %v462
    %v495 = vtanh.bf16.pop %v463
    %v496 = vtanh.bf16.pop %v464
    %v497 = vtanh.bf16.pop %v465
    %v498 = vtanh.bf16.pop %v466
    %v499 = vtanh.bf16.pop %v467
    %v500 = vtanh.bf16.pop %v468
    %v501 = vtanh.bf16.pop %v469
    %v503 = vlaneseq
    %v504 = vshrl.u32 %v503, 7
    %v505 = vsub.s32 0, %v504
    %v506 = vrot.slane %v94, %v505
    %v540 = vunpack.c.l.b16 %v60
    %v541 = vunpack.c.l.b16 %v61
    %v542 = vunpack.c.l.b16 %v62
    %v543 = vunpack.c.l.b16 %v63
    %v544 = vunpack.c.l.b16 %v64
    %v545 = vunpack.c.l.b16 %v65
    %v546 = vunpack.c.l.b16 %v66
    %v547 = vunpack.c.l.b16 %v67
    %v548 = vunpack.c.l.b16 %v68
    %v549 = vunpack.c.l.b16 %v69
    %v550 = vunpack.c.l.b16 %v70
    %v551 = vunpack.c.l.b16 %v71
    %v552 = vunpack.c.l.b16 %v72
    %v553 = vunpack.c.l.b16 %v73
    %v554 = vunpack.c.l.b16 %v74
    %v555 = vunpack.c.l.b16 %v75
    %v556 = vunpack.c.l.b16 %v76
    %v557 = vunpack.c.l.b16 %v77
    %v558 = vunpack.c.l.b16 %v78
    %v559 = vunpack.c.l.b16 %v79
    %v560 = vunpack.c.l.b16 %v80
    %v561 = vunpack.c.l.b16 %v81
    %v562 = vunpack.c.l.b16 %v82
    %v563 = vunpack.c.l.b16 %v83
    %v564 = vunpack.c.l.b16 %v84
    %v565 = vunpack.c.l.b16 %v85
    %v566 = vunpack.c.l.b16 %v86
    %v567 = vunpack.c.l.b16 %v87
    %v568 = vunpack.c.l.b16 %v88
    %v569 = vunpack.c.l.b16 %v89
    %v570 = vunpack.c.l.b16 %v90
    %v571 = vunpack.c.l.b16 %v91
    %v572 = vpack.c.b16 %v541, %v540
    %v573 = vpack.c.b16 %v543, %v542
    %v574 = vpack.c.b16 %v545, %v544
    %v575 = vpack.c.b16 %v547, %v546
    %v576 = vpack.c.b16 %v549, %v548
    %v577 = vpack.c.b16 %v551, %v550
    %v578 = vpack.c.b16 %v553, %v552
    %v579 = vpack.c.b16 %v555, %v554
    %v580 = vpack.c.b16 %v557, %v556
    %v581 = vpack.c.b16 %v559, %v558
    %v582 = vpack.c.b16 %v561, %v560
    %v583 = vpack.c.b16 %v563, %v562
    %v584 = vpack.c.b16 %v565, %v564
    %v585 = vpack.c.b16 %v567, %v566
    %v586 = vpack.c.b16 %v569, %v568
    %v587 = vpack.c.b16 %v571, %v570
    %604 = vmatprep.subr.bf16.mxu0 0
    %605 = vmatpush1.bf16.msra.mxu0 %v572
    %606 = vmatprep.subr.bf16.mxu0 0
    %607 = vmatpush1.bf16.msra.mxu0 %v573
    %608 = vmatprep.subr.bf16.mxu0 0
    %609 = vmatpush1.bf16.msra.mxu0 %v574
    %610 = vmatprep.subr.bf16.mxu0 0
    %611 = vmatpush1.bf16.msra.mxu0 %v575
    %612 = vmatprep.subr.bf16.mxu0 0
    %613 = vmatpush1.bf16.msra.mxu0 %v576
    %614 = vmatprep.subr.bf16.mxu0 0
    %615 = vmatpush1.bf16.msra.mxu0 %v577
    %616 = vmatprep.subr.bf16.mxu0 0
    %617 = vmatpush1.bf16.msra.mxu0 %v578
    %618 = vmatprep.subr.bf16.mxu0 0
    %619 = vmatpush1.bf16.msra.mxu0 %v579
    %620 = vmatprep.subr.bf16.mxu0 0
    %621 = vmatpush1.bf16.msra.mxu0 %v580
    %622 = vmatprep.subr.bf16.mxu0 0
    %623 = vmatpush1.bf16.msra.mxu0 %v581
    %624 = vmatprep.subr.bf16.mxu0 0
    %625 = vmatpush1.bf16.msra.mxu0 %v582
    %626 = vmatprep.subr.bf16.mxu0 0
    %627 = vmatpush1.bf16.msra.mxu0 %v583
    %628 = vmatprep.subr.bf16.mxu0 0
    %629 = vmatpush1.bf16.msra.mxu0 %v584
    %630 = vmatprep.subr.bf16.mxu0 0
    %631 = vmatpush1.bf16.msra.mxu0 %v585
    %632 = vmatprep.subr.bf16.mxu0 0
    %633 = vmatpush1.bf16.msra.mxu0 %v586
    %634 = vmatprep.subr.bf16.mxu0 0
    %635 = vmatpush1.bf16.msra.mxu0 %v587
    %636 = vmatprep.mubr.bf16.mxu0 %v471
    %637 = vmatmul.mubr.bf16.gmra.mrb[0].mxu0 %v470
    %v638 = vpop.f32.mrb[0].mxu0
    %v639 = vadd.f32 %v506, %v638
    %v640 = vpop.f32.mrb[0].mxu0
    %v641 = vpop.f32.mrb[0].mxu0
    %v642 = vadd.f32 %v506, %v641
    %v643 = vpop.f32.mrb[0].mxu0
    %644 = vmatprep.mubr.bf16.mxu0 %v473
    %645 = vmatmul.mubr.bf16.gmra.mrb[0].mxu0 %v472
    %v646 = vpop.f32.mrb[0].mxu0
    %v647 = vadd.f32 %v506, %v646
    %v648 = vpop.f32.mrb[0].mxu0
    %v649 = vpop.f32.mrb[0].mxu0
    %v650 = vadd.f32 %v506, %v649
    %v651 = vpop.f32.mrb[0].mxu0
    %652 = vmatprep.mubr.bf16.mxu0 %v475
    %653 = vmatmul.mubr.bf16.gmra.mrb[0].mxu0 %v474
    %v654 = vpop.f32.mrb[0].mxu0
    %v655 = vadd.f32 %v506, %v654
    %v656 = vpop.f32.mrb[0].mxu0
    %v657 = vpop.f32.mrb[0].mxu0
    %v658 = vadd.f32 %v506, %v657
    %v659 = vpop.f32.mrb[0].mxu0
    %660 = vmatprep.mubr.bf16.mxu0 %v477
    %661 = vmatmul.mubr.bf16.gmra.mrb[0].mxu0 %v476
    %v662 = vpop.f32.mrb[0].mxu0
    %v663 = vadd.f32 %v506, %v662
    %v664 = vpop.f32.mrb[0].mxu0
    %v665 = vpop.f32.mrb[0].mxu0
    %v666 = vadd.f32 %v506, %v665
    %v667 = vpop.f32.mrb[0].mxu0
    %668 = vmatprep.mubr.bf16.mxu0 %v479
    %669 = vmatmul.mubr.bf16.gmra.mrb[0].mxu0 %v478
    %v670 = vpop.f32.mrb[0].mxu0
    %v671 = vadd.f32 %v506, %v670
    %v672 = vpop.f32.mrb[0].mxu0
    %v673 = vpop.f32.mrb[0].mxu0
    %v674 = vadd.f32 %v506, %v673
    %v675 = vpop.f32.mrb[0].mxu0
    %676 = vmatprep.mubr.bf16.mxu0 %v481
    %677 = vmatmul.mubr.bf16.gmra.mrb[0].mxu0 %v480
    %v678 = vpop.f32.mrb[0].mxu0
    %v679 = vadd.f32 %v506, %v678
    %v680 = vpop.f32.mrb[0].mxu0
    %v681 = vpop.f32.mrb[0].mxu0
    %v682 = vadd.f32 %v506, %v681
    %v683 = vpop.f32.mrb[0].mxu0
    %684 = vmatprep.mubr.bf16.mxu0 %v483
    %685 = vmatmul.mubr.bf16.gmra.mrb[0].mxu0 %v482
    %v686 = vpop.f32.mrb[0].mxu0
    %v687 = vadd.f32 %v506, %v686
    %v688 = vpop.f32.mrb[0].mxu0
    %v689 = vpop.f32.mrb[0].mxu0
    %v690 = vadd.f32 %v506, %v689
    %v691 = vpop.f32.mrb[0].mxu0
    %692 = vmatprep.mubr.bf16.mxu0 %v485
    %693 = vmatmul.mubr.bf16.gmra.mrb[0].mxu0 %v484
    %v694 = vpop.f32.mrb[0].mxu0
    %v695 = vadd.f32 %v506, %v694
    %v696 = vpop.f32.mrb[0].mxu0
    %v697 = vpop.f32.mrb[0].mxu0
    %v698 = vadd.f32 %v506, %v697
    %v699 = vpop.f32.mrb[0].mxu0
    %700 = vmatprep.mubr.bf16.mxu0 %v487
    %701 = vmatmul.mubr.bf16.gmra.mrb[0].mxu0 %v486
    %v702 = vpop.f32.mrb[0].mxu0
    %v703 = vadd.f32 %v506, %v702
    %v704 = vpop.f32.mrb[0].mxu0
    %v705 = vpop.f32.mrb[0].mxu0
    %v706 = vadd.f32 %v506, %v705
    %v707 = vpop.f32.mrb[0].mxu0
    %708 = vmatprep.mubr.bf16.mxu0 %v489
    %709 = vmatmul.mubr.bf16.gmra.mrb[0].mxu0 %v488
    %v710 = vpop.f32.mrb[0].mxu0
    %v711 = vadd.f32 %v506, %v710
    %v712 = vpop.f32.mrb[0].mxu0
    %v713 = vpop.f32.mrb[0].mxu0
    %v714 = vadd.f32 %v506, %v713
    %v715 = vpop.f32.mrb[0].mxu0
    %716 = vmatprep.mubr.bf16.mxu0 %v491
    %717 = vmatmul.mubr.bf16.gmra.mrb[0].mxu0 %v490
    %v718 = vpop.f32.mrb[0].mxu0
    %v719 = vadd.f32 %v506, %v718
    %v720 = vpop.f32.mrb[0].mxu0
    %v721 = vpop.f32.mrb[0].mxu0
    %v722 = vadd.f32 %v506, %v721
    %v723 = vpop.f32.mrb[0].mxu0
    %724 = vmatprep.mubr.bf16.mxu0 %v493
    %725 = vmatmul.mubr.bf16.gmra.mrb[0].mxu0 %v492
    %v726 = vpop.f32.mrb[0].mxu0
    %v727 = vadd.f32 %v506, %v726
    %v728 = vpop.f32.mrb[0].mxu0
    %v729 = vpop.f32.mrb[0].mxu0
    %v730 = vadd.f32 %v506, %v729
    %v731 = vpop.f32.mrb[0].mxu0
    %732 = vmatprep.mubr.bf16.mxu0 %v495
    %733 = vmatmul.mubr.bf16.gmra.mrb[0].mxu0 %v494
    %v734 = vpop.f32.mrb[0].mxu0
    %v735 = vadd.f32 %v506, %v734
    %v736 = vpop.f32.mrb[0].mxu0
    %v737 = vpop.f32.mrb[0].mxu0
    %v738 = vadd.f32 %v506, %v737
    %v739 = vpop.f32.mrb[0].mxu0
    %740 = vmatprep.mubr.bf16.mxu0 %v497
    %741 = vmatmul.mubr.bf16.gmra.mrb[0].mxu0 %v496
    %v742 = vpop.f32.mrb[0].mxu0
    %v743 = vadd.f32 %v506, %v742
    %v744 = vpop.f32.mrb[0].mxu0
    %v745 = vpop.f32.mrb[0].mxu0
    %v746 = vadd.f32 %v506, %v745
    %v747 = vpop.f32.mrb[0].mxu0
    %748 = vmatprep.mubr.bf16.mxu0 %v499
    %749 = vmatmul.mubr.bf16.gmra.mrb[0].mxu0 %v498
    %v750 = vpop.f32.mrb[0].mxu0
    %v751 = vadd.f32 %v506, %v750
    %v752 = vpop.f32.mrb[0].mxu0
    %v753 = vpop.f32.mrb[0].mxu0
    %v754 = vadd.f32 %v506, %v753
    %v755 = vpop.f32.mrb[0].mxu0
    %756 = vmatprep.mubr.bf16.mxu0 %v501
    %757 = vmatmul.mubr.bf16.gmra.mrb[0].mxu0 %v500
    %v758 = vpop.f32.mrb[0].mxu0
    %v759 = vadd.f32 %v506, %v758
    %v760 = vpop.f32.mrb[0].mxu0
    %v761 = vpop.f32.mrb[0].mxu0
    %v762 = vadd.f32 %v506, %v761
    %v763 = vpop.f32.mrb[0].mxu0
    %764 = vdwg.mxu0
    %765 = vst [vmem:[#allocation6] sm:$0xff] %v639
    %766 = vst [vmem:[#allocation6 + $0x8] sm:$0xff] %v642
    %767 = vst [vmem:[#allocation6 + $0x10] sm:$0xff] %v647
    %768 = vst [vmem:[#allocation6 + $0x18] sm:$0xff] %v650
    %769 = vst [vmem:[#allocation6 + $0x20] sm:$0xff] %v655
    %770 = vst [vmem:[#allocation6 + $0x28] sm:$0xff] %v658
    %771 = vst [vmem:[#allocation6 + $0x30] sm:$0xff] %v663
    %772 = vst [vmem:[#allocation6 + $0x38] sm:$0xff] %v666
    %773 = vst [vmem:[#allocation6 + $0x40] sm:$0xff] %v671
    %774 = vst [vmem:[#allocation6 + $0x48] sm:$0xff] %v674
    %775 = vst [vmem:[#allocation6 + $0x50] sm:$0xff] %v679
    %776 = vst [vmem:[#allocation6 + $0x58] sm:$0xff] %v682
    %777 = vst [vmem:[#allocation6 + $0x60] sm:$0xff] %v687
    %778 = vst [vmem:[#allocation6 + $0x68] sm:$0xff] %v690
    %779 = vst [vmem:[#allocation6 + $0x70] sm:$0xff] %v695
    %780 = vst [vmem:[#allocation6 + $0x78] sm:$0xff] %v698
    %781 = vst [vmem:[#allocation6 + $0x80] sm:$0xff] %v703
    %782 = vst [vmem:[#allocation6 + $0x88] sm:$0xff] %v706
    %783 = vst [vmem:[#allocation6 + $0x90] sm:$0xff] %v711
    %784 = vst [vmem:[#allocation6 + $0x98] sm:$0xff] %v714
    %785 = vst [vmem:[#allocation6 + $0xa0] sm:$0xff] %v719
    %786 = vst [vmem:[#allocation6 + $0xa8] sm:$0xff] %v722
    %787 = vst [vmem:[#allocation6 + $0xb0] sm:$0xff] %v727
    %788 = vst [vmem:[#allocation6 + $0xb8] sm:$0xff] %v730
    %789 = vst [vmem:[#allocation6 + $0xc0] sm:$0xff] %v735
    %790 = vst [vmem:[#allocation6 + $0xc8] sm:$0xff] %v738
    %791 = vst [vmem:[#allocation6 + $0xd0] sm:$0xff] %v743
    %792 = vst [vmem:[#allocation6 + $0xd8] sm:$0xff] %v746
    %793 = vst [vmem:[#allocation6 + $0xe0] sm:$0xff] %v751
    %794 = vst [vmem:[#allocation6 + $0xe8] sm:$0xff] %v754
    %795 = vst [vmem:[#allocation6 + $0xf0] sm:$0xff] %v759
    %796 = vst [vmem:[#allocation6 + $0xf8] sm:$0xff] %v762
    %v797 = vld [vmem:[#allocation3] sm:$0xff]
    %v798 = vld [vmem:[#allocation3 + $0x8] sm:$0xff]
    %v799 = vld [vmem:[#allocation3 + $0x10] sm:$0xff]
    %v800 = vld [vmem:[#allocation3 + $0x18] sm:$0xff]
    %v801 = vld [vmem:[#allocation3 + $0x20] sm:$0xff]
    %v802 = vld [vmem:[#allocation3 + $0x28] sm:$0xff]
    %v803 = vld [vmem:[#allocation3 + $0x30] sm:$0xff]
    %v804 = vld [vmem:[#allocation3 + $0x38] sm:$0xff]
    %v805 = vld [vmem:[#allocation3 + $0x40] sm:$0xff]
    %v806 = vld [vmem:[#allocation3 + $0x48] sm:$0xff]
    %v807 = vld [vmem:[#allocation3 + $0x50] sm:$0xff]
    %v808 = vld [vmem:[#allocation3 + $0x58] sm:$0xff]
    %v809 = vld [vmem:[#allocation3 + $0x60] sm:$0xff]
    %v810 = vld [vmem:[#allocation3 + $0x68] sm:$0xff]
    %v811 = vld [vmem:[#allocation3 + $0x70] sm:$0xff]
    %v812 = vld [vmem:[#allocation3 + $0x78] sm:$0xff]
    %v813 = vld [vmem:[#allocation3 + $0x80] sm:$0xff]
    %v814 = vld [vmem:[#allocation3 + $0x88] sm:$0xff]
    %v815 = vld [vmem:[#allocation3 + $0x90] sm:$0xff]
    %v816 = vld [vmem:[#allocation3 + $0x98] sm:$0xff]
    %v817 = vld [vmem:[#allocation3 + $0xa0] sm:$0xff]
    %v818 = vld [vmem:[#allocation3 + $0xa8] sm:$0xff]
    %v819 = vld [vmem:[#allocation3 + $0xb0] sm:$0xff]
    %v820 = vld [vmem:[#allocation3 + $0xb8] sm:$0xff]
    %v821 = vld [vmem:[#allocation3 + $0xc0] sm:$0xff]
    %v822 = vld [vmem:[#allocation3 + $0xc8] sm:$0xff]
    %v823 = vld [vmem:[#allocation3 + $0xd0] sm:$0xff]
    %v824 = vld [vmem:[#allocation3 + $0xd8] sm:$0xff]
    %v825 = vld [vmem:[#allocation3 + $0xe0] sm:$0xff]
    %v826 = vld [vmem:[#allocation3 + $0xe8] sm:$0xff]
    %v827 = vld [vmem:[#allocation3 + $0xf0] sm:$0xff]
    %v828 = vld [vmem:[#allocation3 + $0xf8] sm:$0xff]
    %v829 = vmul.f32 %v639, 0.05
    %v830 = vmul.f32 %v642, 0.05
    %v831 = vmul.f32 %v647, 0.05
    %v832 = vmul.f32 %v650, 0.05
    %v833 = vmul.f32 %v655, 0.05
    %v834 = vmul.f32 %v658, 0.05
    %v835 = vmul.f32 %v663, 0.05
    %v836 = vmul.f32 %v666, 0.05
    %v837 = vmul.f32 %v671, 0.05
    %v838 = vmul.f32 %v674, 0.05
    %v839 = vmul.f32 %v679, 0.05
    %v840 = vmul.f32 %v682, 0.05
    %v841 = vmul.f32 %v687, 0.05
    %v842 = vmul.f32 %v690, 0.05
    %v843 = vmul.f32 %v695, 0.05
    %v844 = vmul.f32 %v698, 0.05
    %v845 = vmul.f32 %v703, 0.05
    %v846 = vmul.f32 %v706, 0.05
    %v847 = vmul.f32 %v711, 0.05
    %v848 = vmul.f32 %v714, 0.05
    %v849 = vmul.f32 %v719, 0.05
    %v850 = vmul.f32 %v722, 0.05
    %v851 = vmul.f32 %v727, 0.05
    %v852 = vmul.f32 %v730, 0.05
    %v853 = vmul.f32 %v735, 0.05
    %v854 = vmul.f32 %v738, 0.05
    %v855 = vmul.f32 %v743, 0.05
    %v856 = vmul.f32 %v746, 0.05
    %v857 = vmul.f32 %v751, 0.05
    %v858 = vmul.f32 %v754, 0.05
    %v859 = vmul.f32 %v759, 0.05
    %v860 = vmul.f32 %v762, 0.05
    %v861 = vadd.f32 %v797, %v829
    %v862 = vadd.f32 %v798, %v830
    %v863 = vadd.f32 %v799, %v831
    %v864 = vadd.f32 %v800, %v832
    %v865 = vadd.f32 %v801, %v833
    %v866 = vadd.f32 %v802, %v834
    %v867 = vadd.f32 %v803, %v835
    %v868 = vadd.f32 %v804, %v836
    %v869 = vadd.f32 %v805, %v837
    %v870 = vadd.f32 %v806, %v838
    %v871 = vadd.f32 %v807, %v839
    %v872 = vadd.f32 %v808, %v840
    %v873 = vadd.f32 %v809, %v841
    %v874 = vadd.f32 %v810, %v842
    %v875 = vadd.f32 %v811, %v843
    %v876 = vadd.f32 %v812, %v844
    %v877 = vadd.f32 %v813, %v845
    %v878 = vadd.f32 %v814, %v846
    %v879 = vadd.f32 %v815, %v847
    %v880 = vadd.f32 %v816, %v848
    %v881 = vadd.f32 %v817, %v849
    %v882 = vadd.f32 %v818, %v850
    %v883 = vadd.f32 %v819, %v851
    %v884 = vadd.f32 %v820, %v852
    %v885 = vadd.f32 %v821, %v853
    %v886 = vadd.f32 %v822, %v854
    %v887 = vadd.f32 %v823, %v855
    %v888 = vadd.f32 %v824, %v856
    %v889 = vadd.f32 %v825, %v857
    %v890 = vadd.f32 %v826, %v858
    %v891 = vadd.f32 %v827, %v859
    %v892 = vadd.f32 %v828, %v860
    %v893 = vpack.c.bf16 %v862, %v861
    %v894 = vpack.c.bf16 %v864, %v863
    %v895 = vpack.c.bf16 %v866, %v865
    %v896 = vpack.c.bf16 %v868, %v867
    %v897 = vpack.c.bf16 %v870, %v869
    %v898 = vpack.c.bf16 %v872, %v871
    %v899 = vpack.c.bf16 %v874, %v873
    %v900 = vpack.c.bf16 %v876, %v875
    %v901 = vpack.c.bf16 %v878, %v877
    %v902 = vpack.c.bf16 %v880, %v879
    %v903 = vpack.c.bf16 %v882, %v881
    %v904 = vpack.c.bf16 %v884, %v883
    %v905 = vpack.c.bf16 %v886, %v885
    %v906 = vpack.c.bf16 %v888, %v887
    %v907 = vpack.c.bf16 %v890, %v889
    %v908 = vpack.c.bf16 %v892, %v891
    %v910 = vlaneseq
    %v911 = vshrl.u32 %v910, 7
    %v912 = vsub.s32 0, %v911
    %v913 = vrot.slane %v101, %v912
    %v914 = vlaneseq
    %v915 = vshrl.u32 %v914, 7
    %v916 = vsub.s32 1, %v915
    %v917 = vrot.slane %v101, %v916
    %920 = vmatprep.subr.bf16.mxu0 %v214
    %921 = vmatpush1.bf16.msra.mxu0 %v213
    %922 = vmatprep.subr.bf16.mxu0 %v216
    %923 = vmatpush1.bf16.msra.mxu0 %v215
    %924 = vmatprep.subr.bf16.mxu0 %v218
    %925 = vmatpush1.bf16.msra.mxu0 %v217
    %926 = vmatprep.subr.bf16.mxu0 %v220
    %927 = vmatpush1.bf16.msra.mxu0 %v219
    %928 = vmatprep.subr.bf16.mxu0 %v222
    %929 = vmatpush1.bf16.msra.mxu0 %v221
    %930 = vmatprep.subr.bf16.mxu0 %v224
    %931 = vmatpush1.bf16.msra.mxu0 %v223
    %932 = vmatprep.subr.bf16.mxu0 %v226
    %933 = vmatpush1.bf16.msra.mxu0 %v225
    %934 = vmatprep.subr.bf16.mxu0 %v228
    %935 = vmatpush1.bf16.msra.mxu0 %v227
    %936 = vmatprep.subr.bf16.mxu0 0
    %937 = vmatpush1.bf16.msra.mxu0 0
    %938 = vmatprep.subr.bf16.mxu0 0
    %939 = vmatpush1.bf16.msra.mxu0 0
    %940 = vmatprep.subr.bf16.mxu0 0
    %941 = vmatpush1.bf16.msra.mxu0 0
    %942 = vmatprep.subr.bf16.mxu0 0
    %943 = vmatpush1.bf16.msra.mxu0 0
    %944 = vmatprep.subr.bf16.mxu0 0
    %945 = vmatpush1.bf16.msra.mxu0 0
    %946 = vmatprep.subr.bf16.mxu0 0
    %947 = vmatpush1.bf16.msra.mxu0 0
    %948 = vmatprep.subr.bf16.mxu0 0
    %949 = vmatpush1.bf16.msra.mxu0 0
    %950 = vmatprep.subr.bf16.mxu0 0
    %951 = vmatpush1.bf16.msra.mxu0 0
    %952 = vmatprep.mubr.bf16.mxu0 0
    %953 = vmatmul.mubr.bf16.gmra.mrb[0].mxu0 %v893
    %v954 = vpop.f32.mrb[0].mxu0
    %v955 = vadd.f32 %v913, %v954
    %v956 = vpop.f32.mrb[0].mxu0
    %v957 = vadd.f32 %v917, %v956
    %v958 = vpop.f32.mrb[0].mxu0
    %v959 = vadd.f32 %v913, %v958
    %v960 = vpop.f32.mrb[0].mxu0
    %v961 = vadd.f32 %v917, %v960
    %962 = vmatprep.mubr.bf16.mxu0 0
    %963 = vmatmul.mubr.bf16.gmra.mrb[0].mxu0 %v894
    %v964 = vpop.f32.mrb[0].mxu0
    %v965 = vadd.f32 %v913, %v964
    %v966 = vpop.f32.mrb[0].mxu0
    %v967 = vadd.f32 %v917, %v966
    %v968 = vpop.f32.mrb[0].mxu0
    %v969 = vadd.f32 %v913, %v968
    %v970 = vpop.f32.mrb[0].mxu0
    %v971 = vadd.f32 %v917, %v970
    %972 = vmatprep.mubr.bf16.mxu0 0
    %973 = vmatmul.mubr.bf16.gmra.mrb[0].mxu0 %v895
    %v974 = vpop.f32.mrb[0].mxu0
    %v975 = vadd.f32 %v913, %v974
    %v976 = vpop.f32.mrb[0].mxu0
    %v977 = vadd.f32 %v917, %v976
    %v978 = vpop.f32.mrb[0].mxu0
    %v979 = vadd.f32 %v913, %v978
    %v980 = vpop.f32.mrb[0].mxu0
    %v981 = vadd.f32 %v917, %v980
    %982 = vmatprep.mubr.bf16.mxu0 0
    %983 = vmatmul.mubr.bf16.gmra.mrb[0].mxu0 %v896
    %v984 = vpop.f32.mrb[0].mxu0
    %v985 = vadd.f32 %v913, %v984
    %v986 = vpop.f32.mrb[0].mxu0
    %v987 = vadd.f32 %v917, %v986
    %v988 = vpop.f32.mrb[0].mxu0
    %v989 = vadd.f32 %v913, %v988
    %v990 = vpop.f32.mrb[0].mxu0
    %v991 = vadd.f32 %v917, %v990
    %992 = vmatprep.mubr.bf16.mxu0 0
    %993 = vmatmul.mubr.bf16.gmra.mrb[0].mxu0 %v897
    %v994 = vpop.f32.mrb[0].mxu0
    %v995 = vadd.f32 %v913, %v994
    %v996 = vpop.f32.mrb[0].mxu0
    %v997 = vadd.f32 %v917, %v996
    %v998 = vpop.f32.mrb[0].mxu0
    %v999 = vadd.f32 %v913, %v998
    %v1000 = vpop.f32.mrb[0].mxu0
    %v1001 = vadd.f32 %v917, %v1000
    %1002 = vmatprep.mubr.bf16.mxu0 0
    %1003 = vmatmul.mubr.bf16.gmra.mrb[0].mxu0 %v898
    %v1004 = vpop.f32.mrb[0].mxu0
    %v1005 = vadd.f32 %v913, %v1004
    %v1006 = vpop.f32.mrb[0].mxu0
    %v1007 = vadd.f32 %v917, %v1006
    %v1008 = vpop.f32.mrb[0].mxu0
    %v1009 = vadd.f32 %v913, %v1008
    %v1010 = vpop.f32.mrb[0].mxu0
    %v1011 = vadd.f32 %v917, %v1010
    %1012 = vmatprep.mubr.bf16.mxu0 0
    %1013 = vmatmul.mubr.bf16.gmra.mrb[0].mxu0 %v899
    %v1014 = vpop.f32.mrb[0].mxu0
    %v1015 = vadd.f32 %v913, %v1014
    %v1016 = vpop.f32.mrb[0].mxu0
    %v1017 = vadd.f32 %v917, %v1016
    %v1018 = vpop.f32.mrb[0].mxu0
    %v1019 = vadd.f32 %v913, %v1018
    %v1020 = vpop.f32.mrb[0].mxu0
    %v1021 = vadd.f32 %v917, %v1020
    %1022 = vmatprep.mubr.bf16.mxu0 0
    %1023 = vmatmul.mubr.bf16.gmra.mrb[0].mxu0 %v900
    %v1024 = vpop.f32.mrb[0].mxu0
    %v1025 = vadd.f32 %v913, %v1024
    %v1026 = vpop.f32.mrb[0].mxu0
    %v1027 = vadd.f32 %v917, %v1026
    %v1028 = vpop.f32.mrb[0].mxu0
    %v1029 = vadd.f32 %v913, %v1028
    %v1030 = vpop.f32.mrb[0].mxu0
    %v1031 = vadd.f32 %v917, %v1030
    %1032 = vmatprep.mubr.bf16.mxu0 0
    %1033 = vmatmul.mubr.bf16.gmra.mrb[0].mxu0 %v901
    %v1034 = vpop.f32.mrb[0].mxu0
    %v1035 = vadd.f32 %v913, %v1034
    %v1036 = vpop.f32.mrb[0].mxu0
    %v1037 = vadd.f32 %v917, %v1036
    %v1038 = vpop.f32.mrb[0].mxu0
    %v1039 = vadd.f32 %v913, %v1038
    %v1040 = vpop.f32.mrb[0].mxu0
    %v1041 = vadd.f32 %v917, %v1040
    %1042 = vmatprep.mubr.bf16.mxu0 0
    %1043 = vmatmul.mubr.bf16.gmra.mrb[0].mxu0 %v902
    %v1044 = vpop.f32.mrb[0].mxu0
    %v1045 = vadd.f32 %v913, %v1044
    %v1046 = vpop.f32.mrb[0].mxu0
    %v1047 = vadd.f32 %v917, %v1046
    %v1048 = vpop.f32.mrb[0].mxu0
    %v1049 = vadd.f32 %v913, %v1048
    %v1050 = vpop.f32.mrb[0].mxu0
    %v1051 = vadd.f32 %v917, %v1050
    %1052 = vmatprep.mubr.bf16.mxu0 0
    %1053 = vmatmul.mubr.bf16.gmra.mrb[0].mxu0 %v903
    %v1054 = vpop.f32.mrb[0].mxu0
    %v1055 = vadd.f32 %v913, %v1054
    %v1056 = vpop.f32.mrb[0].mxu0
    %v1057 = vadd.f32 %v917, %v1056
    %v1058 = vpop.f32.mrb[0].mxu0
    %v1059 = vadd.f32 %v913, %v1058
    %v1060 = vpop.f32.mrb[0].mxu0
    %v1061 = vadd.f32 %v917, %v1060
    %1062 = vmatprep.mubr.bf16.mxu0 0
    %1063 = vmatmul.mubr.bf16.gmra.mrb[0].mxu0 %v904
    %v1064 = vpop.f32.mrb[0].mxu0
    %v1065 = vadd.f32 %v913, %v1064
    %v1066 = vpop.f32.mrb[0].mxu0
    %v1067 = vadd.f32 %v917, %v1066
    %v1068 = vpop.f32.mrb[0].mxu0
    %v1069 = vadd.f32 %v913, %v1068
    %v1070 = vpop.f32.mrb[0].mxu0
    %v1071 = vadd.f32 %v917, %v1070
    %1072 = vmatprep.mubr.bf16.mxu0 0
    %1073 = vmatmul.mubr.bf16.gmra.mrb[0].mxu0 %v905
    %v1074 = vpop.f32.mrb[0].mxu0
    %v1075 = vadd.f32 %v913, %v1074
    %v1076 = vpop.f32.mrb[0].mxu0
    %v1077 = vadd.f32 %v917, %v1076
    %v1078 = vpop.f32.mrb[0].mxu0
    %v1079 = vadd.f32 %v913, %v1078
    %v1080 = vpop.f32.mrb[0].mxu0
    %v1081 = vadd.f32 %v917, %v1080
    %1082 = vmatprep.mubr.bf16.mxu0 0
    %1083 = vmatmul.mubr.bf16.gmra.mrb[0].mxu0 %v906
    %v1084 = vpop.f32.mrb[0].mxu0
    %v1085 = vadd.f32 %v913, %v1084
    %v1086 = vpop.f32.mrb[0].mxu0
    %v1087 = vadd.f32 %v917, %v1086
    %v1088 = vpop.f32.mrb[0].mxu0
    %v1089 = vadd.f32 %v913, %v1088
    %v1090 = vpop.f32.mrb[0].mxu0
    %v1091 = vadd.f32 %v917, %v1090
    %1092 = vmatprep.mubr.bf16.mxu0 0
    %1093 = vmatmul.mubr.bf16.gmra.mrb[0].mxu0 %v907
    %v1094 = vpop.f32.mrb[0].mxu0
    %v1095 = vadd.f32 %v913, %v1094
    %v1096 = vpop.f32.mrb[0].mxu0
    %v1097 = vadd.f32 %v917, %v1096
    %v1098 = vpop.f32.mrb[0].mxu0
    %v1099 = vadd.f32 %v913, %v1098
    %v1100 = vpop.f32.mrb[0].mxu0
    %v1101 = vadd.f32 %v917, %v1100
    %1102 = vmatprep.mubr.bf16.mxu0 0
    %1103 = vmatmul.mubr.bf16.gmra.mrb[0].mxu0 %v908
    %v1104 = vpop.f32.mrb[0].mxu0
    %v1105 = vadd.f32 %v913, %v1104
    %v1106 = vpop.f32.mrb[0].mxu0
    %v1107 = vadd.f32 %v917, %v1106
    %v1108 = vpop.f32.mrb[0].mxu0
    %v1109 = vadd.f32 %v913, %v1108
    %v1110 = vpop.f32.mrb[0].mxu0
    %v1111 = vadd.f32 %v917, %v1110
    %1112 = vdwg.mxu0
    %v1113 = vpack.c.bf16 %v959, %v955
    %v1114 = vpack.c.bf16 %v961, %v957
    %v1115 = vpack.c.bf16 %v969, %v965
    %v1116 = vpack.c.bf16 %v971, %v967
    %v1117 = vpack.c.bf16 %v979, %v975
    %v1118 = vpack.c.bf16 %v981, %v977
    %v1119 = vpack.c.bf16 %v989, %v985
    %v1120 = vpack.c.bf16 %v991, %v987
    %v1121 = vpack.c.bf16 %v999, %v995
    %v1122 = vpack.c.bf16 %v1001, %v997
    %v1123 = vpack.c.bf16 %v1009, %v1005
    %v1124 = vpack.c.bf16 %v1011, %v1007
    %v1125 = vpack.c.bf16 %v1019, %v1015
    %v1126 = vpack.c.bf16 %v1021, %v1017
    %v1127 = vpack.c.bf16 %v1029, %v1025
    %v1128 = vpack.c.bf16 %v1031, %v1027
    %v1129 = vpack.c.bf16 %v1039, %v1035
    %v1130 = vpack.c.bf16 %v1041, %v1037
    %v1131 = vpack.c.bf16 %v1049, %v1045
    %v1132 = vpack.c.bf16 %v1051, %v1047
    %v1133 = vpack.c.bf16 %v1059, %v1055
    %v1134 = vpack.c.bf16 %v1061, %v1057
    %v1135 = vpack.c.bf16 %v1069, %v1065
    %v1136 = vpack.c.bf16 %v1071, %v1067
    %v1137 = vpack.c.bf16 %v1079, %v1075
    %v1138 = vpack.c.bf16 %v1081, %v1077
    %v1139 = vpack.c.bf16 %v1089, %v1085
    %v1140 = vpack.c.bf16 %v1091, %v1087
    %v1141 = vpack.c.bf16 %v1099, %v1095
    %v1142 = vpack.c.bf16 %v1101, %v1097
    %v1143 = vpack.c.bf16 %v1109, %v1105
    %v1144 = vpack.c.bf16 %v1111, %v1107
    %v1145 = vtanh.bf16.pop %v1113
    %v1146 = vtanh.bf16.pop %v1114
    %v1147 = vtanh.bf16.pop %v1115
    %v1148 = vtanh.bf16.pop %v1116
    %v1149 = vtanh.bf16.pop %v1117
    %v1150 = vtanh.bf16.pop %v1118
    %v1151 = vtanh.bf16.pop %v1119
    %v1152 = vtanh.bf16.pop %v1120
    %v1153 = vtanh.bf16.pop %v1121
    %v1154 = vtanh.bf16.pop %v1122
    %v1155 = vtanh.bf16.pop %v1123
    %v1156 = vtanh.bf16.pop %v1124
    %v1157 = vtanh.bf16.pop %v1125
    %v1158 = vtanh.bf16.pop %v1126
    %v1159 = vtanh.bf16.pop %v1127
    %v1160 = vtanh.bf16.pop %v1128
    %v1161 = vtanh.bf16.pop %v1129
    %v1162 = vtanh.bf16.pop %v1130
    %v1163 = vtanh.bf16.pop %v1131
    %v1164 = vtanh.bf16.pop %v1132
    %v1165 = vtanh.bf16.pop %v1133
    %v1166 = vtanh.bf16.pop %v1134
    %v1167 = vtanh.bf16.pop %v1135
    %v1168 = vtanh.bf16.pop %v1136
    %v1169 = vtanh.bf16.pop %v1137
    %v1170 = vtanh.bf16.pop %v1138
    %v1171 = vtanh.bf16.pop %v1139
    %v1172 = vtanh.bf16.pop %v1140
    %v1173 = vtanh.bf16.pop %v1141
    %v1174 = vtanh.bf16.pop %v1142
    %v1175 = vtanh.bf16.pop %v1143
    %v1176 = vtanh.bf16.pop %v1144
    %1177 = vmatprep.subr.bf16.mxu0 0
    %1178 = vmatpush1.bf16.msra.mxu0 %v572
    %1179 = vmatprep.subr.bf16.mxu0 0
    %1180 = vmatpush1.bf16.msra.mxu0 %v573
    %1181 = vmatprep.subr.bf16.mxu0 0
    %1182 = vmatpush1.bf16.msra.mxu0 %v574
    %1183 = vmatprep.subr.bf16.mxu0 0
    %1184 = vmatpush1.bf16.msra.mxu0 %v575
    %1185 = vmatprep.subr.bf16.mxu0 0
    %1186 = vmatpush1.bf16.msra.mxu0 %v576
    %1187 = vmatprep.subr.bf16.mxu0 0
    %1188 = vmatpush1.bf16.msra.mxu0 %v577
    %1189 = vmatprep.subr.bf16.mxu0 0
    %1190 = vmatpush1.bf16.msra.mxu0 %v578
    %1191 = vmatprep.subr.bf16.mxu0 0
    %1192 = vmatpush1.bf16.msra.mxu0 %v579
    %1193 = vmatprep.subr.bf16.mxu0 0
    %1194 = vmatpush1.bf16.msra.mxu0 %v580
    %1195 = vmatprep.subr.bf16.mxu0 0
    %1196 = vmatpush1.bf16.msra.mxu0 %v581
    %1197 = vmatprep.subr.bf16.mxu0 0
    %1198 = vmatpush1.bf16.msra.mxu0 %v582
    %1199 = vmatprep.subr.bf16.mxu0 0
    %1200 = vmatpush1.bf16.msra.mxu0 %v583
    %1201 = vmatprep.subr.bf16.mxu0 0
    %1202 = vmatpush1.bf16.msra.mxu0 %v584
    %1203 = vmatprep.subr.bf16.mxu0 0
    %1204 = vmatpush1.bf16.msra.mxu0 %v585
    %1205 = vmatprep.subr.bf16.mxu0 0
    %1206 = vmatpush1.bf16.msra.mxu0 %v586
    %1207 = vmatprep.subr.bf16.mxu0 0
    %1208 = vmatpush1.bf16.msra.mxu0 %v587
    %1209 = vmatprep.mubr.bf16.mxu0 %v1146
    %1210 = vmatmul.mubr.bf16.gmra.mrb[0].mxu0 %v1145
    %v1211 = vpop.f32.mrb[0].mxu0
    %v1212 = vadd.f32 %v506, %v1211
    %v1213 = vpop.f32.mrb[0].mxu0
    %v1214 = vpop.f32.mrb[0].mxu0
    %v1215 = vadd.f32 %v506, %v1214
    %v1216 = vpop.f32.mrb[0].mxu0
    %1217 = vmatprep.mubr.bf16.mxu0 %v1148
    %1218 = vmatmul.mubr.bf16.gmra.mrb[0].mxu0 %v1147
    %v1219 = vpop.f32.mrb[0].mxu0
    %v1220 = vadd.f32 %v506, %v1219
    %v1221 = vpop.f32.mrb[0].mxu0
    %v1222 = vpop.f32.mrb[0].mxu0
    %v1223 = vadd.f32 %v506, %v1222
    %v1224 = vpop.f32.mrb[0].mxu0
    %1225 = vmatprep.mubr.bf16.mxu0 %v1150
    %1226 = vmatmul.mubr.bf16.gmra.mrb[0].mxu0 %v1149
    %v1227 = vpop.f32.mrb[0].mxu0
    %v1228 = vadd.f32 %v506, %v1227
    %v1229 = vpop.f32.mrb[0].mxu0
    %v1230 = vpop.f32.mrb[0].mxu0
    %v1231 = vadd.f32 %v506, %v1230
    %v1232 = vpop.f32.mrb[0].mxu0
    %1233 = vmatprep.mubr.bf16.mxu0 %v1152
    %1234 = vmatmul.mubr.bf16.gmra.mrb[0].mxu0 %v1151
    %v1235 = vpop.f32.mrb[0].mxu0
    %v1236 = vadd.f32 %v506, %v1235
    %v1237 = vpop.f32.mrb[0].mxu0
    %v1238 = vpop.f32.mrb[0].mxu0
    %v1239 = vadd.f32 %v506, %v1238
    %v1240 = vpop.f32.mrb[0].mxu0
    %1241 = vmatprep.mubr.bf16.mxu0 %v1154
    %1242 = vmatmul.mubr.bf16.gmra.mrb[0].mxu0 %v1153
    %v1243 = vpop.f32.mrb[0].mxu0
    %v1244 = vadd.f32 %v506, %v1243
    %v1245 = vpop.f32.mrb[0].mxu0
    %v1246 = vpop.f32.mrb[0].mxu0
    %v1247 = vadd.f32 %v506, %v1246
    %v1248 = vpop.f32.mrb[0].mxu0
    %1249 = vmatprep.mubr.bf16.mxu0 %v1156
    %1250 = vmatmul.mubr.bf16.gmra.mrb[0].mxu0 %v1155
    %v1251 = vpop.f32.mrb[0].mxu0
    %v1252 = vadd.f32 %v506, %v1251
    %v1253 = vpop.f32.mrb[0].mxu0
    %v1254 = vpop.f32.mrb[0].mxu0
    %v1255 = vadd.f32 %v506, %v1254
    %v1256 = vpop.f32.mrb[0].mxu0
    %1257 = vmatprep.mubr.bf16.mxu0 %v1158
    %1258 = vmatmul.mubr.bf16.gmra.mrb[0].mxu0 %v1157
    %v1259 = vpop.f32.mrb[0].mxu0
    %v1260 = vadd.f32 %v506, %v1259
    %v1261 = vpop.f32.mrb[0].mxu0
    %v1262 = vpop.f32.mrb[0].mxu0
    %v1263 = vadd.f32 %v506, %v1262
    %v1264 = vpop.f32.mrb[0].mxu0
    %1265 = vmatprep.mubr.bf16.mxu0 %v1160
    %1266 = vmatmul.mubr.bf16.gmra.mrb[0].mxu0 %v1159
    %v1267 = vpop.f32.mrb[0].mxu0
    %v1268 = vadd.f32 %v506, %v1267
    %v1269 = vpop.f32.mrb[0].mxu0
    %v1270 = vpop.f32.mrb[0].mxu0
    %v1271 = vadd.f32 %v506, %v1270
    %v1272 = vpop.f32.mrb[0].mxu0
    %1273 = vmatprep.mubr.bf16.mxu0 %v1162
    %1274 = vmatmul.mubr.bf16.gmra.mrb[0].mxu0 %v1161
    %v1275 = vpop.f32.mrb[0].mxu0
    %v1276 = vadd.f32 %v506, %v1275
    %v1277 = vpop.f32.mrb[0].mxu0
    %v1278 = vpop.f32.mrb[0].mxu0
    %v1279 = vadd.f32 %v506, %v1278
    %v1280 = vpop.f32.mrb[0].mxu0
    %1281 = vmatprep.mubr.bf16.mxu0 %v1164
    %1282 = vmatmul.mubr.bf16.gmra.mrb[0].mxu0 %v1163
    %v1283 = vpop.f32.mrb[0].mxu0
    %v1284 = vadd.f32 %v506, %v1283
    %v1285 = vpop.f32.mrb[0].mxu0
    %v1286 = vpop.f32.mrb[0].mxu0
    %v1287 = vadd.f32 %v506, %v1286
    %v1288 = vpop.f32.mrb[0].mxu0
    %1289 = vmatprep.mubr.bf16.mxu0 %v1166
    %1290 = vmatmul.mubr.bf16.gmra.mrb[0].mxu0 %v1165
    %v1291 = vpop.f32.mrb[0].mxu0
    %v1292 = vadd.f32 %v506, %v1291
    %v1293 = vpop.f32.mrb[0].mxu0
    %v1294 = vpop.f32.mrb[0].mxu0
    %v1295 = vadd.f32 %v506, %v1294
    %v1296 = vpop.f32.mrb[0].mxu0
    %1297 = vmatprep.mubr.bf16.mxu0 %v1168
    %1298 = vmatmul.mubr.bf16.gmra.mrb[0].mxu0 %v1167
    %v1299 = vpop.f32.mrb[0].mxu0
    %v1300 = vadd.f32 %v506, %v1299
    %v1301 = vpop.f32.mrb[0].mxu0
    %v1302 = vpop.f32.mrb[0].mxu0
    %v1303 = vadd.f32 %v506, %v1302
    %v1304 = vpop.f32.mrb[0].mxu0
    %1305 = vmatprep.mubr.bf16.mxu0 %v1170
    %1306 = vmatmul.mubr.bf16.gmra.mrb[0].mxu0 %v1169
    %v1307 = vpop.f32.mrb[0].mxu0
    %v1308 = vadd.f32 %v506, %v1307
    %v1309 = vpop.f32.mrb[0].mxu0
    %v1310 = vpop.f32.mrb[0].mxu0
    %v1311 = vadd.f32 %v506, %v1310
    %v1312 = vpop.f32.mrb[0].mxu0
    %1313 = vmatprep.mubr.bf16.mxu0 %v1172
    %1314 = vmatmul.mubr.bf16.gmra.mrb[0].mxu0 %v1171
    %v1315 = vpop.f32.mrb[0].mxu0
    %v1316 = vadd.f32 %v506, %v1315
    %v1317 = vpop.f32.mrb[0].mxu0
    %v1318 = vpop.f32.mrb[0].mxu0
    %v1319 = vadd.f32 %v506, %v1318
    %v1320 = vpop.f32.mrb[0].mxu0
    %1321 = vmatprep.mubr.bf16.mxu0 %v1174
    %1322 = vmatmul.mubr.bf16.gmra.mrb[0].mxu0 %v1173
    %v1323 = vpop.f32.mrb[0].mxu0
    %v1324 = vadd.f32 %v506, %v1323
    %v1325 = vpop.f32.mrb[0].mxu0
    %v1326 = vpop.f32.mrb[0].mxu0
    %v1327 = vadd.f32 %v506, %v1326
    %v1328 = vpop.f32.mrb[0].mxu0
    %1329 = vmatprep.mubr.bf16.mxu0 %v1176
    %1330 = vmatmul.mubr.bf16.gmra.mrb[0].mxu0 %v1175
    %v1331 = vpop.f32.mrb[0].mxu0
    %v1332 = vadd.f32 %v506, %v1331
    %v1333 = vpop.f32.mrb[0].mxu0
    %v1334 = vpop.f32.mrb[0].mxu0
    %v1335 = vadd.f32 %v506, %v1334
    %v1336 = vpop.f32.mrb[0].mxu0
    %1337 = vdwg.mxu0
    %v1338 = vld [vmem:[#allocation6] sm:$0xff]
    %v1339 = vld [vmem:[#allocation6 + $0x8] sm:$0xff]
    %v1340 = vld [vmem:[#allocation6 + $0x10] sm:$0xff]
    %v1341 = vld [vmem:[#allocation6 + $0x18] sm:$0xff]
    %v1342 = vld [vmem:[#allocation6 + $0x20] sm:$0xff]
    %v1343 = vld [vmem:[#allocation6 + $0x28] sm:$0xff]
    %v1344 = vld [vmem:[#allocation6 + $0x30] sm:$0xff]
    %v1345 = vld [vmem:[#allocation6 + $0x38] sm:$0xff]
    %v1346 = vld [vmem:[#allocation6 + $0x40] sm:$0xff]
    %v1347 = vld [vmem:[#allocation6 + $0x48] sm:$0xff]
    %v1348 = vld [vmem:[#allocation6 + $0x50] sm:$0xff]
    %v1349 = vld [vmem:[#allocation6 + $0x58] sm:$0xff]
    %v1350 = vld [vmem:[#allocation6 + $0x60] sm:$0xff]
    %v1351 = vld [vmem:[#allocation6 + $0x68] sm:$0xff]
    %v1352 = vld [vmem:[#allocation6 + $0x70] sm:$0xff]
    %v1353 = vld [vmem:[#allocation6 + $0x78] sm:$0xff]
    %v1354 = vld [vmem:[#allocation6 + $0x80] sm:$0xff]
    %v1355 = vld [vmem:[#allocation6 + $0x88] sm:$0xff]
    %v1356 = vld [vmem:[#allocation6 + $0x90] sm:$0xff]
    %v1357 = vld [vmem:[#allocation6 + $0x98] sm:$0xff]
    %v1358 = vld [vmem:[#allocation6 + $0xa0] sm:$0xff]
    %v1359 = vld [vmem:[#allocation6 + $0xa8] sm:$0xff]
    %v1360 = vld [vmem:[#allocation6 + $0xb0] sm:$0xff]
    %v1361 = vld [vmem:[#allocation6 + $0xb8] sm:$0xff]
    %v1362 = vld [vmem:[#allocation6 + $0xc0] sm:$0xff]
    %v1363 = vld [vmem:[#allocation6 + $0xc8] sm:$0xff]
    %v1364 = vld [vmem:[#allocation6 + $0xd0] sm:$0xff]
    %v1365 = vld [vmem:[#allocation6 + $0xd8] sm:$0xff]
    %v1366 = vld [vmem:[#allocation6 + $0xe0] sm:$0xff]
    %v1367 = vld [vmem:[#allocation6 + $0xe8] sm:$0xff]
    %v1368 = vld [vmem:[#allocation6 + $0xf0] sm:$0xff]
    %v1369 = vld [vmem:[#allocation6 + $0xf8] sm:$0xff]
    %v1370 = vmul.f32 %v1212, 2.0
    %v1371 = vmul.f32 %v1215, 2.0
    %v1372 = vmul.f32 %v1220, 2.0
    %v1373 = vmul.f32 %v1223, 2.0
    %v1374 = vmul.f32 %v1228, 2.0
    %v1375 = vmul.f32 %v1231, 2.0
    %v1376 = vmul.f32 %v1236, 2.0
    %v1377 = vmul.f32 %v1239, 2.0
    %v1378 = vmul.f32 %v1244, 2.0
    %v1379 = vmul.f32 %v1247, 2.0
    %v1380 = vmul.f32 %v1252, 2.0
    %v1381 = vmul.f32 %v1255, 2.0
    %v1382 = vmul.f32 %v1260, 2.0
    %v1383 = vmul.f32 %v1263, 2.0
    %v1384 = vmul.f32 %v1268, 2.0
    %v1385 = vmul.f32 %v1271, 2.0
    %v1386 = vmul.f32 %v1276, 2.0
    %v1387 = vmul.f32 %v1279, 2.0
    %v1388 = vmul.f32 %v1284, 2.0
    %v1389 = vmul.f32 %v1287, 2.0
    %v1390 = vmul.f32 %v1292, 2.0
    %v1391 = vmul.f32 %v1295, 2.0
    %v1392 = vmul.f32 %v1300, 2.0
    %v1393 = vmul.f32 %v1303, 2.0
    %v1394 = vmul.f32 %v1308, 2.0
    %v1395 = vmul.f32 %v1311, 2.0
    %v1396 = vmul.f32 %v1316, 2.0
    %v1397 = vmul.f32 %v1319, 2.0
    %v1398 = vmul.f32 %v1324, 2.0
    %v1399 = vmul.f32 %v1327, 2.0
    %v1400 = vmul.f32 %v1332, 2.0
    %v1401 = vmul.f32 %v1335, 2.0
    %v1402 = vadd.f32 %v1338, %v1370
    %v1403 = vadd.f32 %v1339, %v1371
    %v1404 = vadd.f32 %v1340, %v1372
    %v1405 = vadd.f32 %v1341, %v1373
    %v1406 = vadd.f32 %v1342, %v1374
    %v1407 = vadd.f32 %v1343, %v1375
    %v1408 = vadd.f32 %v1344, %v1376
    %v1409 = vadd.f32 %v1345, %v1377
    %v1410 = vadd.f32 %v1346, %v1378
    %v1411 = vadd.f32 %v1347, %v1379
    %v1412 = vadd.f32 %v1348, %v1380
    %v1413 = vadd.f32 %v1349, %v1381
    %v1414 = vadd.f32 %v1350, %v1382
    %v1415 = vadd.f32 %v1351, %v1383
    %v1416 = vadd.f32 %v1352, %v1384
    %v1417 = vadd.f32 %v1353, %v1385
    %v1418 = vadd.f32 %v1354, %v1386
    %v1419 = vadd.f32 %v1355, %v1387
    %v1420 = vadd.f32 %v1356, %v1388
    %v1421 = vadd.f32 %v1357, %v1389
    %v1422 = vadd.f32 %v1358, %v1390
    %v1423 = vadd.f32 %v1359, %v1391
    %v1424 = vadd.f32 %v1360, %v1392
    %v1425 = vadd.f32 %v1361, %v1393
    %v1426 = vadd.f32 %v1362, %v1394
    %v1427 = vadd.f32 %v1363, %v1395
    %v1428 = vadd.f32 %v1364, %v1396
    %v1429 = vadd.f32 %v1365, %v1397
    %v1430 = vadd.f32 %v1366, %v1398
    %v1431 = vadd.f32 %v1367, %v1399
    %v1432 = vadd.f32 %v1368, %v1400
    %v1433 = vadd.f32 %v1369, %v1401
    %1434 = vst [vmem:[#allocation6] sm:$0xff] %v1402
    %1435 = vst [vmem:[#allocation6 + $0x8] sm:$0xff] %v1403
    %1436 = vst [vmem:[#allocation6 + $0x10] sm:$0xff] %v1404
    %1437 = vst [vmem:[#allocation6 + $0x18] sm:$0xff] %v1405
    %1438 = vst [vmem:[#allocation6 + $0x20] sm:$0xff] %v1406
    %1439 = vst [vmem:[#allocation6 + $0x28] sm:$0xff] %v1407
    %1440 = vst [vmem:[#allocation6 + $0x30] sm:$0xff] %v1408
    %1441 = vst [vmem:[#allocation6 + $0x38] sm:$0xff] %v1409
    %1442 = vst [vmem:[#allocation6 + $0x40] sm:$0xff] %v1410
    %1443 = vst [vmem:[#allocation6 + $0x48] sm:$0xff] %v1411
    %1444 = vst [vmem:[#allocation6 + $0x50] sm:$0xff] %v1412
    %1445 = vst [vmem:[#allocation6 + $0x58] sm:$0xff] %v1413
    %1446 = vst [vmem:[#allocation6 + $0x60] sm:$0xff] %v1414
    %1447 = vst [vmem:[#allocation6 + $0x68] sm:$0xff] %v1415
    %1448 = vst [vmem:[#allocation6 + $0x70] sm:$0xff] %v1416
    %1449 = vst [vmem:[#allocation6 + $0x78] sm:$0xff] %v1417
    %1450 = vst [vmem:[#allocation6 + $0x80] sm:$0xff] %v1418
    %1451 = vst [vmem:[#allocation6 + $0x88] sm:$0xff] %v1419
    %1452 = vst [vmem:[#allocation6 + $0x90] sm:$0xff] %v1420
    %1453 = vst [vmem:[#allocation6 + $0x98] sm:$0xff] %v1421
    %1454 = vst [vmem:[#allocation6 + $0xa0] sm:$0xff] %v1422
    %1455 = vst [vmem:[#allocation6 + $0xa8] sm:$0xff] %v1423
    %1456 = vst [vmem:[#allocation6 + $0xb0] sm:$0xff] %v1424
    %1457 = vst [vmem:[#allocation6 + $0xb8] sm:$0xff] %v1425
    %1458 = vst [vmem:[#allocation6 + $0xc0] sm:$0xff] %v1426
    %1459 = vst [vmem:[#allocation6 + $0xc8] sm:$0xff] %v1427
    %1460 = vst [vmem:[#allocation6 + $0xd0] sm:$0xff] %v1428
    %1461 = vst [vmem:[#allocation6 + $0xd8] sm:$0xff] %v1429
    %1462 = vst [vmem:[#allocation6 + $0xe0] sm:$0xff] %v1430
    %1463 = vst [vmem:[#allocation6 + $0xe8] sm:$0xff] %v1431
    %1464 = vst [vmem:[#allocation6 + $0xf0] sm:$0xff] %v1432
    %1465 = vst [vmem:[#allocation6 + $0xf8] sm:$0xff] %v1433
    %v1466 = vld [vmem:[#allocation3] sm:$0xff]
    %v1467 = vld [vmem:[#allocation3 + $0x8] sm:$0xff]
    %v1468 = vld [vmem:[#allocation3 + $0x10] sm:$0xff]
    %v1469 = vld [vmem:[#allocation3 + $0x18] sm:$0xff]
    %v1470 = vld [vmem:[#allocation3 + $0x20] sm:$0xff]
    %v1471 = vld [vmem:[#allocation3 + $0x28] sm:$0xff]
    %v1472 = vld [vmem:[#allocation3 + $0x30] sm:$0xff]
    %v1473 = vld [vmem:[#allocation3 + $0x38] sm:$0xff]
    %v1474 = vld [vmem:[#allocation3 + $0x40] sm:$0xff]
    %v1475 = vld [vmem:[#allocation3 + $0x48] sm:$0xff]
    %v1476 = vld [vmem:[#allocation3 + $0x50] sm:$0xff]
    %v1477 = vld [vmem:[#allocation3 + $0x58] sm:$0xff]
    %v1478 = vld [vmem:[#allocation3 + $0x60] sm:$0xff]
    %v1479 = vld [vmem:[#allocation3 + $0x68] sm:$0xff]
    %v1480 = vld [vmem:[#allocation3 + $0x70] sm:$0xff]
    %v1481 = vld [vmem:[#allocation3 + $0x78] sm:$0xff]
    %v1482 = vld [vmem:[#allocation3 + $0x80] sm:$0xff]
    %v1483 = vld [vmem:[#allocation3 + $0x88] sm:$0xff]
    %v1484 = vld [vmem:[#allocation3 + $0x90] sm:$0xff]
    %v1485 = vld [vmem:[#allocation3 + $0x98] sm:$0xff]
    %v1486 = vld [vmem:[#allocation3 + $0xa0] sm:$0xff]
    %v1487 = vld [vmem:[#allocation3 + $0xa8] sm:$0xff]
    %v1488 = vld [vmem:[#allocation3 + $0xb0] sm:$0xff]
    %v1489 = vld [vmem:[#allocation3 + $0xb8] sm:$0xff]
    %v1490 = vld [vmem:[#allocation3 + $0xc0] sm:$0xff]
    %v1491 = vld [vmem:[#allocation3 + $0xc8] sm:$0xff]
    %v1492 = vld [vmem:[#allocation3 + $0xd0] sm:$0xff]
    %v1493 = vld [vmem:[#allocation3 + $0xd8] sm:$0xff]
    %v1494 = vld [vmem:[#allocation3 + $0xe0] sm:$0xff]
    %v1495 = vld [vmem:[#allocation3 + $0xe8] sm:$0xff]
    %v1496 = vld [vmem:[#allocation3 + $0xf0] sm:$0xff]
    %v1497 = vld [vmem:[#allocation3 + $0xf8] sm:$0xff]
    %v1498 = vmul.f32 %v1212, 0.05
    %v1499 = vmul.f32 %v1215, 0.05
    %v1500 = vmul.f32 %v1220, 0.05
    %v1501 = vmul.f32 %v1223, 0.05
    %v1502 = vmul.f32 %v1228, 0.05
    %v1503 = vmul.f32 %v1231, 0.05
    %v1504 = vmul.f32 %v1236, 0.05
    %v1505 = vmul.f32 %v1239, 0.05
    %v1506 = vmul.f32 %v1244, 0.05
    %v1507 = vmul.f32 %v1247, 0.05
    %v1508 = vmul.f32 %v1252, 0.05
    %v1509 = vmul.f32 %v1255, 0.05
    %v1510 = vmul.f32 %v1260, 0.05
    %v1511 = vmul.f32 %v1263, 0.05
    %v1512 = vmul.f32 %v1268, 0.05
    %v1513 = vmul.f32 %v1271, 0.05
    %v1514 = vmul.f32 %v1276, 0.05
    %v1515 = vmul.f32 %v1279, 0.05
    %v1516 = vmul.f32 %v1284, 0.05
    %v1517 = vmul.f32 %v1287, 0.05
    %v1518 = vmul.f32 %v1292, 0.05
    %v1519 = vmul.f32 %v1295, 0.05
    %v1520 = vmul.f32 %v1300, 0.05
    %v1521 = vmul.f32 %v1303, 0.05
    %v1522 = vmul.f32 %v1308, 0.05
    %v1523 = vmul.f32 %v1311, 0.05
    %v1524 = vmul.f32 %v1316, 0.05
    %v1525 = vmul.f32 %v1319, 0.05
    %v1526 = vmul.f32 %v1324, 0.05
    %v1527 = vmul.f32 %v1327, 0.05
    %v1528 = vmul.f32 %v1332, 0.05
    %v1529 = vmul.f32 %v1335, 0.05
    %v1530 = vadd.f32 %v1466, %v1498
    %v1531 = vadd.f32 %v1467, %v1499
    %v1532 = vadd.f32 %v1468, %v1500
    %v1533 = vadd.f32 %v1469, %v1501
    %v1534 = vadd.f32 %v1470, %v1502
    %v1535 = vadd.f32 %v1471, %v1503
    %v1536 = vadd.f32 %v1472, %v1504
    %v1537 = vadd.f32 %v1473, %v1505
    %v1538 = vadd.f32 %v1474, %v1506
    %v1539 = vadd.f32 %v1475, %v1507
    %v1540 = vadd.f32 %v1476, %v1508
    %v1541 = vadd.f32 %v1477, %v1509
    %v1542 = vadd.f32 %v1478, %v1510
    %v1543 = vadd.f32 %v1479, %v1511
    %v1544 = vadd.f32 %v1480, %v1512
    %v1545 = vadd.f32 %v1481, %v1513
    %v1546 = vadd.f32 %v1482, %v1514
    %v1547 = vadd.f32 %v1483, %v1515
    %v1548 = vadd.f32 %v1484, %v1516
    %v1549 = vadd.f32 %v1485, %v1517
    %v1550 = vadd.f32 %v1486, %v1518
    %v1551 = vadd.f32 %v1487, %v1519
    %v1552 = vadd.f32 %v1488, %v1520
    %v1553 = vadd.f32 %v1489, %v1521
    %v1554 = vadd.f32 %v1490, %v1522
    %v1555 = vadd.f32 %v1491, %v1523
    %v1556 = vadd.f32 %v1492, %v1524
    %v1557 = vadd.f32 %v1493, %v1525
    %v1558 = vadd.f32 %v1494, %v1526
    %v1559 = vadd.f32 %v1495, %v1527
    %v1560 = vadd.f32 %v1496, %v1528
    %v1561 = vadd.f32 %v1497, %v1529
    %v1562 = vpack.c.bf16 %v1531, %v1530
    %v1563 = vpack.c.bf16 %v1533, %v1532
    %v1564 = vpack.c.bf16 %v1535, %v1534
    %v1565 = vpack.c.bf16 %v1537, %v1536
    %v1566 = vpack.c.bf16 %v1539, %v1538
    %v1567 = vpack.c.bf16 %v1541, %v1540
    %v1568 = vpack.c.bf16 %v1543, %v1542
    %v1569 = vpack.c.bf16 %v1545, %v1544
    %v1570 = vpack.c.bf16 %v1547, %v1546
    %v1571 = vpack.c.bf16 %v1549, %v1548
    %v1572 = vpack.c.bf16 %v1551, %v1550
    %v1573 = vpack.c.bf16 %v1553, %v1552
    %v1574 = vpack.c.bf16 %v1555, %v1554
    %v1575 = vpack.c.bf16 %v1557, %v1556
    %v1576 = vpack.c.bf16 %v1559, %v1558
    %v1577 = vpack.c.bf16 %v1561, %v1560
    %1578 = vmatprep.subr.bf16.mxu0 %v214
    %1579 = vmatpush1.bf16.msra.mxu0 %v213
    %1580 = vmatprep.subr.bf16.mxu0 %v216
    %1581 = vmatpush1.bf16.msra.mxu0 %v215
    %1582 = vmatprep.subr.bf16.mxu0 %v218
    %1583 = vmatpush1.bf16.msra.mxu0 %v217
    %1584 = vmatprep.subr.bf16.mxu0 %v220
    %1585 = vmatpush1.bf16.msra.mxu0 %v219
    %1586 = vmatprep.subr.bf16.mxu0 %v222
    %1587 = vmatpush1.bf16.msra.mxu0 %v221
    %1588 = vmatprep.subr.bf16.mxu0 %v224
    %1589 = vmatpush1.bf16.msra.mxu0 %v223
    %1590 = vmatprep.subr.bf16.mxu0 %v226
    %1591 = vmatpush1.bf16.msra.mxu0 %v225
    %1592 = vmatprep.subr.bf16.mxu0 %v228
    %1593 = vmatpush1.bf16.msra.mxu0 %v227
    %1594 = vmatprep.subr.bf16.mxu0 0
    %1595 = vmatpush1.bf16.msra.mxu0 0
    %1596 = vmatprep.subr.bf16.mxu0 0
    %1597 = vmatpush1.bf16.msra.mxu0 0
    %1598 = vmatprep.subr.bf16.mxu0 0
    %1599 = vmatpush1.bf16.msra.mxu0 0
    %1600 = vmatprep.subr.bf16.mxu0 0
    %1601 = vmatpush1.bf16.msra.mxu0 0
    %1602 = vmatprep.subr.bf16.mxu0 0
    %1603 = vmatpush1.bf16.msra.mxu0 0
    %1604 = vmatprep.subr.bf16.mxu0 0
    %1605 = vmatpush1.bf16.msra.mxu0 0
    %1606 = vmatprep.subr.bf16.mxu0 0
    %1607 = vmatpush1.bf16.msra.mxu0 0
    %1608 = vmatprep.subr.bf16.mxu0 0
    %1609 = vmatpush1.bf16.msra.mxu0 0
    %1610 = vmatprep.mubr.bf16.mxu0 0
    %1611 = vmatmul.mubr.bf16.gmra.mrb[0].mxu0 %v1562
    %v1612 = vpop.f32.mrb[0].mxu0
    %v1613 = vadd.f32 %v913, %v1612
    %v1614 = vpop.f32.mrb[0].mxu0
    %v1615 = vadd.f32 %v917, %v1614
    %v1616 = vpop.f32.mrb[0].mxu0
    %v1617 = vadd.f32 %v913, %v1616
    %v1618 = vpop.f32.mrb[0].mxu0
    %v1619 = vadd.f32 %v917, %v1618
    %1620 = vmatprep.mubr.bf16.mxu0 0
    %1621 = vmatmul.mubr.bf16.gmra.mrb[0].mxu0 %v1563
    %v1622 = vpop.f32.mrb[0].mxu0
    %v1623 = vadd.f32 %v913, %v1622
    %v1624 = vpop.f32.mrb[0].mxu0
    %v1625 = vadd.f32 %v917, %v1624
    %v1626 = vpop.f32.mrb[0].mxu0
    %v1627 = vadd.f32 %v913, %v1626
    %v1628 = vpop.f32.mrb[0].mxu0
    %v1629 = vadd.f32 %v917, %v1628
    %1630 = vmatprep.mubr.bf16.mxu0 0
    %1631 = vmatmul.mubr.bf16.gmra.mrb[0].mxu0 %v1564
    %v1632 = vpop.f32.mrb[0].mxu0
    %v1633 = vadd.f32 %v913, %v1632
    %v1634 = vpop.f32.mrb[0].mxu0
    %v1635 = vadd.f32 %v917, %v1634
    %v1636 = vpop.f32.mrb[0].mxu0
    %v1637 = vadd.f32 %v913, %v1636
    %v1638 = vpop.f32.mrb[0].mxu0
    %v1639 = vadd.f32 %v917, %v1638
    %1640 = vmatprep.mubr.bf16.mxu0 0
    %1641 = vmatmul.mubr.bf16.gmra.mrb[0].mxu0 %v1565
    %v1642 = vpop.f32.mrb[0].mxu0
    %v1643 = vadd.f32 %v913, %v1642
    %v1644 = vpop.f32.mrb[0].mxu0
    %v1645 = vadd.f32 %v917, %v1644
    %v1646 = vpop.f32.mrb[0].mxu0
    %v1647 = vadd.f32 %v913, %v1646
    %v1648 = vpop.f32.mrb[0].mxu0
    %v1649 = vadd.f32 %v917, %v1648
    %1650 = vmatprep.mubr.bf16.mxu0 0
    %1651 = vmatmul.mubr.bf16.gmra.mrb[0].mxu0 %v1566
    %v1652 = vpop.f32.mrb[0].mxu0
    %v1653 = vadd.f32 %v913, %v1652
    %v1654 = vpop.f32.mrb[0].mxu0
    %v1655 = vadd.f32 %v917, %v1654
    %v1656 = vpop.f32.mrb[0].mxu0
    %v1657 = vadd.f32 %v913, %v1656
    %v1658 = vpop.f32.mrb[0].mxu0
    %v1659 = vadd.f32 %v917, %v1658
    %1660 = vmatprep.mubr.bf16.mxu0 0
    %1661 = vmatmul.mubr.bf16.gmra.mrb[0].mxu0 %v1567
    %v1662 = vpop.f32.mrb[0].mxu0
    %v1663 = vadd.f32 %v913, %v1662
    %v1664 = vpop.f32.mrb[0].mxu0
    %v1665 = vadd.f32 %v917, %v1664
    %v1666 = vpop.f32.mrb[0].mxu0
    %v1667 = vadd.f32 %v913, %v1666
    %v1668 = vpop.f32.mrb[0].mxu0
    %v1669 = vadd.f32 %v917, %v1668
    %1670 = vmatprep.mubr.bf16.mxu0 0
    %1671 = vmatmul.mubr.bf16.gmra.mrb[0].mxu0 %v1568
    %v1672 = vpop.f32.mrb[0].mxu0
    %v1673 = vadd.f32 %v913, %v1672
    %v1674 = vpop.f32.mrb[0].mxu0
    %v1675 = vadd.f32 %v917, %v1674
    %v1676 = vpop.f32.mrb[0].mxu0
    %v1677 = vadd.f32 %v913, %v1676
    %v1678 = vpop.f32.mrb[0].mxu0
    %v1679 = vadd.f32 %v917, %v1678
    %1680 = vmatprep.mubr.bf16.mxu0 0
    %1681 = vmatmul.mubr.bf16.gmra.mrb[0].mxu0 %v1569
    %v1682 = vpop.f32.mrb[0].mxu0
    %v1683 = vadd.f32 %v913, %v1682
    %v1684 = vpop.f32.mrb[0].mxu0
    %v1685 = vadd.f32 %v917, %v1684
    %v1686 = vpop.f32.mrb[0].mxu0
    %v1687 = vadd.f32 %v913, %v1686
    %v1688 = vpop.f32.mrb[0].mxu0
    %v1689 = vadd.f32 %v917, %v1688
    %1690 = vmatprep.mubr.bf16.mxu0 0
    %1691 = vmatmul.mubr.bf16.gmra.mrb[0].mxu0 %v1570
    %v1692 = vpop.f32.mrb[0].mxu0
    %v1693 = vadd.f32 %v913, %v1692
    %v1694 = vpop.f32.mrb[0].mxu0
    %v1695 = vadd.f32 %v917, %v1694
    %v1696 = vpop.f32.mrb[0].mxu0
    %v1697 = vadd.f32 %v913, %v1696
    %v1698 = vpop.f32.mrb[0].mxu0
    %v1699 = vadd.f32 %v917, %v1698
    %1700 = vmatprep.mubr.bf16.mxu0 0
    %1701 = vmatmul.mubr.bf16.gmra.mrb[0].mxu0 %v1571
    %v1702 = vpop.f32.mrb[0].mxu0
    %v1703 = vadd.f32 %v913, %v1702
    %v1704 = vpop.f32.mrb[0].mxu0
    %v1705 = vadd.f32 %v917, %v1704
    %v1706 = vpop.f32.mrb[0].mxu0
    %v1707 = vadd.f32 %v913, %v1706
    %v1708 = vpop.f32.mrb[0].mxu0
    %v1709 = vadd.f32 %v917, %v1708
    %1710 = vmatprep.mubr.bf16.mxu0 0
    %1711 = vmatmul.mubr.bf16.gmra.mrb[0].mxu0 %v1572
    %v1712 = vpop.f32.mrb[0].mxu0
    %v1713 = vadd.f32 %v913, %v1712
    %v1714 = vpop.f32.mrb[0].mxu0
    %v1715 = vadd.f32 %v917, %v1714
    %v1716 = vpop.f32.mrb[0].mxu0
    %v1717 = vadd.f32 %v913, %v1716
    %v1718 = vpop.f32.mrb[0].mxu0
    %v1719 = vadd.f32 %v917, %v1718
    %1720 = vmatprep.mubr.bf16.mxu0 0
    %1721 = vmatmul.mubr.bf16.gmra.mrb[0].mxu0 %v1573
    %v1722 = vpop.f32.mrb[0].mxu0
    %v1723 = vadd.f32 %v913, %v1722
    %v1724 = vpop.f32.mrb[0].mxu0
    %v1725 = vadd.f32 %v917, %v1724
    %v1726 = vpop.f32.mrb[0].mxu0
    %v1727 = vadd.f32 %v913, %v1726
    %v1728 = vpop.f32.mrb[0].mxu0
    %v1729 = vadd.f32 %v917, %v1728
    %1730 = vmatprep.mubr.bf16.mxu0 0
    %1731 = vmatmul.mubr.bf16.gmra.mrb[0].mxu0 %v1574
    %v1732 = vpop.f32.mrb[0].mxu0
    %v1733 = vadd.f32 %v913, %v1732
    %v1734 = vpop.f32.mrb[0].mxu0
    %v1735 = vadd.f32 %v917, %v1734
    %v1736 = vpop.f32.mrb[0].mxu0
    %v1737 = vadd.f32 %v913, %v1736
    %v1738 = vpop.f32.mrb[0].mxu0
    %v1739 = vadd.f32 %v917, %v1738
    %1740 = vmatprep.mubr.bf16.mxu0 0
    %1741 = vmatmul.mubr.bf16.gmra.mrb[0].mxu0 %v1575
    %v1742 = vpop.f32.mrb[0].mxu0
    %v1743 = vadd.f32 %v913, %v1742
    %v1744 = vpop.f32.mrb[0].mxu0
    %v1745 = vadd.f32 %v917, %v1744
    %v1746 = vpop.f32.mrb[0].mxu0
    %v1747 = vadd.f32 %v913, %v1746
    %v1748 = vpop.f32.mrb[0].mxu0
    %v1749 = vadd.f32 %v917, %v1748
    %1750 = vmatprep.mubr.bf16.mxu0 0
    %1751 = vmatmul.mubr.bf16.gmra.mrb[0].mxu0 %v1576
    %v1752 = vpop.f32.mrb[0].mxu0
    %v1753 = vadd.f32 %v913, %v1752
    %v1754 = vpop.f32.mrb[0].mxu0
    %v1755 = vadd.f32 %v917, %v1754
    %v1756 = vpop.f32.mrb[0].mxu0
    %v1757 = vadd.f32 %v913, %v1756
    %v1758 = vpop.f32.mrb[0].mxu0
    %v1759 = vadd.f32 %v917, %v1758
    %1760 = vmatprep.mubr.bf16.mxu0 0
    %1761 = vmatmul.mubr.bf16.gmra.mrb[0].mxu0 %v1577
    %v1762 = vpop.f32.mrb[0].mxu0
    %v1763 = vadd.f32 %v913, %v1762
    %v1764 = vpop.f32.mrb[0].mxu0
    %v1765 = vadd.f32 %v917, %v1764
    %v1766 = vpop.f32.mrb[0].mxu0
    %v1767 = vadd.f32 %v913, %v1766
    %v1768 = vpop.f32.mrb[0].mxu0
    %v1769 = vadd.f32 %v917, %v1768
    %1770 = vdwg.mxu0
    %v1771 = vpack.c.bf16 %v1617, %v1613
    %v1772 = vpack.c.bf16 %v1619, %v1615
    %v1773 = vpack.c.bf16 %v1627, %v1623
    %v1774 = vpack.c.bf16 %v1629, %v1625
    %v1775 = vpack.c.bf16 %v1637, %v1633
    %v1776 = vpack.c.bf16 %v1639, %v1635
    %v1777 = vpack.c.bf16 %v1647, %v1643
    %v1778 = vpack.c.bf16 %v1649, %v1645
    %v1779 = vpack.c.bf16 %v1657, %v1653
    %v1780 = vpack.c.bf16 %v1659, %v1655
    %v1781 = vpack.c.bf16 %v1667, %v1663
    %v1782 = vpack.c.bf16 %v1669, %v1665
    %v1783 = vpack.c.bf16 %v1677, %v1673
    %v1784 = vpack.c.bf16 %v1679, %v1675
    %v1785 = vpack.c.bf16 %v1687, %v1683
    %v1786 = vpack.c.bf16 %v1689, %v1685
    %v1787 = vpack.c.bf16 %v1697, %v1693
    %v1788 = vpack.c.bf16 %v1699, %v1695
    %v1789 = vpack.c.bf16 %v1707, %v1703
    %v1790 = vpack.c.bf16 %v1709, %v1705
    %v1791 = vpack.c.bf16 %v1717, %v1713
    %v1792 = vpack.c.bf16 %v1719, %v1715
    %v1793 = vpack.c.bf16 %v1727, %v1723
    %v1794 = vpack.c.bf16 %v1729, %v1725
    %v1795 = vpack.c.bf16 %v1737, %v1733
    %v1796 = vpack.c.bf16 %v1739, %v1735
    %v1797 = vpack.c.bf16 %v1747, %v1743
    %v1798 = vpack.c.bf16 %v1749, %v1745
    %v1799 = vpack.c.bf16 %v1757, %v1753
    %v1800 = vpack.c.bf16 %v1759, %v1755
    %v1801 = vpack.c.bf16 %v1767, %v1763
    %v1802 = vpack.c.bf16 %v1769, %v1765
    %v1803 = vtanh.bf16.pop %v1771
    %v1804 = vtanh.bf16.pop %v1772
    %v1805 = vtanh.bf16.pop %v1773
    %v1806 = vtanh.bf16.pop %v1774
    %v1807 = vtanh.bf16.pop %v1775
    %v1808 = vtanh.bf16.pop %v1776
    %v1809 = vtanh.bf16.pop %v1777
    %v1810 = vtanh.bf16.pop %v1778
    %v1811 = vtanh.bf16.pop %v1779
    %v1812 = vtanh.bf16.pop %v1780
    %v1813 = vtanh.bf16.pop %v1781
    %v1814 = vtanh.bf16.pop %v1782
    %v1815 = vtanh.bf16.pop %v1783
    %v1816 = vtanh.bf16.pop %v1784
    %v1817 = vtanh.bf16.pop %v1785
    %v1818 = vtanh.bf16.pop %v1786
    %v1819 = vtanh.bf16.pop %v1787
    %v1820 = vtanh.bf16.pop %v1788
    %v1821 = vtanh.bf16.pop %v1789
    %v1822 = vtanh.bf16.pop %v1790
    %v1823 = vtanh.bf16.pop %v1791
    %v1824 = vtanh.bf16.pop %v1792
    %v1825 = vtanh.bf16.pop %v1793
    %v1826 = vtanh.bf16.pop %v1794
    %v1827 = vtanh.bf16.pop %v1795
    %v1828 = vtanh.bf16.pop %v1796
    %v1829 = vtanh.bf16.pop %v1797
    %v1830 = vtanh.bf16.pop %v1798
    %v1831 = vtanh.bf16.pop %v1799
    %v1832 = vtanh.bf16.pop %v1800
    %v1833 = vtanh.bf16.pop %v1801
    %v1834 = vtanh.bf16.pop %v1802
    %1835 = vmatprep.subr.bf16.mxu0 0
    %1836 = vmatpush1.bf16.msra.mxu0 %v572
    %1837 = vmatprep.subr.bf16.mxu0 0
    %1838 = vmatpush1.bf16.msra.mxu0 %v573
    %1839 = vmatprep.subr.bf16.mxu0 0
    %1840 = vmatpush1.bf16.msra.mxu0 %v574
    %1841 = vmatprep.subr.bf16.mxu0 0
    %1842 = vmatpush1.bf16.msra.mxu0 %v575
    %1843 = vmatprep.subr.bf16.mxu0 0
    %1844 = vmatpush1.bf16.msra.mxu0 %v576
    %1845 = vmatprep.subr.bf16.mxu0 0
    %1846 = vmatpush1.bf16.msra.mxu0 %v577
    %1847 = vmatprep.subr.bf16.mxu0 0
    %1848 = vmatpush1.bf16.msra.mxu0 %v578
    %1849 = vmatprep.subr.bf16.mxu0 0
    %1850 = vmatpush1.bf16.msra.mxu0 %v579
    %1851 = vmatprep.subr.bf16.mxu0 0
    %1852 = vmatpush1.bf16.msra.mxu0 %v580
    %1853 = vmatprep.subr.bf16.mxu0 0
    %1854 = vmatpush1.bf16.msra.mxu0 %v581
    %1855 = vmatprep.subr.bf16.mxu0 0
    %1856 = vmatpush1.bf16.msra.mxu0 %v582
    %1857 = vmatprep.subr.bf16.mxu0 0
    %1858 = vmatpush1.bf16.msra.mxu0 %v583
    %1859 = vmatprep.subr.bf16.mxu0 0
    %1860 = vmatpush1.bf16.msra.mxu0 %v584
    %1861 = vmatprep.subr.bf16.mxu0 0
    %1862 = vmatpush1.bf16.msra.mxu0 %v585
    %1863 = vmatprep.subr.bf16.mxu0 0
    %1864 = vmatpush1.bf16.msra.mxu0 %v586
    %1865 = vmatprep.subr.bf16.mxu0 0
    %1866 = vmatpush1.bf16.msra.mxu0 %v587
    %1867 = vmatprep.mubr.bf16.mxu0 %v1804
    %1868 = vmatmul.mubr.bf16.gmra.mrb[0].mxu0 %v1803
    %v1869 = vpop.f32.mrb[0].mxu0
    %v1870 = vadd.f32 %v506, %v1869
    %v1871 = vpop.f32.mrb[0].mxu0
    %v1872 = vpop.f32.mrb[0].mxu0
    %v1873 = vadd.f32 %v506, %v1872
    %v1874 = vpop.f32.mrb[0].mxu0
    %1875 = vmatprep.mubr.bf16.mxu0 %v1806
    %1876 = vmatmul.mubr.bf16.gmra.mrb[0].mxu0 %v1805
    %v1877 = vpop.f32.mrb[0].mxu0
    %v1878 = vadd.f32 %v506, %v1877
    %v1879 = vpop.f32.mrb[0].mxu0
    %v1880 = vpop.f32.mrb[0].mxu0
    %v1881 = vadd.f32 %v506, %v1880
    %v1882 = vpop.f32.mrb[0].mxu0
    %1883 = vmatprep.mubr.bf16.mxu0 %v1808
    %1884 = vmatmul.mubr.bf16.gmra.mrb[0].mxu0 %v1807
    %v1885 = vpop.f32.mrb[0].mxu0
    %v1886 = vadd.f32 %v506, %v1885
    %v1887 = vpop.f32.mrb[0].mxu0
    %v1888 = vpop.f32.mrb[0].mxu0
    %v1889 = vadd.f32 %v506, %v1888
    %v1890 = vpop.f32.mrb[0].mxu0
    %1891 = vmatprep.mubr.bf16.mxu0 %v1810
    %1892 = vmatmul.mubr.bf16.gmra.mrb[0].mxu0 %v1809
    %v1893 = vpop.f32.mrb[0].mxu0
    %v1894 = vadd.f32 %v506, %v1893
    %v1895 = vpop.f32.mrb[0].mxu0
    %v1896 = vpop.f32.mrb[0].mxu0
    %v1897 = vadd.f32 %v506, %v1896
    %v1898 = vpop.f32.mrb[0].mxu0
    %1899 = vmatprep.mubr.bf16.mxu0 %v1812
    %1900 = vmatmul.mubr.bf16.gmra.mrb[0].mxu0 %v1811
    %v1901 = vpop.f32.mrb[0].mxu0
    %v1902 = vadd.f32 %v506, %v1901
    %v1903 = vpop.f32.mrb[0].mxu0
    %v1904 = vpop.f32.mrb[0].mxu0
    %v1905 = vadd.f32 %v506, %v1904
    %v1906 = vpop.f32.mrb[0].mxu0
    %1907 = vmatprep.mubr.bf16.mxu0 %v1814
    %1908 = vmatmul.mubr.bf16.gmra.mrb[0].mxu0 %v1813
    %v1909 = vpop.f32.mrb[0].mxu0
    %v1910 = vadd.f32 %v506, %v1909
    %v1911 = vpop.f32.mrb[0].mxu0
    %v1912 = vpop.f32.mrb[0].mxu0
    %v1913 = vadd.f32 %v506, %v1912
    %v1914 = vpop.f32.mrb[0].mxu0
    %1915 = vmatprep.mubr.bf16.mxu0 %v1816
    %1916 = vmatmul.mubr.bf16.gmra.mrb[0].mxu0 %v1815
    %v1917 = vpop.f32.mrb[0].mxu0
    %v1918 = vadd.f32 %v506, %v1917
    %v1919 = vpop.f32.mrb[0].mxu0
    %v1920 = vpop.f32.mrb[0].mxu0
    %v1921 = vadd.f32 %v506, %v1920
    %v1922 = vpop.f32.mrb[0].mxu0
    %1923 = vmatprep.mubr.bf16.mxu0 %v1818
    %1924 = vmatmul.mubr.bf16.gmra.mrb[0].mxu0 %v1817
    %v1925 = vpop.f32.mrb[0].mxu0
    %v1926 = vadd.f32 %v506, %v1925
    %v1927 = vpop.f32.mrb[0].mxu0
    %v1928 = vpop.f32.mrb[0].mxu0
    %v1929 = vadd.f32 %v506, %v1928
    %v1930 = vpop.f32.mrb[0].mxu0
    %1931 = vmatprep.mubr.bf16.mxu0 %v1820
    %1932 = vmatmul.mubr.bf16.gmra.mrb[0].mxu0 %v1819
    %v1933 = vpop.f32.mrb[0].mxu0
    %v1934 = vadd.f32 %v506, %v1933
    %v1935 = vpop.f32.mrb[0].mxu0
    %v1936 = vpop.f32.mrb[0].mxu0
    %v1937 = vadd.f32 %v506, %v1936
    %v1938 = vpop.f32.mrb[0].mxu0
    %1939 = vmatprep.mubr.bf16.mxu0 %v1822
    %1940 = vmatmul.mubr.bf16.gmra.mrb[0].mxu0 %v1821
    %v1941 = vpop.f32.mrb[0].mxu0
    %v1942 = vadd.f32 %v506, %v1941
    %v1943 = vpop.f32.mrb[0].mxu0
    %v1944 = vpop.f32.mrb[0].mxu0
    %v1945 = vadd.f32 %v506, %v1944
    %v1946 = vpop.f32.mrb[0].mxu0
    %1947 = vmatprep.mubr.bf16.mxu0 %v1824
    %1948 = vmatmul.mubr.bf16.gmra.mrb[0].mxu0 %v1823
    %v1949 = vpop.f32.mrb[0].mxu0
    %v1950 = vadd.f32 %v506, %v1949
    %v1951 = vpop.f32.mrb[0].mxu0
    %v1952 = vpop.f32.mrb[0].mxu0
    %v1953 = vadd.f32 %v506, %v1952
    %v1954 = vpop.f32.mrb[0].mxu0
    %1955 = vmatprep.mubr.bf16.mxu0 %v1826
    %1956 = vmatmul.mubr.bf16.gmra.mrb[0].mxu0 %v1825
    %v1957 = vpop.f32.mrb[0].mxu0
    %v1958 = vadd.f32 %v506, %v1957
    %v1959 = vpop.f32.mrb[0].mxu0
    %v1960 = vpop.f32.mrb[0].mxu0
    %v1961 = vadd.f32 %v506, %v1960
    %v1962 = vpop.f32.mrb[0].mxu0
    %1963 = vmatprep.mubr.bf16.mxu0 %v1828
    %1964 = vmatmul.mubr.bf16.gmra.mrb[0].mxu0 %v1827
    %v1965 = vpop.f32.mrb[0].mxu0
    %v1966 = vadd.f32 %v506, %v1965
    %v1967 = vpop.f32.mrb[0].mxu0
    %v1968 = vpop.f32.mrb[0].mxu0
    %v1969 = vadd.f32 %v506, %v1968
    %v1970 = vpop.f32.mrb[0].mxu0
    %1971 = vmatprep.mubr.bf16.mxu0 %v1830
    %1972 = vmatmul.mubr.bf16.gmra.mrb[0].mxu0 %v1829
    %v1973 = vpop.f32.mrb[0].mxu0
    %v1974 = vadd.f32 %v506, %v1973
    %v1975 = vpop.f32.mrb[0].mxu0
    %v1976 = vpop.f32.mrb[0].mxu0
    %v1977 = vadd.f32 %v506, %v1976
    %v1978 = vpop.f32.mrb[0].mxu0
    %1979 = vmatprep.mubr.bf16.mxu0 %v1832
    %1980 = vmatmul.mubr.bf16.gmra.mrb[0].mxu0 %v1831
    %v1981 = vpop.f32.mrb[0].mxu0
    %v1982 = vadd.f32 %v506, %v1981
    %v1983 = vpop.f32.mrb[0].mxu0
    %v1984 = vpop.f32.mrb[0].mxu0
    %v1985 = vadd.f32 %v506, %v1984
    %v1986 = vpop.f32.mrb[0].mxu0
    %1987 = vmatprep.mubr.bf16.mxu0 %v1834
    %1988 = vmatmul.mubr.bf16.gmra.mrb[0].mxu0 %v1833
    %v1989 = vpop.f32.mrb[0].mxu0
    %v1990 = vadd.f32 %v506, %v1989
    %v1991 = vpop.f32.mrb[0].mxu0
    %v1992 = vpop.f32.mrb[0].mxu0
    %v1993 = vadd.f32 %v506, %v1992
    %v1994 = vpop.f32.mrb[0].mxu0
    %1995 = vdwg.mxu0
    %v1996 = vld [vmem:[#allocation6] sm:$0xff]
    %v1997 = vld [vmem:[#allocation6 + $0x8] sm:$0xff]
    %v1998 = vld [vmem:[#allocation6 + $0x10] sm:$0xff]
    %v1999 = vld [vmem:[#allocation6 + $0x18] sm:$0xff]
    %v2000 = vld [vmem:[#allocation6 + $0x20] sm:$0xff]
    %v2001 = vld [vmem:[#allocation6 + $0x28] sm:$0xff]
    %v2002 = vld [vmem:[#allocation6 + $0x30] sm:$0xff]
    %v2003 = vld [vmem:[#allocation6 + $0x38] sm:$0xff]
    %v2004 = vld [vmem:[#allocation6 + $0x40] sm:$0xff]
    %v2005 = vld [vmem:[#allocation6 + $0x48] sm:$0xff]
    %v2006 = vld [vmem:[#allocation6 + $0x50] sm:$0xff]
    %v2007 = vld [vmem:[#allocation6 + $0x58] sm:$0xff]
    %v2008 = vld [vmem:[#allocation6 + $0x60] sm:$0xff]
    %v2009 = vld [vmem:[#allocation6 + $0x68] sm:$0xff]
    %v2010 = vld [vmem:[#allocation6 + $0x70] sm:$0xff]
    %v2011 = vld [vmem:[#allocation6 + $0x78] sm:$0xff]
    %v2012 = vld [vmem:[#allocation6 + $0x80] sm:$0xff]
    %v2013 = vld [vmem:[#allocation6 + $0x88] sm:$0xff]
    %v2014 = vld [vmem:[#allocation6 + $0x90] sm:$0xff]
    %v2015 = vld [vmem:[#allocation6 + $0x98] sm:$0xff]
    %v2016 = vld [vmem:[#allocation6 + $0xa0] sm:$0xff]
    %v2017 = vld [vmem:[#allocation6 + $0xa8] sm:$0xff]
    %v2018 = vld [vmem:[#allocation6 + $0xb0] sm:$0xff]
    %v2019 = vld [vmem:[#allocation6 + $0xb8] sm:$0xff]
    %v2020 = vld [vmem:[#allocation6 + $0xc0] sm:$0xff]
    %v2021 = vld [vmem:[#allocation6 + $0xc8] sm:$0xff]
    %v2022 = vld [vmem:[#allocation6 + $0xd0] sm:$0xff]
    %v2023 = vld [vmem:[#allocation6 + $0xd8] sm:$0xff]
    %v2024 = vld [vmem:[#allocation6 + $0xe0] sm:$0xff]
    %v2025 = vld [vmem:[#allocation6 + $0xe8] sm:$0xff]
    %v2026 = vld [vmem:[#allocation6 + $0xf0] sm:$0xff]
    %v2027 = vld [vmem:[#allocation6 + $0xf8] sm:$0xff]
    %v2028 = vmul.f32 %v1870, 2.0
    %v2029 = vmul.f32 %v1873, 2.0
    %v2030 = vmul.f32 %v1878, 2.0
    %v2031 = vmul.f32 %v1881, 2.0
    %v2032 = vmul.f32 %v1886, 2.0
    %v2033 = vmul.f32 %v1889, 2.0
    %v2034 = vmul.f32 %v1894, 2.0
    %v2035 = vmul.f32 %v1897, 2.0
    %v2036 = vmul.f32 %v1902, 2.0
    %v2037 = vmul.f32 %v1905, 2.0
    %v2038 = vmul.f32 %v1910, 2.0
    %v2039 = vmul.f32 %v1913, 2.0
    %v2040 = vmul.f32 %v1918, 2.0
    %v2041 = vmul.f32 %v1921, 2.0
    %v2042 = vmul.f32 %v1926, 2.0
    %v2043 = vmul.f32 %v1929, 2.0
    %v2044 = vmul.f32 %v1934, 2.0
    %v2045 = vmul.f32 %v1937, 2.0
    %v2046 = vmul.f32 %v1942, 2.0
    %v2047 = vmul.f32 %v1945, 2.0
    %v2048 = vmul.f32 %v1950, 2.0
    %v2049 = vmul.f32 %v1953, 2.0
    %v2050 = vmul.f32 %v1958, 2.0
    %v2051 = vmul.f32 %v1961, 2.0
    %v2052 = vmul.f32 %v1966, 2.0
    %v2053 = vmul.f32 %v1969, 2.0
    %v2054 = vmul.f32 %v1974, 2.0
    %v2055 = vmul.f32 %v1977, 2.0
    %v2056 = vmul.f32 %v1982, 2.0
    %v2057 = vmul.f32 %v1985, 2.0
    %v2058 = vmul.f32 %v1990, 2.0
    %v2059 = vmul.f32 %v1993, 2.0
    %v2060 = vadd.f32 %v1996, %v2028
    %v2061 = vadd.f32 %v1997, %v2029
    %v2062 = vadd.f32 %v1998, %v2030
    %v2063 = vadd.f32 %v1999, %v2031
    %v2064 = vadd.f32 %v2000, %v2032
    %v2065 = vadd.f32 %v2001, %v2033
    %v2066 = vadd.f32 %v2002, %v2034
    %v2067 = vadd.f32 %v2003, %v2035
    %v2068 = vadd.f32 %v2004, %v2036
    %v2069 = vadd.f32 %v2005, %v2037
    %v2070 = vadd.f32 %v2006, %v2038
    %v2071 = vadd.f32 %v2007, %v2039
    %v2072 = vadd.f32 %v2008, %v2040
    %v2073 = vadd.f32 %v2009, %v2041
    %v2074 = vadd.f32 %v2010, %v2042
    %v2075 = vadd.f32 %v2011, %v2043
    %v2076 = vadd.f32 %v2012, %v2044
    %v2077 = vadd.f32 %v2013, %v2045
    %v2078 = vadd.f32 %v2014, %v2046
    %v2079 = vadd.f32 %v2015, %v2047
    %v2080 = vadd.f32 %v2016, %v2048
    %v2081 = vadd.f32 %v2017, %v2049
    %v2082 = vadd.f32 %v2018, %v2050
    %v2083 = vadd.f32 %v2019, %v2051
    %v2084 = vadd.f32 %v2020, %v2052
    %v2085 = vadd.f32 %v2021, %v2053
    %v2086 = vadd.f32 %v2022, %v2054
    %v2087 = vadd.f32 %v2023, %v2055
    %v2088 = vadd.f32 %v2024, %v2056
    %v2089 = vadd.f32 %v2025, %v2057
    %v2090 = vadd.f32 %v2026, %v2058
    %v2091 = vadd.f32 %v2027, %v2059
    %2092 = vst [vmem:[#allocation6] sm:$0xff] %v2060
    %2093 = vst [vmem:[#allocation6 + $0x8] sm:$0xff] %v2061
    %2094 = vst [vmem:[#allocation6 + $0x10] sm:$0xff] %v2062
    %2095 = vst [vmem:[#allocation6 + $0x18] sm:$0xff] %v2063
    %2096 = vst [vmem:[#allocation6 + $0x20] sm:$0xff] %v2064
    %2097 = vst [vmem:[#allocation6 + $0x28] sm:$0xff] %v2065
    %2098 = vst [vmem:[#allocation6 + $0x30] sm:$0xff] %v2066
    %2099 = vst [vmem:[#allocation6 + $0x38] sm:$0xff] %v2067
    %2100 = vst [vmem:[#allocation6 + $0x40] sm:$0xff] %v2068
    %2101 = vst [vmem:[#allocation6 + $0x48] sm:$0xff] %v2069
    %2102 = vst [vmem:[#allocation6 + $0x50] sm:$0xff] %v2070
    %2103 = vst [vmem:[#allocation6 + $0x58] sm:$0xff] %v2071
    %2104 = vst [vmem:[#allocation6 + $0x60] sm:$0xff] %v2072
    %2105 = vst [vmem:[#allocation6 + $0x68] sm:$0xff] %v2073
    %2106 = vst [vmem:[#allocation6 + $0x70] sm:$0xff] %v2074
    %2107 = vst [vmem:[#allocation6 + $0x78] sm:$0xff] %v2075
    %2108 = vst [vmem:[#allocation6 + $0x80] sm:$0xff] %v2076
    %2109 = vst [vmem:[#allocation6 + $0x88] sm:$0xff] %v2077
    %2110 = vst [vmem:[#allocation6 + $0x90] sm:$0xff] %v2078
    %2111 = vst [vmem:[#allocation6 + $0x98] sm:$0xff] %v2079
    %2112 = vst [vmem:[#allocation6 + $0xa0] sm:$0xff] %v2080
    %2113 = vst [vmem:[#allocation6 + $0xa8] sm:$0xff] %v2081
    %2114 = vst [vmem:[#allocation6 + $0xb0] sm:$0xff] %v2082
    %2115 = vst [vmem:[#allocation6 + $0xb8] sm:$0xff] %v2083
    %2116 = vst [vmem:[#allocation6 + $0xc0] sm:$0xff] %v2084
    %2117 = vst [vmem:[#allocation6 + $0xc8] sm:$0xff] %v2085
    %2118 = vst [vmem:[#allocation6 + $0xd0] sm:$0xff] %v2086
    %2119 = vst [vmem:[#allocation6 + $0xd8] sm:$0xff] %v2087
    %2120 = vst [vmem:[#allocation6 + $0xe0] sm:$0xff] %v2088
    %2121 = vst [vmem:[#allocation6 + $0xe8] sm:$0xff] %v2089
    %2122 = vst [vmem:[#allocation6 + $0xf0] sm:$0xff] %v2090
    %2123 = vst [vmem:[#allocation6 + $0xf8] sm:$0xff] %v2091
    %v2124 = vld [vmem:[#allocation3] sm:$0xff]
    %v2125 = vld [vmem:[#allocation3 + $0x8] sm:$0xff]
    %v2126 = vld [vmem:[#allocation3 + $0x10] sm:$0xff]
    %v2127 = vld [vmem:[#allocation3 + $0x18] sm:$0xff]
    %v2128 = vld [vmem:[#allocation3 + $0x20] sm:$0xff]
    %v2129 = vld [vmem:[#allocation3 + $0x28] sm:$0xff]
    %v2130 = vld [vmem:[#allocation3 + $0x30] sm:$0xff]
    %v2131 = vld [vmem:[#allocation3 + $0x38] sm:$0xff]
    %v2132 = vld [vmem:[#allocation3 + $0x40] sm:$0xff]
    %v2133 = vld [vmem:[#allocation3 + $0x48] sm:$0xff]
    %v2134 = vld [vmem:[#allocation3 + $0x50] sm:$0xff]
    %v2135 = vld [vmem:[#allocation3 + $0x58] sm:$0xff]
    %v2136 = vld [vmem:[#allocation3 + $0x60] sm:$0xff]
    %v2137 = vld [vmem:[#allocation3 + $0x68] sm:$0xff]
    %v2138 = vld [vmem:[#allocation3 + $0x70] sm:$0xff]
    %v2139 = vld [vmem:[#allocation3 + $0x78] sm:$0xff]
    %v2140 = vld [vmem:[#allocation3 + $0x80] sm:$0xff]
    %v2141 = vld [vmem:[#allocation3 + $0x88] sm:$0xff]
    %v2142 = vld [vmem:[#allocation3 + $0x90] sm:$0xff]
    %v2143 = vld [vmem:[#allocation3 + $0x98] sm:$0xff]
    %v2144 = vld [vmem:[#allocation3 + $0xa0] sm:$0xff]
    %v2145 = vld [vmem:[#allocation3 + $0xa8] sm:$0xff]
    %v2146 = vld [vmem:[#allocation3 + $0xb0] sm:$0xff]
    %v2147 = vld [vmem:[#allocation3 + $0xb8] sm:$0xff]
    %v2148 = vld [vmem:[#allocation3 + $0xc0] sm:$0xff]
    %v2149 = vld [vmem:[#allocation3 + $0xc8] sm:$0xff]
    %v2150 = vld [vmem:[#allocation3 + $0xd0] sm:$0xff]
    %v2151 = vld [vmem:[#allocation3 + $0xd8] sm:$0xff]
    %v2152 = vld [vmem:[#allocation3 + $0xe0] sm:$0xff]
    %v2153 = vld [vmem:[#allocation3 + $0xe8] sm:$0xff]
    %v2154 = vld [vmem:[#allocation3 + $0xf0] sm:$0xff]
    %v2155 = vld [vmem:[#allocation3 + $0xf8] sm:$0xff]
    %v2156 = vmul.f32 %v1870, 0.1
    %v2157 = vmul.f32 %v1873, 0.1
    %v2158 = vmul.f32 %v1878, 0.1
    %v2159 = vmul.f32 %v1881, 0.1
    %v2160 = vmul.f32 %v1886, 0.1
    %v2161 = vmul.f32 %v1889, 0.1
    %v2162 = vmul.f32 %v1894, 0.1
    %v2163 = vmul.f32 %v1897, 0.1
    %v2164 = vmul.f32 %v1902, 0.1
    %v2165 = vmul.f32 %v1905, 0.1
    %v2166 = vmul.f32 %v1910, 0.1
    %v2167 = vmul.f32 %v1913, 0.1
    %v2168 = vmul.f32 %v1918, 0.1
    %v2169 = vmul.f32 %v1921, 0.1
    %v2170 = vmul.f32 %v1926, 0.1
    %v2171 = vmul.f32 %v1929, 0.1
    %v2172 = vmul.f32 %v1934, 0.1
    %v2173 = vmul.f32 %v1937, 0.1
    %v2174 = vmul.f32 %v1942, 0.1
    %v2175 = vmul.f32 %v1945, 0.1
    %v2176 = vmul.f32 %v1950, 0.1
    %v2177 = vmul.f32 %v1953, 0.1
    %v2178 = vmul.f32 %v1958, 0.1
    %v2179 = vmul.f32 %v1961, 0.1
    %v2180 = vmul.f32 %v1966, 0.1
    %v2181 = vmul.f32 %v1969, 0.1
    %v2182 = vmul.f32 %v1974, 0.1
    %v2183 = vmul.f32 %v1977, 0.1
    %v2184 = vmul.f32 %v1982, 0.1
    %v2185 = vmul.f32 %v1985, 0.1
    %v2186 = vmul.f32 %v1990, 0.1
    %v2187 = vmul.f32 %v1993, 0.1
    %v2188 = vadd.f32 %v2124, %v2156
    %v2189 = vadd.f32 %v2125, %v2157
    %v2190 = vadd.f32 %v2126, %v2158
    %v2191 = vadd.f32 %v2127, %v2159
    %v2192 = vadd.f32 %v2128, %v2160
    %v2193 = vadd.f32 %v2129, %v2161
    %v2194 = vadd.f32 %v2130, %v2162
    %v2195 = vadd.f32 %v2131, %v2163
    %v2196 = vadd.f32 %v2132, %v2164
    %v2197 = vadd.f32 %v2133, %v2165
    %v2198 = vadd.f32 %v2134, %v2166
    %v2199 = vadd.f32 %v2135, %v2167
    %v2200 = vadd.f32 %v2136, %v2168
    %v2201 = vadd.f32 %v2137, %v2169
    %v2202 = vadd.f32 %v2138, %v2170
    %v2203 = vadd.f32 %v2139, %v2171
    %v2204 = vadd.f32 %v2140, %v2172
    %v2205 = vadd.f32 %v2141, %v2173
    %v2206 = vadd.f32 %v2142, %v2174
    %v2207 = vadd.f32 %v2143, %v2175
    %v2208 = vadd.f32 %v2144, %v2176
    %v2209 = vadd.f32 %v2145, %v2177
    %v2210 = vadd.f32 %v2146, %v2178
    %v2211 = vadd.f32 %v2147, %v2179
    %v2212 = vadd.f32 %v2148, %v2180
    %v2213 = vadd.f32 %v2149, %v2181
    %v2214 = vadd.f32 %v2150, %v2182
    %v2215 = vadd.f32 %v2151, %v2183
    %v2216 = vadd.f32 %v2152, %v2184
    %v2217 = vadd.f32 %v2153, %v2185
    %v2218 = vadd.f32 %v2154, %v2186
    %v2219 = vadd.f32 %v2155, %v2187
    %v2220 = vpack.c.bf16 %v2189, %v2188
    %v2221 = vpack.c.bf16 %v2191, %v2190
    %v2222 = vpack.c.bf16 %v2193, %v2192
    %v2223 = vpack.c.bf16 %v2195, %v2194
    %v2224 = vpack.c.bf16 %v2197, %v2196
    %v2225 = vpack.c.bf16 %v2199, %v2198
    %v2226 = vpack.c.bf16 %v2201, %v2200
    %v2227 = vpack.c.bf16 %v2203, %v2202
    %v2228 = vpack.c.bf16 %v2205, %v2204
    %v2229 = vpack.c.bf16 %v2207, %v2206
    %v2230 = vpack.c.bf16 %v2209, %v2208
    %v2231 = vpack.c.bf16 %v2211, %v2210
    %v2232 = vpack.c.bf16 %v2213, %v2212
    %v2233 = vpack.c.bf16 %v2215, %v2214
    %v2234 = vpack.c.bf16 %v2217, %v2216
    %v2235 = vpack.c.bf16 %v2219, %v2218
    %v2237 = vlaneseq
    %v2238 = vshrl.u32 %v2237, 7
    %v2239 = vsub.s32 0, %v2238
    %v2240 = vrot.slane %v105, %v2239
    %v2241 = vlaneseq
    %v2242 = vshrl.u32 %v2241, 7
    %v2243 = vsub.s32 1, %v2242
    %v2244 = vrot.slane %v105, %v2243
    %2247 = vmatprep.subr.bf16.mxu0 %v214
    %2248 = vmatpush1.bf16.msra.mxu0 %v213
    %2249 = vmatprep.subr.bf16.mxu0 %v216
    %2250 = vmatpush1.bf16.msra.mxu0 %v215
    %2251 = vmatprep.subr.bf16.mxu0 %v218
    %2252 = vmatpush1.bf16.msra.mxu0 %v217
    %2253 = vmatprep.subr.bf16.mxu0 %v220
    %2254 = vmatpush1.bf16.msra.mxu0 %v219
    %2255 = vmatprep.subr.bf16.mxu0 %v222
    %2256 = vmatpush1.bf16.msra.mxu0 %v221
    %2257 = vmatprep.subr.bf16.mxu0 %v224
    %2258 = vmatpush1.bf16.msra.mxu0 %v223
    %2259 = vmatprep.subr.bf16.mxu0 %v226
    %2260 = vmatpush1.bf16.msra.mxu0 %v225
    %2261 = vmatprep.subr.bf16.mxu0 %v228
    %2262 = vmatpush1.bf16.msra.mxu0 %v227
    %2263 = vmatprep.subr.bf16.mxu0 0
    %2264 = vmatpush1.bf16.msra.mxu0 0
    %2265 = vmatprep.subr.bf16.mxu0 0
    %2266 = vmatpush1.bf16.msra.mxu0 0
    %2267 = vmatprep.subr.bf16.mxu0 0
    %2268 = vmatpush1.bf16.msra.mxu0 0
    %2269 = vmatprep.subr.bf16.mxu0 0
    %2270 = vmatpush1.bf16.msra.mxu0 0
    %2271 = vmatprep.subr.bf16.mxu0 0
    %2272 = vmatpush1.bf16.msra.mxu0 0
    %2273 = vmatprep.subr.bf16.mxu0 0
    %2274 = vmatpush1.bf16.msra.mxu0 0
    %2275 = vmatprep.subr.bf16.mxu0 0
    %2276 = vmatpush1.bf16.msra.mxu0 0
    %2277 = vmatprep.subr.bf16.mxu0 0
    %2278 = vmatpush1.bf16.msra.mxu0 0
    %2279 = vmatprep.mubr.bf16.mxu0 0
    %2280 = vmatmul.mubr.bf16.gmra.mrb[0].mxu0 %v2220
    %v2281 = vpop.f32.mrb[0].mxu0
    %v2282 = vadd.f32 %v2240, %v2281
    %v2283 = vpop.f32.mrb[0].mxu0
    %v2284 = vadd.f32 %v2244, %v2283
    %v2285 = vpop.f32.mrb[0].mxu0
    %v2286 = vadd.f32 %v2240, %v2285
    %v2287 = vpop.f32.mrb[0].mxu0
    %v2288 = vadd.f32 %v2244, %v2287
    %2289 = vmatprep.mubr.bf16.mxu0 0
    %2290 = vmatmul.mubr.bf16.gmra.mrb[0].mxu0 %v2221
    %v2291 = vpop.f32.mrb[0].mxu0
    %v2292 = vadd.f32 %v2240, %v2291
    %v2293 = vpop.f32.mrb[0].mxu0
    %v2294 = vadd.f32 %v2244, %v2293
    %v2295 = vpop.f32.mrb[0].mxu0
    %v2296 = vadd.f32 %v2240, %v2295
    %v2297 = vpop.f32.mrb[0].mxu0
    %v2298 = vadd.f32 %v2244, %v2297
    %2299 = vmatprep.mubr.bf16.mxu0 0
    %2300 = vmatmul.mubr.bf16.gmra.mrb[0].mxu0 %v2222
    %v2301 = vpop.f32.mrb[0].mxu0
    %v2302 = vadd.f32 %v2240, %v2301
    %v2303 = vpop.f32.mrb[0].mxu0
    %v2304 = vadd.f32 %v2244, %v2303
    %v2305 = vpop.f32.mrb[0].mxu0
    %v2306 = vadd.f32 %v2240, %v2305
    %v2307 = vpop.f32.mrb[0].mxu0
    %v2308 = vadd.f32 %v2244, %v2307
    %2309 = vmatprep.mubr.bf16.mxu0 0
    %2310 = vmatmul.mubr.bf16.gmra.mrb[0].mxu0 %v2223
    %v2311 = vpop.f32.mrb[0].mxu0
    %v2312 = vadd.f32 %v2240, %v2311
    %v2313 = vpop.f32.mrb[0].mxu0
    %v2314 = vadd.f32 %v2244, %v2313
    %v2315 = vpop.f32.mrb[0].mxu0
    %v2316 = vadd.f32 %v2240, %v2315
    %v2317 = vpop.f32.mrb[0].mxu0
    %v2318 = vadd.f32 %v2244, %v2317
    %2319 = vmatprep.mubr.bf16.mxu0 0
    %2320 = vmatmul.mubr.bf16.gmra.mrb[0].mxu0 %v2224
    %v2321 = vpop.f32.mrb[0].mxu0
    %v2322 = vadd.f32 %v2240, %v2321
    %v2323 = vpop.f32.mrb[0].mxu0
    %v2324 = vadd.f32 %v2244, %v2323
    %v2325 = vpop.f32.mrb[0].mxu0
    %v2326 = vadd.f32 %v2240, %v2325
    %v2327 = vpop.f32.mrb[0].mxu0
    %v2328 = vadd.f32 %v2244, %v2327
    %2329 = vmatprep.mubr.bf16.mxu0 0
    %2330 = vmatmul.mubr.bf16.gmra.mrb[0].mxu0 %v2225
    %v2331 = vpop.f32.mrb[0].mxu0
    %v2332 = vadd.f32 %v2240, %v2331
    %v2333 = vpop.f32.mrb[0].mxu0
    %v2334 = vadd.f32 %v2244, %v2333
    %v2335 = vpop.f32.mrb[0].mxu0
    %v2336 = vadd.f32 %v2240, %v2335
    %v2337 = vpop.f32.mrb[0].mxu0
    %v2338 = vadd.f32 %v2244, %v2337
    %2339 = vmatprep.mubr.bf16.mxu0 0
    %2340 = vmatmul.mubr.bf16.gmra.mrb[0].mxu0 %v2226
    %v2341 = vpop.f32.mrb[0].mxu0
    %v2342 = vadd.f32 %v2240, %v2341
    %v2343 = vpop.f32.mrb[0].mxu0
    %v2344 = vadd.f32 %v2244, %v2343
    %v2345 = vpop.f32.mrb[0].mxu0
    %v2346 = vadd.f32 %v2240, %v2345
    %v2347 = vpop.f32.mrb[0].mxu0
    %v2348 = vadd.f32 %v2244, %v2347
    %2349 = vmatprep.mubr.bf16.mxu0 0
    %2350 = vmatmul.mubr.bf16.gmra.mrb[0].mxu0 %v2227
    %v2351 = vpop.f32.mrb[0].mxu0
    %v2352 = vadd.f32 %v2240, %v2351
    %v2353 = vpop.f32.mrb[0].mxu0
    %v2354 = vadd.f32 %v2244, %v2353
    %v2355 = vpop.f32.mrb[0].mxu0
    %v2356 = vadd.f32 %v2240, %v2355
    %v2357 = vpop.f32.mrb[0].mxu0
    %v2358 = vadd.f32 %v2244, %v2357
    %2359 = vmatprep.mubr.bf16.mxu0 0
    %2360 = vmatmul.mubr.bf16.gmra.mrb[0].mxu0 %v2228
    %v2361 = vpop.f32.mrb[0].mxu0
    %v2362 = vadd.f32 %v2240, %v2361
    %v2363 = vpop.f32.mrb[0].mxu0
    %v2364 = vadd.f32 %v2244, %v2363
    %v2365 = vpop.f32.mrb[0].mxu0
    %v2366 = vadd.f32 %v2240, %v2365
    %v2367 = vpop.f32.mrb[0].mxu0
    %v2368 = vadd.f32 %v2244, %v2367
    %2369 = vmatprep.mubr.bf16.mxu0 0
    %2370 = vmatmul.mubr.bf16.gmra.mrb[0].mxu0 %v2229
    %v2371 = vpop.f32.mrb[0].mxu0
    %v2372 = vadd.f32 %v2240, %v2371
    %v2373 = vpop.f32.mrb[0].mxu0
    %v2374 = vadd.f32 %v2244, %v2373
    %v2375 = vpop.f32.mrb[0].mxu0
    %v2376 = vadd.f32 %v2240, %v2375
    %v2377 = vpop.f32.mrb[0].mxu0
    %v2378 = vadd.f32 %v2244, %v2377
    %2379 = vmatprep.mubr.bf16.mxu0 0
    %2380 = vmatmul.mubr.bf16.gmra.mrb[0].mxu0 %v2230
    %v2381 = vpop.f32.mrb[0].mxu0
    %v2382 = vadd.f32 %v2240, %v2381
    %v2383 = vpop.f32.mrb[0].mxu0
    %v2384 = vadd.f32 %v2244, %v2383
    %v2385 = vpop.f32.mrb[0].mxu0
    %v2386 = vadd.f32 %v2240, %v2385
    %v2387 = vpop.f32.mrb[0].mxu0
    %v2388 = vadd.f32 %v2244, %v2387
    %2389 = vmatprep.mubr.bf16.mxu0 0
    %2390 = vmatmul.mubr.bf16.gmra.mrb[0].mxu0 %v2231
    %v2391 = vpop.f32.mrb[0].mxu0
    %v2392 = vadd.f32 %v2240, %v2391
    %v2393 = vpop.f32.mrb[0].mxu0
    %v2394 = vadd.f32 %v2244, %v2393
    %v2395 = vpop.f32.mrb[0].mxu0
    %v2396 = vadd.f32 %v2240, %v2395
    %v2397 = vpop.f32.mrb[0].mxu0
    %v2398 = vadd.f32 %v2244, %v2397
    %2399 = vmatprep.mubr.bf16.mxu0 0
    %2400 = vmatmul.mubr.bf16.gmra.mrb[0].mxu0 %v2232
    %v2401 = vpop.f32.mrb[0].mxu0
    %v2402 = vadd.f32 %v2240, %v2401
    %v2403 = vpop.f32.mrb[0].mxu0
    %v2404 = vadd.f32 %v2244, %v2403
    %v2405 = vpop.f32.mrb[0].mxu0
    %v2406 = vadd.f32 %v2240, %v2405
    %v2407 = vpop.f32.mrb[0].mxu0
    %v2408 = vadd.f32 %v2244, %v2407
    %2409 = vmatprep.mubr.bf16.mxu0 0
    %2410 = vmatmul.mubr.bf16.gmra.mrb[0].mxu0 %v2233
    %v2411 = vpop.f32.mrb[0].mxu0
    %v2412 = vadd.f32 %v2240, %v2411
    %v2413 = vpop.f32.mrb[0].mxu0
    %v2414 = vadd.f32 %v2244, %v2413
    %v2415 = vpop.f32.mrb[0].mxu0
    %v2416 = vadd.f32 %v2240, %v2415
    %v2417 = vpop.f32.mrb[0].mxu0
    %v2418 = vadd.f32 %v2244, %v2417
    %2419 = vmatprep.mubr.bf16.mxu0 0
    %2420 = vmatmul.mubr.bf16.gmra.mrb[0].mxu0 %v2234
    %v2421 = vpop.f32.mrb[0].mxu0
    %v2422 = vadd.f32 %v2240, %v2421
    %v2423 = vpop.f32.mrb[0].mxu0
    %v2424 = vadd.f32 %v2244, %v2423
    %v2425 = vpop.f32.mrb[0].mxu0
    %v2426 = vadd.f32 %v2240, %v2425
    %v2427 = vpop.f32.mrb[0].mxu0
    %v2428 = vadd.f32 %v2244, %v2427
    %2429 = vmatprep.mubr.bf16.mxu0 0
    %2430 = vmatmul.mubr.bf16.gmra.mrb[0].mxu0 %v2235
    %v2431 = vpop.f32.mrb[0].mxu0
    %v2432 = vadd.f32 %v2240, %v2431
    %v2433 = vpop.f32.mrb[0].mxu0
    %v2434 = vadd.f32 %v2244, %v2433
    %v2435 = vpop.f32.mrb[0].mxu0
    %v2436 = vadd.f32 %v2240, %v2435
    %v2437 = vpop.f32.mrb[0].mxu0
    %v2438 = vadd.f32 %v2244, %v2437
    %2439 = vdwg.mxu0
    %v2440 = vpack.c.bf16 %v2286, %v2282
    %v2441 = vpack.c.bf16 %v2288, %v2284
    %v2442 = vpack.c.bf16 %v2296, %v2292
    %v2443 = vpack.c.bf16 %v2298, %v2294
    %v2444 = vpack.c.bf16 %v2306, %v2302
    %v2445 = vpack.c.bf16 %v2308, %v2304
    %v2446 = vpack.c.bf16 %v2316, %v2312
    %v2447 = vpack.c.bf16 %v2318, %v2314
    %v2448 = vpack.c.bf16 %v2326, %v2322
    %v2449 = vpack.c.bf16 %v2328, %v2324
    %v2450 = vpack.c.bf16 %v2336, %v2332
    %v2451 = vpack.c.bf16 %v2338, %v2334
    %v2452 = vpack.c.bf16 %v2346, %v2342
    %v2453 = vpack.c.bf16 %v2348, %v2344
    %v2454 = vpack.c.bf16 %v2356, %v2352
    %v2455 = vpack.c.bf16 %v2358, %v2354
    %v2456 = vpack.c.bf16 %v2366, %v2362
    %v2457 = vpack.c.bf16 %v2368, %v2364
    %v2458 = vpack.c.bf16 %v2376, %v2372
    %v2459 = vpack.c.bf16 %v2378, %v2374
    %v2460 = vpack.c.bf16 %v2386, %v2382
    %v2461 = vpack.c.bf16 %v2388, %v2384
    %v2462 = vpack.c.bf16 %v2396, %v2392
    %v2463 = vpack.c.bf16 %v2398, %v2394
    %v2464 = vpack.c.bf16 %v2406, %v2402
    %v2465 = vpack.c.bf16 %v2408, %v2404
    %v2466 = vpack.c.bf16 %v2416, %v2412
    %v2467 = vpack.c.bf16 %v2418, %v2414
    %v2468 = vpack.c.bf16 %v2426, %v2422
    %v2469 = vpack.c.bf16 %v2428, %v2424
    %v2470 = vpack.c.bf16 %v2436, %v2432
    %v2471 = vpack.c.bf16 %v2438, %v2434
    %v2472 = vtanh.bf16.pop %v2440
    %v2473 = vtanh.bf16.pop %v2441
    %v2474 = vtanh.bf16.pop %v2442
    %v2475 = vtanh.bf16.pop %v2443
    %v2476 = vtanh.bf16.pop %v2444
    %v2477 = vtanh.bf16.pop %v2445
    %v2478 = vtanh.bf16.pop %v2446
    %v2479 = vtanh.bf16.pop %v2447
    %v2480 = vtanh.bf16.pop %v2448
    %v2481 = vtanh.bf16.pop %v2449
    %v2482 = vtanh.bf16.pop %v2450
    %v2483 = vtanh.bf16.pop %v2451
    %v2484 = vtanh.bf16.pop %v2452
    %v2485 = vtanh.bf16.pop %v2453
    %v2486 = vtanh.bf16.pop %v2454
    %v2487 = vtanh.bf16.pop %v2455
    %v2488 = vtanh.bf16.pop %v2456
    %v2489 = vtanh.bf16.pop %v2457
    %v2490 = vtanh.bf16.pop %v2458
    %v2491 = vtanh.bf16.pop %v2459
    %v2492 = vtanh.bf16.pop %v2460
    %v2493 = vtanh.bf16.pop %v2461
    %v2494 = vtanh.bf16.pop %v2462
    %v2495 = vtanh.bf16.pop %v2463
    %v2496 = vtanh.bf16.pop %v2464
    %v2497 = vtanh.bf16.pop %v2465
    %v2498 = vtanh.bf16.pop %v2466
    %v2499 = vtanh.bf16.pop %v2467
    %v2500 = vtanh.bf16.pop %v2468
    %v2501 = vtanh.bf16.pop %v2469
    %v2502 = vtanh.bf16.pop %v2470
    %v2503 = vtanh.bf16.pop %v2471
    %2504 = vmatprep.subr.bf16.mxu0 0
    %2505 = vmatpush1.bf16.msra.mxu0 %v572
    %2506 = vmatprep.subr.bf16.mxu0 0
    %2507 = vmatpush1.bf16.msra.mxu0 %v573
    %2508 = vmatprep.subr.bf16.mxu0 0
    %2509 = vmatpush1.bf16.msra.mxu0 %v574
    %2510 = vmatprep.subr.bf16.mxu0 0
    %2511 = vmatpush1.bf16.msra.mxu0 %v575
    %2512 = vmatprep.subr.bf16.mxu0 0
    %2513 = vmatpush1.bf16.msra.mxu0 %v576
    %2514 = vmatprep.subr.bf16.mxu0 0
    %2515 = vmatpush1.bf16.msra.mxu0 %v577
    %2516 = vmatprep.subr.bf16.mxu0 0
    %2517 = vmatpush1.bf16.msra.mxu0 %v578
    %2518 = vmatprep.subr.bf16.mxu0 0
    %2519 = vmatpush1.bf16.msra.mxu0 %v579
    %2520 = vmatprep.subr.bf16.mxu0 0
    %2521 = vmatpush1.bf16.msra.mxu0 %v580
    %2522 = vmatprep.subr.bf16.mxu0 0
    %2523 = vmatpush1.bf16.msra.mxu0 %v581
    %2524 = vmatprep.subr.bf16.mxu0 0
    %2525 = vmatpush1.bf16.msra.mxu0 %v582
    %2526 = vmatprep.subr.bf16.mxu0 0
    %2527 = vmatpush1.bf16.msra.mxu0 %v583
    %2528 = vmatprep.subr.bf16.mxu0 0
    %2529 = vmatpush1.bf16.msra.mxu0 %v584
    %2530 = vmatprep.subr.bf16.mxu0 0
    %2531 = vmatpush1.bf16.msra.mxu0 %v585
    %2532 = vmatprep.subr.bf16.mxu0 0
    %2533 = vmatpush1.bf16.msra.mxu0 %v586
    %2534 = vmatprep.subr.bf16.mxu0 0
    %2535 = vmatpush1.bf16.msra.mxu0 %v587
    %2536 = vmatprep.mubr.bf16.mxu0 %v2473
    %2537 = vmatmul.mubr.bf16.gmra.mrb[0].mxu0 %v2472
    %v2538 = vpop.f32.mrb[0].mxu0
    %v2539 = vadd.f32 %v506, %v2538
    %v2540 = vpop.f32.mrb[0].mxu0
    %v2541 = vpop.f32.mrb[0].mxu0
    %v2542 = vadd.f32 %v506, %v2541
    %v2543 = vpop.f32.mrb[0].mxu0
    %2544 = vmatprep.mubr.bf16.mxu0 %v2475
    %2545 = vmatmul.mubr.bf16.gmra.mrb[0].mxu0 %v2474
    %v2546 = vpop.f32.mrb[0].mxu0
    %v2547 = vadd.f32 %v506, %v2546
    %v2548 = vpop.f32.mrb[0].mxu0
    %v2549 = vpop.f32.mrb[0].mxu0
    %v2550 = vadd.f32 %v506, %v2549
    %v2551 = vpop.f32.mrb[0].mxu0
    %2552 = vmatprep.mubr.bf16.mxu0 %v2477
    %2553 = vmatmul.mubr.bf16.gmra.mrb[0].mxu0 %v2476
    %v2554 = vpop.f32.mrb[0].mxu0
    %v2555 = vadd.f32 %v506, %v2554
    %v2556 = vpop.f32.mrb[0].mxu0
    %v2557 = vpop.f32.mrb[0].mxu0
    %v2558 = vadd.f32 %v506, %v2557
    %v2559 = vpop.f32.mrb[0].mxu0
    %2560 = vmatprep.mubr.bf16.mxu0 %v2479
    %2561 = vmatmul.mubr.bf16.gmra.mrb[0].mxu0 %v2478
    %v2562 = vpop.f32.mrb[0].mxu0
    %v2563 = vadd.f32 %v506, %v2562
    %v2564 = vpop.f32.mrb[0].mxu0
    %v2565 = vpop.f32.mrb[0].mxu0
    %v2566 = vadd.f32 %v506, %v2565
    %v2567 = vpop.f32.mrb[0].mxu0
    %2568 = vmatprep.mubr.bf16.mxu0 %v2481
    %2569 = vmatmul.mubr.bf16.gmra.mrb[0].mxu0 %v2480
    %v2570 = vpop.f32.mrb[0].mxu0
    %v2571 = vadd.f32 %v506, %v2570
    %v2572 = vpop.f32.mrb[0].mxu0
    %v2573 = vpop.f32.mrb[0].mxu0
    %v2574 = vadd.f32 %v506, %v2573
    %v2575 = vpop.f32.mrb[0].mxu0
    %2576 = vmatprep.mubr.bf16.mxu0 %v2483
    %2577 = vmatmul.mubr.bf16.gmra.mrb[0].mxu0 %v2482
    %v2578 = vpop.f32.mrb[0].mxu0
    %v2579 = vadd.f32 %v506, %v2578
    %v2580 = vpop.f32.mrb[0].mxu0
    %v2581 = vpop.f32.mrb[0].mxu0
    %v2582 = vadd.f32 %v506, %v2581
    %v2583 = vpop.f32.mrb[0].mxu0
    %2584 = vmatprep.mubr.bf16.mxu0 %v2485
    %2585 = vmatmul.mubr.bf16.gmra.mrb[0].mxu0 %v2484
    %v2586 = vpop.f32.mrb[0].mxu0
    %v2587 = vadd.f32 %v506, %v2586
    %v2588 = vpop.f32.mrb[0].mxu0
    %v2589 = vpop.f32.mrb[0].mxu0
    %v2590 = vadd.f32 %v506, %v2589
    %v2591 = vpop.f32.mrb[0].mxu0
    %2592 = vmatprep.mubr.bf16.mxu0 %v2487
    %2593 = vmatmul.mubr.bf16.gmra.mrb[0].mxu0 %v2486
    %v2594 = vpop.f32.mrb[0].mxu0
    %v2595 = vadd.f32 %v506, %v2594
    %v2596 = vpop.f32.mrb[0].mxu0
    %v2597 = vpop.f32.mrb[0].mxu0
    %v2598 = vadd.f32 %v506, %v2597
    %v2599 = vpop.f32.mrb[0].mxu0
    %2600 = vmatprep.mubr.bf16.mxu0 %v2489
    %2601 = vmatmul.mubr.bf16.gmra.mrb[0].mxu0 %v2488
    %v2602 = vpop.f32.mrb[0].mxu0
    %v2603 = vadd.f32 %v506, %v2602
    %v2604 = vpop.f32.mrb[0].mxu0
    %v2605 = vpop.f32.mrb[0].mxu0
    %v2606 = vadd.f32 %v506, %v2605
    %v2607 = vpop.f32.mrb[0].mxu0
    %2608 = vmatprep.mubr.bf16.mxu0 %v2491
    %2609 = vmatmul.mubr.bf16.gmra.mrb[0].mxu0 %v2490
    %v2610 = vpop.f32.mrb[0].mxu0
    %v2611 = vadd.f32 %v506, %v2610
    %v2612 = vpop.f32.mrb[0].mxu0
    %v2613 = vpop.f32.mrb[0].mxu0
    %v2614 = vadd.f32 %v506, %v2613
    %v2615 = vpop.f32.mrb[0].mxu0
    %2616 = vmatprep.mubr.bf16.mxu0 %v2493
    %2617 = vmatmul.mubr.bf16.gmra.mrb[0].mxu0 %v2492
    %v2618 = vpop.f32.mrb[0].mxu0
    %v2619 = vadd.f32 %v506, %v2618
    %v2620 = vpop.f32.mrb[0].mxu0
    %v2621 = vpop.f32.mrb[0].mxu0
    %v2622 = vadd.f32 %v506, %v2621
    %v2623 = vpop.f32.mrb[0].mxu0
    %2624 = vmatprep.mubr.bf16.mxu0 %v2495
    %2625 = vmatmul.mubr.bf16.gmra.mrb[0].mxu0 %v2494
    %v2626 = vpop.f32.mrb[0].mxu0
    %v2627 = vadd.f32 %v506, %v2626
    %v2628 = vpop.f32.mrb[0].mxu0
    %v2629 = vpop.f32.mrb[0].mxu0
    %v2630 = vadd.f32 %v506, %v2629
    %v2631 = vpop.f32.mrb[0].mxu0
    %2632 = vmatprep.mubr.bf16.mxu0 %v2497
    %2633 = vmatmul.mubr.bf16.gmra.mrb[0].mxu0 %v2496
    %v2634 = vpop.f32.mrb[0].mxu0
    %v2635 = vadd.f32 %v506, %v2634
    %v2636 = vpop.f32.mrb[0].mxu0
    %v2637 = vpop.f32.mrb[0].mxu0
    %v2638 = vadd.f32 %v506, %v2637
    %v2639 = vpop.f32.mrb[0].mxu0
    %2640 = vmatprep.mubr.bf16.mxu0 %v2499
    %2641 = vmatmul.mubr.bf16.gmra.mrb[0].mxu0 %v2498
    %v2642 = vpop.f32.mrb[0].mxu0
    %v2643 = vadd.f32 %v506, %v2642
    %v2644 = vpop.f32.mrb[0].mxu0
    %v2645 = vpop.f32.mrb[0].mxu0
    %v2646 = vadd.f32 %v506, %v2645
    %v2647 = vpop.f32.mrb[0].mxu0
    %2648 = vmatprep.mubr.bf16.mxu0 %v2501
    %2649 = vmatmul.mubr.bf16.gmra.mrb[0].mxu0 %v2500
    %v2650 = vpop.f32.mrb[0].mxu0
    %v2651 = vadd.f32 %v506, %v2650
    %v2652 = vpop.f32.mrb[0].mxu0
    %v2653 = vpop.f32.mrb[0].mxu0
    %v2654 = vadd.f32 %v506, %v2653
    %v2655 = vpop.f32.mrb[0].mxu0
    %2656 = vmatprep.mubr.bf16.mxu0 %v2503
    %2657 = vmatmul.mubr.bf16.gmra.mrb[0].mxu0 %v2502
    %v2658 = vpop.f32.mrb[0].mxu0
    %v2659 = vadd.f32 %v506, %v2658
    %v2660 = vpop.f32.mrb[0].mxu0
    %v2661 = vpop.f32.mrb[0].mxu0
    %v2662 = vadd.f32 %v506, %v2661
    %v2663 = vpop.f32.mrb[0].mxu0
    %2664 = vdwg.mxu0
    %v2665 = vld [vmem:[#allocation6] sm:$0xff]
    %v2666 = vld [vmem:[#allocation6 + $0x8] sm:$0xff]
    %v2667 = vld [vmem:[#allocation6 + $0x10] sm:$0xff]
    %v2668 = vld [vmem:[#allocation6 + $0x18] sm:$0xff]
    %v2669 = vld [vmem:[#allocation6 + $0x20] sm:$0xff]
    %v2670 = vld [vmem:[#allocation6 + $0x28] sm:$0xff]
    %v2671 = vld [vmem:[#allocation6 + $0x30] sm:$0xff]
    %v2672 = vld [vmem:[#allocation6 + $0x38] sm:$0xff]
    %v2673 = vld [vmem:[#allocation6 + $0x40] sm:$0xff]
    %v2674 = vld [vmem:[#allocation6 + $0x48] sm:$0xff]
    %v2675 = vld [vmem:[#allocation6 + $0x50] sm:$0xff]
    %v2676 = vld [vmem:[#allocation6 + $0x58] sm:$0xff]
    %v2677 = vld [vmem:[#allocation6 + $0x60] sm:$0xff]
    %v2678 = vld [vmem:[#allocation6 + $0x68] sm:$0xff]
    %v2679 = vld [vmem:[#allocation6 + $0x70] sm:$0xff]
    %v2680 = vld [vmem:[#allocation6 + $0x78] sm:$0xff]
    %v2681 = vld [vmem:[#allocation6 + $0x80] sm:$0xff]
    %v2682 = vld [vmem:[#allocation6 + $0x88] sm:$0xff]
    %v2683 = vld [vmem:[#allocation6 + $0x90] sm:$0xff]
    %v2684 = vld [vmem:[#allocation6 + $0x98] sm:$0xff]
    %v2685 = vld [vmem:[#allocation6 + $0xa0] sm:$0xff]
    %v2686 = vld [vmem:[#allocation6 + $0xa8] sm:$0xff]
    %v2687 = vld [vmem:[#allocation6 + $0xb0] sm:$0xff]
    %v2688 = vld [vmem:[#allocation6 + $0xb8] sm:$0xff]
    %v2689 = vld [vmem:[#allocation6 + $0xc0] sm:$0xff]
    %v2690 = vld [vmem:[#allocation6 + $0xc8] sm:$0xff]
    %v2691 = vld [vmem:[#allocation6 + $0xd0] sm:$0xff]
    %v2692 = vld [vmem:[#allocation6 + $0xd8] sm:$0xff]
    %v2693 = vld [vmem:[#allocation6 + $0xe0] sm:$0xff]
    %v2694 = vld [vmem:[#allocation6 + $0xe8] sm:$0xff]
    %v2695 = vld [vmem:[#allocation6 + $0xf0] sm:$0xff]
    %v2696 = vld [vmem:[#allocation6 + $0xf8] sm:$0xff]
    %v2697 = vadd.f32 %v2665, %v2539
    %v2698 = vadd.f32 %v2666, %v2542
    %v2699 = vadd.f32 %v2667, %v2547
    %v2700 = vadd.f32 %v2668, %v2550
    %v2701 = vadd.f32 %v2669, %v2555
    %v2702 = vadd.f32 %v2670, %v2558
    %v2703 = vadd.f32 %v2671, %v2563
    %v2704 = vadd.f32 %v2672, %v2566
    %v2705 = vadd.f32 %v2673, %v2571
    %v2706 = vadd.f32 %v2674, %v2574
    %v2707 = vadd.f32 %v2675, %v2579
    %v2708 = vadd.f32 %v2676, %v2582
    %v2709 = vadd.f32 %v2677, %v2587
    %v2710 = vadd.f32 %v2678, %v2590
    %v2711 = vadd.f32 %v2679, %v2595
    %v2712 = vadd.f32 %v2680, %v2598
    %v2713 = vadd.f32 %v2681, %v2603
    %v2714 = vadd.f32 %v2682, %v2606
    %v2715 = vadd.f32 %v2683, %v2611
    %v2716 = vadd.f32 %v2684, %v2614
    %v2717 = vadd.f32 %v2685, %v2619
    %v2718 = vadd.f32 %v2686, %v2622
    %v2719 = vadd.f32 %v2687, %v2627
    %v2720 = vadd.f32 %v2688, %v2630
    %v2721 = vadd.f32 %v2689, %v2635
    %v2722 = vadd.f32 %v2690, %v2638
    %v2723 = vadd.f32 %v2691, %v2643
    %v2724 = vadd.f32 %v2692, %v2646
    %v2725 = vadd.f32 %v2693, %v2651
    %v2726 = vadd.f32 %v2694, %v2654
    %v2727 = vadd.f32 %v2695, %v2659
    %v2728 = vadd.f32 %v2696, %v2662
    %v2729 = vmul.f32 %v2697, 0.016666668
    %v2730 = vmul.f32 %v2698, 0.016666668
    %v2731 = vmul.f32 %v2699, 0.016666668
    %v2732 = vmul.f32 %v2700, 0.016666668
    %v2733 = vmul.f32 %v2701, 0.016666668
    %v2734 = vmul.f32 %v2702, 0.016666668
    %v2735 = vmul.f32 %v2703, 0.016666668
    %v2736 = vmul.f32 %v2704, 0.016666668
    %v2737 = vmul.f32 %v2705, 0.016666668
    %v2738 = vmul.f32 %v2706, 0.016666668
    %v2739 = vmul.f32 %v2707, 0.016666668
    %v2740 = vmul.f32 %v2708, 0.016666668
    %v2741 = vmul.f32 %v2709, 0.016666668
    %v2742 = vmul.f32 %v2710, 0.016666668
    %v2743 = vmul.f32 %v2711, 0.016666668
    %v2744 = vmul.f32 %v2712, 0.016666668
    %v2745 = vmul.f32 %v2713, 0.016666668
    %v2746 = vmul.f32 %v2714, 0.016666668
    %v2747 = vmul.f32 %v2715, 0.016666668
    %v2748 = vmul.f32 %v2716, 0.016666668
    %v2749 = vmul.f32 %v2717, 0.016666668
    %v2750 = vmul.f32 %v2718, 0.016666668
    %v2751 = vmul.f32 %v2719, 0.016666668
    %v2752 = vmul.f32 %v2720, 0.016666668
    %v2753 = vmul.f32 %v2721, 0.016666668
    %v2754 = vmul.f32 %v2722, 0.016666668
    %v2755 = vmul.f32 %v2723, 0.016666668
    %v2756 = vmul.f32 %v2724, 0.016666668
    %v2757 = vmul.f32 %v2725, 0.016666668
    %v2758 = vmul.f32 %v2726, 0.016666668
    %v2759 = vmul.f32 %v2727, 0.016666668
    %v2760 = vmul.f32 %v2728, 0.016666668
    %v2761 = vadd.f32 %v2124, %v2729
    %v2762 = vadd.f32 %v2125, %v2730
    %v2763 = vadd.f32 %v2126, %v2731
    %v2764 = vadd.f32 %v2127, %v2732
    %v2765 = vadd.f32 %v2128, %v2733
    %v2766 = vadd.f32 %v2129, %v2734
    %v2767 = vadd.f32 %v2130, %v2735
    %v2768 = vadd.f32 %v2131, %v2736
    %v2769 = vadd.f32 %v2132, %v2737
    %v2770 = vadd.f32 %v2133, %v2738
    %v2771 = vadd.f32 %v2134, %v2739
    %v2772 = vadd.f32 %v2135, %v2740
    %v2773 = vadd.f32 %v2136, %v2741
    %v2774 = vadd.f32 %v2137, %v2742
    %v2775 = vadd.f32 %v2138, %v2743
    %v2776 = vadd.f32 %v2139, %v2744
    %v2777 = vadd.f32 %v2140, %v2745
    %v2778 = vadd.f32 %v2141, %v2746
    %v2779 = vadd.f32 %v2142, %v2747
    %v2780 = vadd.f32 %v2143, %v2748
    %v2781 = vadd.f32 %v2144, %v2749
    %v2782 = vadd.f32 %v2145, %v2750
    %v2783 = vadd.f32 %v2146, %v2751
    %v2784 = vadd.f32 %v2147, %v2752
    %v2785 = vadd.f32 %v2148, %v2753
    %v2786 = vadd.f32 %v2149, %v2754
    %v2787 = vadd.f32 %v2150, %v2755
    %v2788 = vadd.f32 %v2151, %v2756
    %v2789 = vadd.f32 %v2152, %v2757
    %v2790 = vadd.f32 %v2153, %v2758
    %v2791 = vadd.f32 %v2154, %v2759
    %v2792 = vadd.f32 %v2155, %v2760
    %2793 = vst [vmem:[#allocation6] sm:$0xff] %v2761
    %2794 = vst [vmem:[#allocation6 + $0x8] sm:$0xff] %v2762
    %2795 = vst [vmem:[#allocation6 + $0x10] sm:$0xff] %v2763
    %2796 = vst [vmem:[#allocation6 + $0x18] sm:$0xff] %v2764
    %2797 = vst [vmem:[#allocation6 + $0x20] sm:$0xff] %v2765
    %2798 = vst [vmem:[#allocation6 + $0x28] sm:$0xff] %v2766
    %2799 = vst [vmem:[#allocation6 + $0x30] sm:$0xff] %v2767
    %2800 = vst [vmem:[#allocation6 + $0x38] sm:$0xff] %v2768
    %2801 = vst [vmem:[#allocation6 + $0x40] sm:$0xff] %v2769
    %2802 = vst [vmem:[#allocation6 + $0x48] sm:$0xff] %v2770
    %2803 = vst [vmem:[#allocation6 + $0x50] sm:$0xff] %v2771
    %2804 = vst [vmem:[#allocation6 + $0x58] sm:$0xff] %v2772
    %2805 = vst [vmem:[#allocation6 + $0x60] sm:$0xff] %v2773
    %2806 = vst [vmem:[#allocation6 + $0x68] sm:$0xff] %v2774
    %2807 = vst [vmem:[#allocation6 + $0x70] sm:$0xff] %v2775
    %2808 = vst [vmem:[#allocation6 + $0x78] sm:$0xff] %v2776
    %2809 = vst [vmem:[#allocation6 + $0x80] sm:$0xff] %v2777
    %2810 = vst [vmem:[#allocation6 + $0x88] sm:$0xff] %v2778
    %2811 = vst [vmem:[#allocation6 + $0x90] sm:$0xff] %v2779
    %2812 = vst [vmem:[#allocation6 + $0x98] sm:$0xff] %v2780
    %2813 = vst [vmem:[#allocation6 + $0xa0] sm:$0xff] %v2781
    %2814 = vst [vmem:[#allocation6 + $0xa8] sm:$0xff] %v2782
    %2815 = vst [vmem:[#allocation6 + $0xb0] sm:$0xff] %v2783
    %2816 = vst [vmem:[#allocation6 + $0xb8] sm:$0xff] %v2784
    %2817 = vst [vmem:[#allocation6 + $0xc0] sm:$0xff] %v2785
    %2818 = vst [vmem:[#allocation6 + $0xc8] sm:$0xff] %v2786
    %2819 = vst [vmem:[#allocation6 + $0xd0] sm:$0xff] %v2787
    %2820 = vst [vmem:[#allocation6 + $0xd8] sm:$0xff] %v2788
    %2821 = vst [vmem:[#allocation6 + $0xe0] sm:$0xff] %v2789
    %2822 = vst [vmem:[#allocation6 + $0xe8] sm:$0xff] %v2790
    %2823 = vst [vmem:[#allocation6 + $0xf0] sm:$0xff] %v2791
    %2824 = vst [vmem:[#allocation6 + $0xf8] sm:$0xff] %v2792
    // Predicated region
    $region34: #{tpu_custom_call.1} parent=1 // pred_check
      _
    $region35: #{tpu_custom_call.1} parent=1 // pred_check_branch
      %2826 = sbr.rel (0) target = $region37
    $region36: #{tpu_custom_call.1} parent=1 // pred_region
      %s2828 = ssub.s32 4096, 4096
      %2829 = vsyncadd [#allocation5], %s2828
      %s2830 = sshll.u32 [#allocation6], 4
      %s2831 = int_to_ptr.vmem [resolvable:$true] %s2830
      %2836 = dma.vmem_to_hbm [thread:$0]  %s2831, 4096, %s7, [#allocation5], 128, 128, 8
    $region37: #{tpu_custom_call.1} parent=1 // pred_fallthru
      _
    // Predicated region
    $region38: #{tpu_custom_call.1} parent=1 // pred_check
      _
    $region39: #{tpu_custom_call.1} parent=1 // pred_check_branch
      %2838 = sbr.rel (0) target = $region41
    $region40: #{tpu_custom_call.1} parent=1 // pred_region
      %2839 = dma.done [#allocation5], 4096
    $region41: #{tpu_custom_call.1} parent=1 // pred_fallthru
      _
    %2840 = vsyncpa [#allocation4], 1
    %2841 = vsyncpa [#allocation5], 1

</llo_original>
